<compile_context>
chip_gen: v5e
topology: v5e:2x2
jax: 0.10.0
libtpu: 0.0.40
codegen_flags: <defaults>
</compile_context>

<pallas_src>
import functools
import math

import jax
import jax.numpy as jnp
import numpy as np
from jax.experimental import pallas as pl
from jax.experimental.pallas import tpu as pltpu

LN_EPS = 1e-5


# ----------------------------- in-kernel helpers -----------------------------
def _layernorm(x, gamma, beta):
    mu = jnp.mean(x, axis=-1, keepdims=True)
    var = jnp.mean((x - mu) ** 2, axis=-1, keepdims=True)
    return (x - mu) * jax.lax.rsqrt(var + LN_EPS) * gamma + beta


def _dot(a, b):
    return jnp.dot(a, b, preferred_element_type=jnp.float32)


def _matmul_nt(a, b):
    """a: [m, k], b: [n, k]  ->  a @ b.T : [m, n]  (lane-dense, no transpose)."""
    return jax.lax.dot_general(a, b, (((1,), (1,)), ((), ())),
                               preferred_element_type=jnp.float32)


def _pick_tile(n, target, align):
    """Largest tile t dividing n with t <= target and t % align == 0 (else n)."""
    if n <= target:
        return n
    t = (target // align) * align
    while t >= align:
        if n % t == 0:
            return t
        t -= align
    # TODO(synk): pad-and-mask path for shapes with no aligned divisor.
    return n


# --------------------------- generation-gated sizing ---------------------------
def _tpu_gen():
    try:
        kind = jax.devices()[0].device_kind.lower()
    except Exception:
        return None
    for g in (7, 6, 5):
        if f"v{g}" in kind:
            return g
    return None


def _tile_budget_bytes():
    # Per-buffer tile byte target (double-buffering sits on top of this).
    # v7x has only 64 MiB physical VMEM -> keep tiles smaller there.
    return {5: 2 << 20, 6: 6 << 20, 7: 3 << 20}.get(_tpu_gen(), 2 << 20)


def _cparams(dims):
    gen = _tpu_gen()
    limit = {5: 64 << 20, 6: 64 << 20, 7: 48 << 20}.get(gen)
    if limit is None:
        return pltpu.CompilerParams(dimension_semantics=dims)
    return pltpu.CompilerParams(dimension_semantics=dims,
                                vmem_limit_bytes=limit)


# ------------------------------ pair-bias kernel ------------------------------
def _pair_bias_kernel(z_ref, gz_ref, bz_ref, wz_ref, out_ref):
    ln = _layernorm(z_ref[0], gz_ref[...], bz_ref[...])          # [T, c_z]
    out_ref[0] = _matmul_nt(wz_ref[...], ln).astype(out_ref.dtype)   # [H, T]


def _pair_bias(z, p, *, no_heads):
    """LayerNorm(z) @ Wz^T; z is read exactly once.  Bias stored in bf16."""
    B, r, _, c_z = z.shape
    z_flat = z.reshape(B, r * r, c_z)                            # free (row-major)
    T = _pick_tile(r * r, max(128, _tile_budget_bytes() // (4 * c_z)), 128)
    gz = p['gz'].reshape(1, c_z)
    bz = p['bz'].reshape(1, c_z)

    bias = pl.pallas_call(
        _pair_bias_kernel,
        out_shape=jax.ShapeDtypeStruct((B, no_heads, r * r), jnp.bfloat16),
        grid=(B, (r * r) // T),
        in_specs=[
            pl.BlockSpec((1, T, c_z), lambda b, t: (b, t, 0)),
            pl.BlockSpec((1, c_z), lambda b, t: (0, 0)),
            pl.BlockSpec((1, c_z), lambda b, t: (0, 0)),
            pl.BlockSpec((no_heads, c_z), lambda b, t: (0, 0)),
        ],
        out_specs=pl.BlockSpec((1, no_heads, T), lambda b, t: (b, 0, t)),
        compiler_params=_cparams(("parallel", "parallel")),
    )(z_flat, gz, bz, p['Wz'])
    return bias.reshape(B, no_heads, r, r)                       # free (row-major)


# ------------------------------ QKV projection --------------------------------
def _qkv_kernel(m_ref, gm_ref, bm_ref, wqkv_ref, q_ref, k_ref, v_ref):
    H, dh = q_ref.shape[1], q_ref.shape[3]
    ch = H * dh
    ln = _layernorm(m_ref[0], gm_ref[...], bm_ref[...])
    qkv = _dot(ln, wqkv_ref[...])                                # [tr, 3*ch]
    for h in range(H):                                           # static, small
        lo = h * dh
        q_ref[0, h] = qkv[:, lo:lo + dh]
        k_ref[0, h] = qkv[:, ch + lo:ch + lo + dh]
        v_ref[0, h] = qkv[:, 2 * ch + lo:2 * ch + lo + dh]


def _qkv_project(m, p, *, no_heads, c_hidden):
    B, r, c_m = m.shape
    dh = c_hidden // no_heads
    scale = 1.0 / math.sqrt(c_hidden)
    # Fold the attention scale into the Q columns (removes a per-head VPU mul).
    wqkv = jnp.concatenate([p['Wq'].T * scale, p['Wk'].T, p['Wv'].T], axis=1)
    gm = p['gm'].reshape(1, c_m)
    bm = p['bm'].reshape(1, c_m)
    tr = _pick_tile(r, 512, 8)
    hm = jax.ShapeDtypeStruct((B, no_heads, r, dh), jnp.float32)
    out_spec = pl.BlockSpec((1, no_heads, tr, dh), lambda b, t: (b, 0, t, 0))
    return pl.pallas_call(
        _qkv_kernel,
        out_shape=(hm, hm, hm),
        grid=(B, r // tr),
        in_specs=[
            pl.BlockSpec((1, tr, c_m), lambda b, t: (b, t, 0)),
            pl.BlockSpec((1, c_m), lambda b, t: (0, 0)),
            pl.BlockSpec((1, c_m), lambda b, t: (0, 0)),
            pl.BlockSpec((c_m, 3 * c_hidden), lambda b, t: (0, 0)),
        ],
        out_specs=(out_spec, out_spec, out_spec),
        compiler_params=_cparams(("parallel", "parallel")),
    )(m, gm, bm, wqkv)


# ------------ RowAttentionWithPairBias (gating=False), flash-style ------------
def _make_attn_kernel(H, pair_bias):
    def kernel(*refs):
        if pair_bias:
            (m_ref, q_ref, k_ref, v_ref, bias_ref, wo_ref, bo_ref,
             out_ref, m_sc, l_sc, acc_sc) = refs
        else:
            (m_ref, q_ref, k_ref, v_ref, wo_ref, bo_ref,
             out_ref, m_sc, l_sc, acc_sc) = refs
            bias_ref = None

        kk = pl.program_id(2)

        @pl.when(kk == 0)
        def _init():
            m_sc[...] = jnp.full(m_sc.shape, -1e30, jnp.float32)
            l_sc[...] = jnp.zeros(l_sc.shape, jnp.float32)
            acc_sc[...] = jnp.zeros(acc_sc.shape, jnp.float32)

        # Per-head online softmax.  Heads live on a leading axis so the hot
        # loop does no sub-128-lane slicing; per-head state is VMEM scratch.
        for h in range(H):                                       # static unrolled
            q = q_ref[0, h]                                      # [tq, dh] (scaled)
            k = k_ref[0, h]                                      # [tk, dh]
            v = v_ref[0, h]                                      # [tk, dh]
            s = _matmul_nt(q, k)                                 # [tq, tk]
            if pair_bias:
                s = s + bias_ref[0, h].astype(jnp.float32)
            m_prev = m_sc[h]                                     # [tq, 1]
            m_new = jnp.maximum(m_prev, jnp.max(s, axis=-1, keepdims=True))
            alpha = jnp.exp(m_prev - m_new)
            pexp = jnp.exp(s - m_new)
            l_sc[h] = alpha * l_sc[h] + jnp.sum(pexp, axis=-1, keepdims=True)
            acc_sc[h] = alpha * acc_sc[h] + _dot(pexp, v)
            m_sc[h] = m_new

        @pl.when(kk == pl.num_programs(2) - 1)
        def _finalize():
            # Per-head accumulation straight into the output projection
            # (no concat / relayout); residual + output bias fused.
            out = m_ref[0] + bo_ref[...]
            for h in range(H):
                o_h = acc_sc[h] * pl.reciprocal(l_sc[h], approx=True)
                out = out + _dot(o_h, wo_ref[h])                 # wo_ref[h]: [dh, c_m]
            out_ref[0] = out

    return kernel


def _attention_update(m, bias, p, *, no_heads, c_hidden):
    B, r, c_m = m.shape
    dh = c_hidden // no_heads
    pair_bias = bias is not None

    q_hm, k_hm, v_hm = _qkv_project(m, p, no_heads=no_heads, c_hidden=c_hidden)

    budget = _tile_budget_bytes()
    tk = _pick_tile(r, 512, 8)
    if pair_bias:
        # bf16 bias block is no_heads*tq*tk*2 bytes; keep it inside the budget.
        tq_target = max(8, budget // max(1, 2 * no_heads * tk))
    else:
        tq_target = 256
    tq = _pick_tile(r, tq_target, 8)

    wo3 = p['Wo'].T.reshape(no_heads, dh, c_m)        # head-major rows of Wo^T
    bo = p['bo'].reshape(1, c_m)

    kernel = _make_attn_kernel(no_heads, pair_bias)

    in_specs = [
        pl.BlockSpec((1, tq, c_m), lambda b, qi, ki: (b, qi, 0)),
        pl.BlockSpec((1, no_heads, tq, dh), lambda b, qi, ki: (b, 0, qi, 0)),
        pl.BlockSpec((1, no_heads, tk, dh), lambda b, qi, ki: (b, 0, ki, 0)),
        pl.BlockSpec((1, no_heads, tk, dh), lambda b, qi, ki: (b, 0, ki, 0)),
    ]
    args = [m, q_hm, k_hm, v_hm]
    if pair_bias:
        in_specs.append(
            pl.BlockSpec((1, no_heads, tq, tk), lambda b, qi, ki: (b, 0, qi, ki)))
        args.append(bias)
    in_specs += [
        pl.BlockSpec((no_heads, dh, c_m), lambda b, qi, ki: (0, 0, 0)),
        pl.BlockSpec((1, c_m), lambda b, qi, ki: (0, 0)),
    ]
    args += [wo3, bo]

    return pl.pallas_call(
        kernel,
        out_shape=jax.ShapeDtypeStruct((B, r, c_m), jnp.float32),
        grid=(B, r // tq, r // tk),
        in_specs=in_specs,
        out_specs=pl.BlockSpec((1, tq, c_m), lambda b, qi, ki: (b, qi, 0)),
        scratch_shapes=[
            pltpu.VMEM((no_heads, tq, 1), jnp.float32),   # running max
            pltpu.VMEM((no_heads, tq, 1), jnp.float32),   # running denom
            pltpu.VMEM((no_heads, tq, dh), jnp.float32),  # running numerator
        ],
        compiler_params=_cparams(("parallel", "parallel", "arbitrary")),
    )(*args)


# -------------------------------- Transition ---------------------------------
def _transition_kernel(m_ref, g_ref, bln_ref, w1_ref, b1_ref, w2_ref, b2_ref,
                       out_ref):
    x = m_ref[0]                                                 # [tr, c_m]
    ln = _layernorm(x, g_ref[...], bln_ref[...])
    hdn = jnp.maximum(_dot(ln, w1_ref[...]) + b1_ref[...], 0.0)  # [tr, 4*c_m]
    out_ref[0] = x + _dot(hdn, w2_ref[...]) + b2_ref[...]        # residual fused


def _transition_update(m, p):
    B, r, c_m = m.shape
    c_h = p['W1'].shape[0]                 # 4 * c_m
    tr = _pick_tile(r, 512, 8)
    w1T = p['W1'].T
    w2T = p['W2'].T
    gt = p['gt'].reshape(1, c_m)
    bt = p['bt'].reshape(1, c_m)
    b1 = p['b1'].reshape(1, c_h)
    b2 = p['b2'].reshape(1, c_m)

    return pl.pallas_call(
        _transition_kernel,
        out_shape=jax.ShapeDtypeStruct((B, r, c_m), jnp.float32),
        grid=(B, r // tr),
        in_specs=[
            pl.BlockSpec((1, tr, c_m), lambda b, t: (b, t, 0)),
            pl.BlockSpec((1, c_m), lambda b, t: (0, 0)),
            pl.BlockSpec((1, c_m), lambda b, t: (0, 0)),
            pl.BlockSpec((c_m, c_h), lambda b, t: (0, 0)),
            pl.BlockSpec((1, c_h), lambda b, t: (0, 0)),
            pl.BlockSpec((c_h, c_m), lambda b, t: (0, 0)),
            pl.BlockSpec((1, c_m), lambda b, t: (0, 0)),
        ],
        out_specs=pl.BlockSpec((1, tr, c_m), lambda b, t: (b, t, 0)),
        compiler_params=_cparams(("parallel", "parallel")),
    )(m, gt, bt, w1T, b1, w2T, b2)


# ----------------------------- OuterProductMean -------------------------------
def _ab_kernel(m_ref, g_ref, bln_ref, w_ref, b_ref, out_ref):
    ln = _layernorm(m_ref[0], g_ref[...], bln_ref[...])          # [tr, c_m]
    out_ref[0] = _dot(ln, w_ref[...]) + b_ref[...]               # [tr, 2*ch]


def _opm_ab(m, p, *, c_hidden):
    B, r, c_m = m.shape
    tr = _pick_tile(r, 512, 8)
    wab = jnp.concatenate([p['Wop1'].T, p['Wop2'].T], axis=1)    # [c_m, 2ch]
    bab = jnp.concatenate([p['bop1'], p['bop2']]).reshape(1, 2 * c_hidden)
    gop = p['gop'].reshape(1, c_m)
    bop = p['bop'].reshape(1, c_m)

    ab = pl.pallas_call(
        _ab_kernel,
        out_shape=jax.ShapeDtypeStruct((B, r, 2 * c_hidden), jnp.float32),
        grid=(B, r // tr),
        in_specs=[
            pl.BlockSpec((1, tr, c_m), lambda b, t: (b, t, 0)),
            pl.BlockSpec((1, c_m), lambda b, t: (0, 0)),
            pl.BlockSpec((1, c_m), lambda b, t: (0, 0)),
            pl.BlockSpec((c_m, 2 * c_hidden), lambda b, t: (0, 0)),
            pl.BlockSpec((1, 2 * c_hidden), lambda b, t: (0, 0)),
        ],
        out_specs=pl.BlockSpec((1, tr, 2 * c_hidden), lambda b, t: (b, t, 0)),
        compiler_params=_cparams(("parallel", "parallel")),
    )(m, gop, bop, wab, bab)
    return ab[..., :c_hidden], ab[..., c_hidden:]


def _opm_kernel(z_ref, a_ref, mfac_ref, bout_ref, out_ref):
    # out[i, j*c_z+zc] = z[i, j*c_z+zc] + sum_p a[i,p] * M[p, j*c_z+zc] + bout[zc]
    out_ref[0] = z_ref[0] + _dot(a_ref[0], mfac_ref[0]) + bout_ref[...]


def _opm_update(m, z, p, *, c_hidden):
    B, r, _, c_z = z.shape
    a_, b_ = _opm_ab(m, p, c_hidden=c_hidden)                    # [B, r, ch] each

    # Small rank-reduction factor (B*r*ch^2*c_z MACs, done as XLA glue):
    #   M[b, p, j, zc] = sum_q b_[b, j, q] * Wout[zc, p*ch + q]
    W3d = p['Wout'].reshape(c_z, c_hidden, c_hidden)             # [zc, p, q]
    M = jnp.einsum('bjq,zpq->bpjz', b_, W3d)                     # [B, ch, r, c_z]
    M_flat = M.reshape(B, c_hidden, r * c_z)

    z_flat = z.reshape(B, r, r * c_z)                            # free (row-major)

    budget = _tile_budget_bytes()
    # Column tile (review): M_flat streamed as (ch, tjz) blocks, never resident.
    jalign = (c_z * 128) // math.gcd(c_z, 128)                   # lane + bout period
    tjz = _pick_tile(r * c_z, max(jalign, budget // (4 * c_hidden)), jalign)
    ti = _pick_tile(r, max(8, budget // (4 * tjz)), 8)

    bout_t = jnp.tile(p['bout'], tjz // c_z).reshape(1, tjz)     # tiny, period c_z

    out = pl.pallas_call(
        _opm_kernel,
        out_shape=jax.ShapeDtypeStruct((B, r, r * c_z), jnp.float32),
        grid=(B, r // ti, (r * c_z) // tjz),
        in_specs=[
            pl.BlockSpec((1, ti, tjz), lambda b, i, j: (b, i, j)),
            pl.BlockSpec((1, ti, c_hidden), lambda b, i, j: (b, i, 0)),
            pl.BlockSpec((1, c_hidden, tjz), lambda b, i, j: (b, 0, j)),
            pl.BlockSpec((1, tjz), lambda b, i, j: (0, 0)),
        ],
        out_specs=pl.BlockSpec((1, ti, tjz), lambda b, i, j: (b, i, j)),
        input_output_aliases={0: 0},                             # z updated in place
        compiler_params=_cparams(("parallel", "parallel", "parallel")),
    )(z_flat, a_, M_flat, bout_t)
    return out.reshape(B, r, r, c_z)                             # free (row-major)


# ------------------------------- BioFormerBlock --------------------------------
def bioformer_block(m, z, params, *, c_hidden, no_heads, do_opm, do_pair_bias):
    bias = _pair_bias(z, params, no_heads=no_heads) if do_pair_bias else None
    m = _attention_update(m, bias, params, no_heads=no_heads, c_hidden=c_hidden)
    m = _transition_update(m, params)
    if do_opm:
        z = _opm_update(m, z, params, c_hidden=c_hidden)
    return m, z


# ------------------------------ pure-JAX reference ------------------------------
def _reference(m, z, p, *, c_hidden, no_heads, do_opm, do_pair_bias):
    hp = jax.lax.Precision.HIGHEST

    def ln(x, g, b):
        mu = x.mean(-1, keepdims=True)
        var = ((x - mu) ** 2).mean(-1, keepdims=True)
        return (x - mu) / jnp.sqrt(var + LN_EPS) * g + b

    B, r, c_m = m.shape
    H, dh = no_heads, c_hidden // no_heads
    lm = ln(m, p['gm'], p['bm'])
    q = jnp.matmul(lm, p['Wq'].T, precision=hp).reshape(B, r, H, dh).transpose(0, 2, 1, 3)
    k = jnp.matmul(lm, p['Wk'].T, precision=hp).reshape(B, r, H, dh).transpose(0, 2, 1, 3)
    v = jnp.matmul(lm, p['Wv'].T, precision=hp).reshape(B, r, H, dh).transpose(0, 2, 1, 3)
    q = q / math.sqrt(c_hidden)
    a = jnp.einsum('bhid,bhjd->bhij', q, k, precision=hp)
    if do_pair_bias:
        lz = ln(z, p['gz'], p['bz'])
        a = a + jnp.einsum('bijc,hc->bhij', lz, p['Wz'], precision=hp)
    a = jax.nn.softmax(a, axis=-1)
    o = jnp.einsum('bhij,bhjd->bhid', a, v, precision=hp)
    o = o.transpose(0, 2, 1, 3).reshape(B, r, c_hidden)
    m1 = m + jnp.matmul(o, p['Wo'].T, precision=hp) + p['bo']

    lt = ln(m1, p['gt'], p['bt'])
    h1 = jax.nn.relu(jnp.matmul(lt, p['W1'].T, precision=hp) + p['b1'])
    m2 = m1 + jnp.matmul(h1, p['W2'].T, precision=hp) + p['b2']

    if do_opm:
        lo = ln(m2, p['gop'], p['bop'])
        a_ = jnp.matmul(lo, p['Wop1'].T, precision=hp) + p['bop1']
        b_ = jnp.matmul(lo, p['Wop2'].T, precision=hp) + p['bop2']
        outer = jnp.einsum('bip,bjq->bijpq', a_, b_, precision=hp)
        outer = outer.reshape(B, r, r, c_hidden * c_hidden)
        z2 = z + jnp.matmul(outer, p['Wout'].T, precision=hp) + p['bout']
    else:
        z2 = z
    return m2, z2


# ------------------------------ parameter init ----------------------------------
def init_params(key, c_m, c_z, c_hidden, no_heads):
    ks = jax.random.split(key, 24)
    n = lambda k, shp, s=0.1: (s * jax.random.normal(k, shp)).astype(jnp.float32)
    return {
        # attention
        'gm': 1.0 + n(ks[0], (c_m,)), 'bm': n(ks[1], (c_m,)),
        'gz': 1.0 + n(ks[2], (c_z,)), 'bz': n(ks[3], (c_z,)),
        'Wz': n(ks[4], (no_heads, c_z)),
        'Wq': n(ks[5], (c_hidden, c_m)),
        'Wk': n(ks[6], (c_hidden, c_m)),
        'Wv': n(ks[7], (c_hidden, c_m)),
        'Wo': n(ks[8], (c_m, c_hidden)), 'bo': n(ks[9], (c_m,)),
        # transition
        'gt': 1.0 + n(ks[10], (c_m,)), 'bt': n(ks[11], (c_m,)),
        'W1': n(ks[12], (4 * c_m, c_m)), 'b1': n(ks[13], (4 * c_m,)),
        'W2': n(ks[14], (c_m, 4 * c_m)), 'b2': n(ks[15], (c_m,)),
        # outer product mean
        'gop': 1.0 + n(ks[16], (c_m,)), 'bop': n(ks[17], (c_m,)),
        'Wop1': n(ks[18], (c_hidden, c_m)), 'bop1': n(ks[19], (c_hidden,)),
        'Wop2': n(ks[20], (c_hidden, c_m)), 'bop2': n(ks[21], (c_hidden,)),
        'Wout': n(ks[22], (c_z, c_hidden * c_hidden)), 'bout': n(ks[23], (c_z,)),
    }


if __name__ == "__main__":
    B, r, c_m, c_z, c_hidden, no_heads = 2, 8, 32, 16, 16, 4
    DO_OPM, DO_PAIR_BIAS = True, True

    key = jax.random.PRNGKey(0)
    km, kz, kp = jax.random.split(key, 3)
    m = jax.random.normal(km, (B, r, c_m), dtype=jnp.float32)
    z = jax.random.normal(kz, (B, r, r, c_z), dtype=jnp.float32)
    params = init_params(kp, c_m, c_z, c_hidden, no_heads)

    fn = jax.jit(functools.partial(bioformer_block, c_hidden=c_hidden,
                                   no_heads=no_heads, do_opm=DO_OPM,
                                   do_pair_bias=DO_PAIR_BIAS))
    m_out, z_out = fn(m, z, params)
    jax.block_until_ready((m_out, z_out))

    m_ref, z_ref = _reference(m, z, params, c_hidden=c_hidden, no_heads=no_heads,
                              do_opm=DO_OPM, do_pair_bias=DO_PAIR_BIAS)
    np.testing.assert_allclose(np.asarray(m_out), np.asarray(m_ref),
                               rtol=2e-3, atol=2e-3)
    np.testing.assert_allclose(np.asarray(z_out), np.asarray(z_ref),
                               rtol=2e-3, atol=2e-3)
    print("KERNEL_OK")
</pallas_src>

<mosaic_0001>
module attributes {stable_mosaic.version = 11 : i64} {
  func.func @_qkv_kernel(%arg0: i32, %arg1: i32, %arg2: memref<1x8x32xf32, #tpu.memory_space<vmem>>, %arg3: memref<1x32xf32, #tpu.memory_space<vmem>>, %arg4: memref<1x32xf32, #tpu.memory_space<vmem>>, %arg5: memref<32x48xf32, #tpu.memory_space<vmem>>, %arg6: memref<1x4x8x4xf32, #tpu.memory_space<vmem>>, %arg7: memref<1x4x8x4xf32, #tpu.memory_space<vmem>>, %arg8: memref<1x4x8x4xf32, #tpu.memory_space<vmem>>) attributes {dimension_semantics = [#tpu.dimension_semantics<parallel>, #tpu.dimension_semantics<parallel>], iteration_bounds = array<i64: 2, 1>, scalar_prefetch = 0 : i64, scratch_operands = 0 : i64, tpu.core_type = #tpu.core_type<tc>, window_params = [{transform_indices = @transform_0, window_bounds = array<i64: 1, 8, 32>}, {pipeline_mode = #tpu.pipeline_mode<synchronous>, transform_indices = @transform_1, window_bounds = array<i64: 1, 32>}, {pipeline_mode = #tpu.pipeline_mode<synchronous>, transform_indices = @transform_2, window_bounds = array<i64: 1, 32>}, {pipeline_mode = #tpu.pipeline_mode<synchronous>, transform_indices = @transform_3, window_bounds = array<i64: 32, 48>}, {transform_indices = @transform_4, window_bounds = array<i64: 1, 4, 8, 4>}, {transform_indices = @transform_5, window_bounds = array<i64: 1, 4, 8, 4>}, {transform_indices = @transform_6, window_bounds = array<i64: 1, 4, 8, 4>}]} {
    %c0 = arith.constant 0 : index
    %c0_0 = arith.constant 0 : index
    %c0_1 = arith.constant 0 : index
    %0 = vector.load %arg2[%c0, %c0_0, %c0_1] : memref<1x8x32xf32, #tpu.memory_space<vmem>>, vector<1x8x32xf32>
    %1 = vector.shape_cast %0 : vector<1x8x32xf32> to vector<8x32xf32>
    %c0_2 = arith.constant 0 : index
    %c0_3 = arith.constant 0 : index
    %2 = vector.load %arg3[%c0_2, %c0_3] : memref<1x32xf32, #tpu.memory_space<vmem>>, vector<1x32xf32>
    %c0_4 = arith.constant 0 : index
    %c0_5 = arith.constant 0 : index
    %3 = vector.load %arg4[%c0_4, %c0_5] : memref<1x32xf32, #tpu.memory_space<vmem>>, vector<1x32xf32>
    %cst = arith.constant dense<0.000000e+00> : vector<8xf32>
    %4 = vector.multi_reduction <add>, %1, %cst [1] : vector<8x32xf32> to vector<8xf32>
    %5 = vector.shape_cast %4 : vector<8xf32> to vector<8x1xf32>
    %cst_6 = arith.constant 3.200000e+01 : f32
    %6 = vector.broadcast %cst_6 : f32 to vector<8x1xf32>
    %7 = arith.divf %5, %6 : vector<8x1xf32>
    %8 = vector.broadcast %7 : vector<8x1xf32> to vector<8x32xf32>
    %9 = arith.subf %1, %8 : vector<8x32xf32>
    %10 = arith.mulf %9, %9 : vector<8x32xf32>
    %cst_7 = arith.constant dense<0.000000e+00> : vector<8xf32>
    %11 = vector.multi_reduction <add>, %10, %cst_7 [1] : vector<8x32xf32> to vector<8xf32>
    %12 = vector.shape_cast %11 : vector<8xf32> to vector<8x1xf32>
    %cst_8 = arith.constant 3.200000e+01 : f32
    %13 = vector.broadcast %cst_8 : f32 to vector<8x1xf32>
    %14 = arith.divf %12, %13 : vector<8x1xf32>
    %15 = vector.broadcast %7 : vector<8x1xf32> to vector<8x32xf32>
    %16 = arith.subf %1, %15 : vector<8x32xf32>
    %cst_9 = arith.constant 9.99999974E-6 : f32
    %17 = vector.broadcast %cst_9 : f32 to vector<8x1xf32>
    %18 = arith.addf %14, %17 : vector<8x1xf32>
    %19 = math.rsqrt %18 : vector<8x1xf32>
    %20 = vector.broadcast %19 : vector<8x1xf32> to vector<8x32xf32>
    %21 = arith.mulf %16, %20 : vector<8x32xf32>
    %22 = vector.broadcast %2 : vector<1x32xf32> to vector<8x32xf32>
    %23 = arith.mulf %21, %22 : vector<8x32xf32>
    %24 = vector.broadcast %3 : vector<1x32xf32> to vector<8x32xf32>
    %25 = arith.addf %23, %24 : vector<8x32xf32>
    %c0_10 = arith.constant 0 : index
    %c0_11 = arith.constant 0 : index
    %26 = vector.load %arg5[%c0_10, %c0_11] : memref<32x48xf32, #tpu.memory_space<vmem>>, vector<32x48xf32>
    %cst_12 = arith.constant dense<0.000000e+00> : vector<8x48xf32>
    %27 = tpu.matmul %25, %26, %cst_12 {dimension_numbers = #tpu.dot_dimension_numbers<[1], [0], [0], [1], [0, 0, 1, 1], [], []>} : vector<8x32xf32>, vector<32x48xf32>, vector<8x48xf32> -> vector<8x48xf32>
    %28 = vector.extract_strided_slice %27 {offsets = [0, 0], sizes = [8, 4], strides = [1, 1]} : vector<8x48xf32> to vector<8x4xf32>
    %c0_13 = arith.constant 0 : index
    %c0_14 = arith.constant 0 : index
    %c0_15 = arith.constant 0 : index
    %c0_16 = arith.constant 0 : index
    %29 = vector.load %arg6[%c0_13, %c0_14, %c0_15, %c0_16] : memref<1x4x8x4xf32, #tpu.memory_space<vmem>>, vector<1x1x8x4xf32>
    %30 = vector.shape_cast %29 : vector<1x1x8x4xf32> to vector<8x4xf32>
    %31 = vector.shape_cast %28 : vector<8x4xf32> to vector<1x1x8x4xf32>
    tpu.vector_store %arg6[%c0_13, %c0_14, %c0_15, %c0_16], %31 {strides = array<i32>} : memref<1x4x8x4xf32, #tpu.memory_space<vmem>>, vector<1x1x8x4xf32>,
    %32 = vector.extract_strided_slice %27 {offsets = [0, 16], sizes = [8, 4], strides = [1, 1]} : vector<8x48xf32> to vector<8x4xf32>
    %c0_17 = arith.constant 0 : index
    %c0_18 = arith.constant 0 : index
    %c0_19 = arith.constant 0 : index
    %c0_20 = arith.constant 0 : index
    %33 = vector.load %arg7[%c0_17, %c0_18, %c0_19, %c0_20] : memref<1x4x8x4xf32, #tpu.memory_space<vmem>>, vector<1x1x8x4xf32>
    %34 = vector.shape_cast %33 : vector<1x1x8x4xf32> to vector<8x4xf32>
    %35 = vector.shape_cast %32 : vector<8x4xf32> to vector<1x1x8x4xf32>
    tpu.vector_store %arg7[%c0_17, %c0_18, %c0_19, %c0_20], %35 {strides = array<i32>} : memref<1x4x8x4xf32, #tpu.memory_space<vmem>>, vector<1x1x8x4xf32>,
    %36 = vector.extract_strided_slice %27 {offsets = [0, 32], sizes = [8, 4], strides = [1, 1]} : vector<8x48xf32> to vector<8x4xf32>
    %c0_21 = arith.constant 0 : index
    %c0_22 = arith.constant 0 : index
    %c0_23 = arith.constant 0 : index
    %c0_24 = arith.constant 0 : index
    %37 = vector.load %arg8[%c0_21, %c0_22, %c0_23, %c0_24] : memref<1x4x8x4xf32, #tpu.memory_space<vmem>>, vector<1x1x8x4xf32>
    %38 = vector.shape_cast %37 : vector<1x1x8x4xf32> to vector<8x4xf32>
    %39 = vector.shape_cast %36 : vector<8x4xf32> to vector<1x1x8x4xf32>
    tpu.vector_store %arg8[%c0_21, %c0_22, %c0_23, %c0_24], %39 {strides = array<i32>} : memref<1x4x8x4xf32, #tpu.memory_space<vmem>>, vector<1x1x8x4xf32>,
    %40 = vector.extract_strided_slice %27 {offsets = [0, 4], sizes = [8, 4], strides = [1, 1]} : vector<8x48xf32> to vector<8x4xf32>
    %c0_25 = arith.constant 0 : index
    %c1 = arith.constant 1 : index
    %c0_26 = arith.constant 0 : index
    %c0_27 = arith.constant 0 : index
    %41 = vector.load %arg6[%c0_25, %c1, %c0_26, %c0_27] : memref<1x4x8x4xf32, #tpu.memory_space<vmem>>, vector<1x1x8x4xf32>
    %42 = vector.shape_cast %41 : vector<1x1x8x4xf32> to vector<8x4xf32>
    %43 = vector.shape_cast %40 : vector<8x4xf32> to vector<1x1x8x4xf32>
    tpu.vector_store %arg6[%c0_25, %c1, %c0_26, %c0_27], %43 {strides = array<i32>} : memref<1x4x8x4xf32, #tpu.memory_space<vmem>>, vector<1x1x8x4xf32>,
    %44 = vector.extract_strided_slice %27 {offsets = [0, 20], sizes = [8, 4], strides = [1, 1]} : vector<8x48xf32> to vector<8x4xf32>
    %c0_28 = arith.constant 0 : index
    %c1_29 = arith.constant 1 : index
    %c0_30 = arith.constant 0 : index
    %c0_31 = arith.constant 0 : index
    %45 = vector.load %arg7[%c0_28, %c1_29, %c0_30, %c0_31] : memref<1x4x8x4xf32, #tpu.memory_space<vmem>>, vector<1x1x8x4xf32>
    %46 = vector.shape_cast %45 : vector<1x1x8x4xf32> to vector<8x4xf32>
    %47 = vector.shape_cast %44 : vector<8x4xf32> to vector<1x1x8x4xf32>
    tpu.vector_store %arg7[%c0_28, %c1_29, %c0_30, %c0_31], %47 {strides = array<i32>} : memref<1x4x8x4xf32, #tpu.memory_space<vmem>>, vector<1x1x8x4xf32>,
    %48 = vector.extract_strided_slice %27 {offsets = [0, 36], sizes = [8, 4], strides = [1, 1]} : vector<8x48xf32> to vector<8x4xf32>
    %c0_32 = arith.constant 0 : index
    %c1_33 = arith.constant 1 : index
    %c0_34 = arith.constant 0 : index
    %c0_35 = arith.constant 0 : index
    %49 = vector.load %arg8[%c0_32, %c1_33, %c0_34, %c0_35] : memref<1x4x8x4xf32, #tpu.memory_space<vmem>>, vector<1x1x8x4xf32>
    %50 = vector.shape_cast %49 : vector<1x1x8x4xf32> to vector<8x4xf32>
    %51 = vector.shape_cast %48 : vector<8x4xf32> to vector<1x1x8x4xf32>
    tpu.vector_store %arg8[%c0_32, %c1_33, %c0_34, %c0_35], %51 {strides = array<i32>} : memref<1x4x8x4xf32, #tpu.memory_space<vmem>>, vector<1x1x8x4xf32>,
    %52 = vector.extract_strided_slice %27 {offsets = [0, 8], sizes = [8, 4], strides = [1, 1]} : vector<8x48xf32> to vector<8x4xf32>
    %c0_36 = arith.constant 0 : index
    %c2 = arith.constant 2 : index
    %c0_37 = arith.constant 0 : index
    %c0_38 = arith.constant 0 : index
    %53 = vector.load %arg6[%c0_36, %c2, %c0_37, %c0_38] : memref<1x4x8x4xf32, #tpu.memory_space<vmem>>, vector<1x1x8x4xf32>
    %54 = vector.shape_cast %53 : vector<1x1x8x4xf32> to vector<8x4xf32>
    %55 = vector.shape_cast %52 : vector<8x4xf32> to vector<1x1x8x4xf32>
    tpu.vector_store %arg6[%c0_36, %c2, %c0_37, %c0_38], %55 {strides = array<i32>} : memref<1x4x8x4xf32, #tpu.memory_space<vmem>>, vector<1x1x8x4xf32>,
    %56 = vector.extract_strided_slice %27 {offsets = [0, 24], sizes = [8, 4], strides = [1, 1]} : vector<8x48xf32> to vector<8x4xf32>
    %c0_39 = arith.constant 0 : index
    %c2_40 = arith.constant 2 : index
    %c0_41 = arith.constant 0 : index
    %c0_42 = arith.constant 0 : index
    %57 = vector.load %arg7[%c0_39, %c2_40, %c0_41, %c0_42] : memref<1x4x8x4xf32, #tpu.memory_space<vmem>>, vector<1x1x8x4xf32>
    %58 = vector.shape_cast %57 : vector<1x1x8x4xf32> to vector<8x4xf32>
    %59 = vector.shape_cast %56 : vector<8x4xf32> to vector<1x1x8x4xf32>
    tpu.vector_store %arg7[%c0_39, %c2_40, %c0_41, %c0_42], %59 {strides = array<i32>} : memref<1x4x8x4xf32, #tpu.memory_space<vmem>>, vector<1x1x8x4xf32>,
    %60 = vector.extract_strided_slice %27 {offsets = [0, 40], sizes = [8, 4], strides = [1, 1]} : vector<8x48xf32> to vector<8x4xf32>
    %c0_43 = arith.constant 0 : index
    %c2_44 = arith.constant 2 : index
    %c0_45 = arith.constant 0 : index
    %c0_46 = arith.constant 0 : index
    %61 = vector.load %arg8[%c0_43, %c2_44, %c0_45, %c0_46] : memref<1x4x8x4xf32, #tpu.memory_space<vmem>>, vector<1x1x8x4xf32>
    %62 = vector.shape_cast %61 : vector<1x1x8x4xf32> to vector<8x4xf32>
    %63 = vector.shape_cast %60 : vector<8x4xf32> to vector<1x1x8x4xf32>
    tpu.vector_store %arg8[%c0_43, %c2_44, %c0_45, %c0_46], %63 {strides = array<i32>} : memref<1x4x8x4xf32, #tpu.memory_space<vmem>>, vector<1x1x8x4xf32>,
    %64 = vector.extract_strided_slice %27 {offsets = [0, 12], sizes = [8, 4], strides = [1, 1]} : vector<8x48xf32> to vector<8x4xf32>
    %c0_47 = arith.constant 0 : index
    %c3 = arith.constant 3 : index
    %c0_48 = arith.constant 0 : index
    %c0_49 = arith.constant 0 : index
    %65 = vector.load %arg6[%c0_47, %c3, %c0_48, %c0_49] : memref<1x4x8x4xf32, #tpu.memory_space<vmem>>, vector<1x1x8x4xf32>
    %66 = vector.shape_cast %65 : vector<1x1x8x4xf32> to vector<8x4xf32>
    %67 = vector.shape_cast %64 : vector<8x4xf32> to vector<1x1x8x4xf32>
    tpu.vector_store %arg6[%c0_47, %c3, %c0_48, %c0_49], %67 {strides = array<i32>} : memref<1x4x8x4xf32, #tpu.memory_space<vmem>>, vector<1x1x8x4xf32>,
    %68 = vector.extract_strided_slice %27 {offsets = [0, 28], sizes = [8, 4], strides = [1, 1]} : vector<8x48xf32> to vector<8x4xf32>
    %c0_50 = arith.constant 0 : index
    %c3_51 = arith.constant 3 : index
    %c0_52 = arith.constant 0 : index
    %c0_53 = arith.constant 0 : index
    %69 = vector.load %arg7[%c0_50, %c3_51, %c0_52, %c0_53] : memref<1x4x8x4xf32, #tpu.memory_space<vmem>>, vector<1x1x8x4xf32>
    %70 = vector.shape_cast %69 : vector<1x1x8x4xf32> to vector<8x4xf32>
    %71 = vector.shape_cast %68 : vector<8x4xf32> to vector<1x1x8x4xf32>
    tpu.vector_store %arg7[%c0_50, %c3_51, %c0_52, %c0_53], %71 {strides = array<i32>} : memref<1x4x8x4xf32, #tpu.memory_space<vmem>>, vector<1x1x8x4xf32>,
    %72 = vector.extract_strided_slice %27 {offsets = [0, 44], sizes = [8, 4], strides = [1, 1]} : vector<8x48xf32> to vector<8x4xf32>
    %c0_54 = arith.constant 0 : index
    %c3_55 = arith.constant 3 : index
    %c0_56 = arith.constant 0 : index
    %c0_57 = arith.constant 0 : index
    %73 = vector.load %arg8[%c0_54, %c3_55, %c0_56, %c0_57] : memref<1x4x8x4xf32, #tpu.memory_space<vmem>>, vector<1x1x8x4xf32>
    %74 = vector.shape_cast %73 : vector<1x1x8x4xf32> to vector<8x4xf32>
    %75 = vector.shape_cast %72 : vector<8x4xf32> to vector<1x1x8x4xf32>
    tpu.vector_store %arg8[%c0_54, %c3_55, %c0_56, %c0_57], %75 {strides = array<i32>} : memref<1x4x8x4xf32, #tpu.memory_space<vmem>>, vector<1x1x8x4xf32>,
    return
  }
  func.func @transform_0(%arg0: i32, %arg1: i32) -> (i32, i32, i32) {
    %c0_i32 = arith.constant 0 : i32
    %c0_i32_0 = arith.constant 0 : i32
    return %arg0, %arg1, %c0_i32 : i32, i32, i32
  }
  func.func @transform_1(%arg0: i32, %arg1: i32) -> (i32, i32) {
    %c0_i32 = arith.constant 0 : i32
    %c0_i32_0 = arith.constant 0 : i32
    %c0_i32_1 = arith.constant 0 : i32
    return %c0_i32, %c0_i32_0 : i32, i32
  }
  func.func @transform_2(%arg0: i32, %arg1: i32) -> (i32, i32) {
    %c0_i32 = arith.constant 0 : i32
    %c0_i32_0 = arith.constant 0 : i32
    %c0_i32_1 = arith.constant 0 : i32
    return %c0_i32, %c0_i32_0 : i32, i32
  }
  func.func @transform_3(%arg0: i32, %arg1: i32) -> (i32, i32) {
    %c0_i32 = arith.constant 0 : i32
    %c0_i32_0 = arith.constant 0 : i32
    %c0_i32_1 = arith.constant 0 : i32
    return %c0_i32, %c0_i32_0 : i32, i32
  }
  func.func @transform_4(%arg0: i32, %arg1: i32) -> (i32, i32, i32, i32) {
    %c0_i32 = arith.constant 0 : i32
    %c0_i32_0 = arith.constant 0 : i32
    %c0_i32_1 = arith.constant 0 : i32
    return %arg0, %c0_i32, %arg1, %c0_i32_0 : i32, i32, i32, i32
  }
  func.func @transform_5(%arg0: i32, %arg1: i32) -> (i32, i32, i32, i32) {
    %c0_i32 = arith.constant 0 : i32
    %c0_i32_0 = arith.constant 0 : i32
    %c0_i32_1 = arith.constant 0 : i32
    return %arg0, %c0_i32, %arg1, %c0_i32_0 : i32, i32, i32, i32
  }
  func.func @transform_6(%arg0: i32, %arg1: i32) -> (i32, i32, i32, i32) {
    %c0_i32 = arith.constant 0 : i32
    %c0_i32_0 = arith.constant 0 : i32
    %c0_i32_1 = arith.constant 0 : i32
    return %arg0, %c0_i32, %arg1, %c0_i32_0 : i32, i32, i32, i32
  }
}

module attributes {stable_mosaic.version = 11 : i64} {
  func.func @_pair_bias_kernel(%arg0: i32, %arg1: i32, %arg2: memref<1x64x16xf32, #tpu.memory_space<vmem>>, %arg3: memref<1x16xf32, #tpu.memory_space<vmem>>, %arg4: memref<1x16xf32, #tpu.memory_space<vmem>>, %arg5: memref<4x16xf32, #tpu.memory_space<vmem>>, %arg6: memref<1x4x64xbf16, #tpu.memory_space<vmem>>) attributes {dimension_semantics = [#tpu.dimension_semantics<parallel>, #tpu.dimension_semantics<parallel>], iteration_bounds = array<i64: 2, 1>, scalar_prefetch = 0 : i64, scratch_operands = 0 : i64, tpu.core_type = #tpu.core_type<tc>, window_params = [{transform_indices = @transform_0, window_bounds = array<i64: 1, 64, 16>}, {pipeline_mode = #tpu.pipeline_mode<synchronous>, transform_indices = @transform_1, window_bounds = array<i64: 1, 16>}, {pipeline_mode = #tpu.pipeline_mode<synchronous>, transform_indices = @transform_2, window_bounds = array<i64: 1, 16>}, {pipeline_mode = #tpu.pipeline_mode<synchronous>, transform_indices = @transform_3, window_bounds = array<i64: 4, 16>}, {transform_indices = @transform_4, window_bounds = array<i64: 1, 4, 64>}]} {
    %c0 = arith.constant 0 : index
    %c0_0 = arith.constant 0 : index
    %c0_1 = arith.constant 0 : index
    %0 = vector.load %arg2[%c0, %c0_0, %c0_1] : memref<1x64x16xf32, #tpu.memory_space<vmem>>, vector<1x64x16xf32>
    %1 = vector.shape_cast %0 : vector<1x64x16xf32> to vector<64x16xf32>
    %c0_2 = arith.constant 0 : index
    %c0_3 = arith.constant 0 : index
    %2 = vector.load %arg3[%c0_2, %c0_3] : memref<1x16xf32, #tpu.memory_space<vmem>>, vector<1x16xf32>
    %c0_4 = arith.constant 0 : index
    %c0_5 = arith.constant 0 : index
    %3 = vector.load %arg4[%c0_4, %c0_5] : memref<1x16xf32, #tpu.memory_space<vmem>>, vector<1x16xf32>
    %cst = arith.constant dense<0.000000e+00> : vector<64xf32>
    %4 = vector.multi_reduction <add>, %1, %cst [1] : vector<64x16xf32> to vector<64xf32>
    %5 = vector.shape_cast %4 : vector<64xf32> to vector<64x1xf32>
    %cst_6 = arith.constant 1.600000e+01 : f32
    %6 = vector.broadcast %cst_6 : f32 to vector<64x1xf32>
    %7 = arith.divf %5, %6 : vector<64x1xf32>
    %8 = vector.broadcast %7 : vector<64x1xf32> to vector<64x16xf32>
    %9 = arith.subf %1, %8 : vector<64x16xf32>
    %10 = arith.mulf %9, %9 : vector<64x16xf32>
    %cst_7 = arith.constant dense<0.000000e+00> : vector<64xf32>
    %11 = vector.multi_reduction <add>, %10, %cst_7 [1] : vector<64x16xf32> to vector<64xf32>
    %12 = vector.shape_cast %11 : vector<64xf32> to vector<64x1xf32>
    %cst_8 = arith.constant 1.600000e+01 : f32
    %13 = vector.broadcast %cst_8 : f32 to vector<64x1xf32>
    %14 = arith.divf %12, %13 : vector<64x1xf32>
    %15 = vector.broadcast %7 : vector<64x1xf32> to vector<64x16xf32>
    %16 = arith.subf %1, %15 : vector<64x16xf32>
    %cst_9 = arith.constant 9.99999974E-6 : f32
    %17 = vector.broadcast %cst_9 : f32 to vector<64x1xf32>
    %18 = arith.addf %14, %17 : vector<64x1xf32>
    %19 = math.rsqrt %18 : vector<64x1xf32>
    %20 = vector.broadcast %19 : vector<64x1xf32> to vector<64x16xf32>
    %21 = arith.mulf %16, %20 : vector<64x16xf32>
    %22 = vector.broadcast %2 : vector<1x16xf32> to vector<64x16xf32>
    %23 = arith.mulf %21, %22 : vector<64x16xf32>
    %24 = vector.broadcast %3 : vector<1x16xf32> to vector<64x16xf32>
    %25 = arith.addf %23, %24 : vector<64x16xf32>
    %c0_10 = arith.constant 0 : index
    %c0_11 = arith.constant 0 : index
    %26 = vector.load %arg5[%c0_10, %c0_11] : memref<4x16xf32, #tpu.memory_space<vmem>>, vector<4x16xf32>
    %cst_12 = arith.constant dense<0.000000e+00> : vector<4x64xf32>
    %27 = tpu.matmul %26, %25, %cst_12 {dimension_numbers = #tpu.dot_dimension_numbers<[1], [1], [0], [0], [0, 0, 1, 0], [], []>} : vector<4x16xf32>, vector<64x16xf32>, vector<4x64xf32> -> vector<4x64xf32>
    %28 = arith.truncf %27 : vector<4x64xf32> to vector<4x64xbf16>
    %c0_13 = arith.constant 0 : index
    %c0_14 = arith.constant 0 : index
    %c0_15 = arith.constant 0 : index
    %29 = vector.load %arg6[%c0_13, %c0_14, %c0_15] : memref<1x4x64xbf16, #tpu.memory_space<vmem>>, vector<1x4x64xbf16>
    %30 = vector.shape_cast %29 : vector<1x4x64xbf16> to vector<4x64xbf16>
    %31 = vector.shape_cast %28 : vector<4x64xbf16> to vector<1x4x64xbf16>
    tpu.vector_store %arg6[%c0_13, %c0_14, %c0_15], %31 {strides = array<i32>} : memref<1x4x64xbf16, #tpu.memory_space<vmem>>, vector<1x4x64xbf16>,
    return
  }
  func.func @transform_0(%arg0: i32, %arg1: i32) -> (i32, i32, i32) {
    %c0_i32 = arith.constant 0 : i32
    %c0_i32_0 = arith.constant 0 : i32
    return %arg0, %arg1, %c0_i32 : i32, i32, i32
  }
  func.func @transform_1(%arg0: i32, %arg1: i32) -> (i32, i32) {
    %c0_i32 = arith.constant 0 : i32
    %c0_i32_0 = arith.constant 0 : i32
    %c0_i32_1 = arith.constant 0 : i32
    return %c0_i32, %c0_i32_0 : i32, i32
  }
  func.func @transform_2(%arg0: i32, %arg1: i32) -> (i32, i32) {
    %c0_i32 = arith.constant 0 : i32
    %c0_i32_0 = arith.constant 0 : i32
    %c0_i32_1 = arith.constant 0 : i32
    return %c0_i32, %c0_i32_0 : i32, i32
  }
  func.func @transform_3(%arg0: i32, %arg1: i32) -> (i32, i32) {
    %c0_i32 = arith.constant 0 : i32
    %c0_i32_0 = arith.constant 0 : i32
    %c0_i32_1 = arith.constant 0 : i32
    return %c0_i32, %c0_i32_0 : i32, i32
  }
  func.func @transform_4(%arg0: i32, %arg1: i32) -> (i32, i32, i32) {
    %c0_i32 = arith.constant 0 : i32
    %c0_i32_0 = arith.constant 0 : i32
    return %arg0, %c0_i32, %arg1 : i32, i32, i32
  }
}

module attributes {stable_mosaic.version = 11 : i64} {
  func.func @_transition_kernel(%arg0: i32, %arg1: i32, %arg2: memref<1x8x32xf32, #tpu.memory_space<vmem>>, %arg3: memref<1x32xf32, #tpu.memory_space<vmem>>, %arg4: memref<1x32xf32, #tpu.memory_space<vmem>>, %arg5: memref<32x128xf32, #tpu.memory_space<vmem>>, %arg6: memref<1x128xf32, #tpu.memory_space<vmem>>, %arg7: memref<128x32xf32, #tpu.memory_space<vmem>>, %arg8: memref<1x32xf32, #tpu.memory_space<vmem>>, %arg9: memref<1x8x32xf32, #tpu.memory_space<vmem>>) attributes {dimension_semantics = [#tpu.dimension_semantics<parallel>, #tpu.dimension_semantics<parallel>], iteration_bounds = array<i64: 2, 1>, scalar_prefetch = 0 : i64, scratch_operands = 0 : i64, tpu.core_type = #tpu.core_type<tc>, window_params = [{transform_indices = @transform_0, window_bounds = array<i64: 1, 8, 32>}, {pipeline_mode = #tpu.pipeline_mode<synchronous>, transform_indices = @transform_1, window_bounds = array<i64: 1, 32>}, {pipeline_mode = #tpu.pipeline_mode<synchronous>, transform_indices = @transform_2, window_bounds = array<i64: 1, 32>}, {pipeline_mode = #tpu.pipeline_mode<synchronous>, transform_indices = @transform_3, window_bounds = array<i64: 32, 128>}, {pipeline_mode = #tpu.pipeline_mode<synchronous>, transform_indices = @transform_4, window_bounds = array<i64: 1, 128>}, {pipeline_mode = #tpu.pipeline_mode<synchronous>, transform_indices = @transform_5, window_bounds = array<i64: 128, 32>}, {pipeline_mode = #tpu.pipeline_mode<synchronous>, transform_indices = @transform_6, window_bounds = array<i64: 1, 32>}, {transform_indices = @transform_7, window_bounds = array<i64: 1, 8, 32>}]} {
    %c0 = arith.constant 0 : index
    %c0_0 = arith.constant 0 : index
    %c0_1 = arith.constant 0 : index
    %0 = vector.load %arg2[%c0, %c0_0, %c0_1] : memref<1x8x32xf32, #tpu.memory_space<vmem>>, vector<1x8x32xf32>
    %1 = vector.shape_cast %0 : vector<1x8x32xf32> to vector<8x32xf32>
    %c0_2 = arith.constant 0 : index
    %c0_3 = arith.constant 0 : index
    %2 = vector.load %arg3[%c0_2, %c0_3] : memref<1x32xf32, #tpu.memory_space<vmem>>, vector<1x32xf32>
    %c0_4 = arith.constant 0 : index
    %c0_5 = arith.constant 0 : index
    %3 = vector.load %arg4[%c0_4, %c0_5] : memref<1x32xf32, #tpu.memory_space<vmem>>, vector<1x32xf32>
    %cst = arith.constant dense<0.000000e+00> : vector<8xf32>
    %4 = vector.multi_reduction <add>, %1, %cst [1] : vector<8x32xf32> to vector<8xf32>
    %5 = vector.shape_cast %4 : vector<8xf32> to vector<8x1xf32>
    %cst_6 = arith.constant 3.200000e+01 : f32
    %6 = vector.broadcast %cst_6 : f32 to vector<8x1xf32>
    %7 = arith.divf %5, %6 : vector<8x1xf32>
    %8 = vector.broadcast %7 : vector<8x1xf32> to vector<8x32xf32>
    %9 = arith.subf %1, %8 : vector<8x32xf32>
    %10 = arith.mulf %9, %9 : vector<8x32xf32>
    %cst_7 = arith.constant dense<0.000000e+00> : vector<8xf32>
    %11 = vector.multi_reduction <add>, %10, %cst_7 [1] : vector<8x32xf32> to vector<8xf32>
    %12 = vector.shape_cast %11 : vector<8xf32> to vector<8x1xf32>
    %cst_8 = arith.constant 3.200000e+01 : f32
    %13 = vector.broadcast %cst_8 : f32 to vector<8x1xf32>
    %14 = arith.divf %12, %13 : vector<8x1xf32>
    %15 = vector.broadcast %7 : vector<8x1xf32> to vector<8x32xf32>
    %16 = arith.subf %1, %15 : vector<8x32xf32>
    %cst_9 = arith.constant 9.99999974E-6 : f32
    %17 = vector.broadcast %cst_9 : f32 to vector<8x1xf32>
    %18 = arith.addf %14, %17 : vector<8x1xf32>
    %19 = math.rsqrt %18 : vector<8x1xf32>
    %20 = vector.broadcast %19 : vector<8x1xf32> to vector<8x32xf32>
    %21 = arith.mulf %16, %20 : vector<8x32xf32>
    %22 = vector.broadcast %2 : vector<1x32xf32> to vector<8x32xf32>
    %23 = arith.mulf %21, %22 : vector<8x32xf32>
    %24 = vector.broadcast %3 : vector<1x32xf32> to vector<8x32xf32>
    %25 = arith.addf %23, %24 : vector<8x32xf32>
    %c0_10 = arith.constant 0 : index
    %c0_11 = arith.constant 0 : index
    %26 = vector.load %arg5[%c0_10, %c0_11] : memref<32x128xf32, #tpu.memory_space<vmem>>, vector<32x128xf32>
    %cst_12 = arith.constant dense<0.000000e+00> : vector<8x128xf32>
    %27 = tpu.matmul %25, %26, %cst_12 {dimension_numbers = #tpu.dot_dimension_numbers<[1], [0], [0], [1], [0, 0, 1, 1], [], []>} : vector<8x32xf32>, vector<32x128xf32>, vector<8x128xf32> -> vector<8x128xf32>
    %c0_13 = arith.constant 0 : index
    %c0_14 = arith.constant 0 : index
    %28 = vector.load %arg6[%c0_13, %c0_14] : memref<1x128xf32, #tpu.memory_space<vmem>>, vector<1x128xf32>
    %29 = vector.broadcast %28 : vector<1x128xf32> to vector<8x128xf32>
    %30 = arith.addf %27, %29 : vector<8x128xf32>
    %cst_15 = arith.constant 0.000000e+00 : f32
    %31 = vector.broadcast %cst_15 : f32 to vector<8x128xf32>
    %32 = arith.maximumf %30, %31 : vector<8x128xf32>
    %c0_16 = arith.constant 0 : index
    %c0_17 = arith.constant 0 : index
    %33 = vector.load %arg7[%c0_16, %c0_17] : memref<128x32xf32, #tpu.memory_space<vmem>>, vector<128x32xf32>
    %cst_18 = arith.constant dense<0.000000e+00> : vector<8x32xf32>
    %34 = tpu.matmul %32, %33, %cst_18 {dimension_numbers = #tpu.dot_dimension_numbers<[1], [0], [0], [1], [0, 0, 1, 1], [], []>} : vector<8x128xf32>, vector<128x32xf32>, vector<8x32xf32> -> vector<8x32xf32>
    %35 = arith.addf %1, %34 : vector<8x32xf32>
    %c0_19 = arith.constant 0 : index
    %c0_20 = arith.constant 0 : index
    %36 = vector.load %arg8[%c0_19, %c0_20] : memref<1x32xf32, #tpu.memory_space<vmem>>, vector<1x32xf32>
    %37 = vector.broadcast %36 : vector<1x32xf32> to vector<8x32xf32>
    %38 = arith.addf %35, %37 : vector<8x32xf32>
    %c0_21 = arith.constant 0 : index
    %c0_22 = arith.constant 0 : index
    %c0_23 = arith.constant 0 : index
    %39 = vector.load %arg9[%c0_21, %c0_22, %c0_23] : memref<1x8x32xf32, #tpu.memory_space<vmem>>, vector<1x8x32xf32>
    %40 = vector.shape_cast %39 : vector<1x8x32xf32> to vector<8x32xf32>
    %41 = vector.shape_cast %38 : vector<8x32xf32> to vector<1x8x32xf32>
    tpu.vector_store %arg9[%c0_21, %c0_22, %c0_23], %41 {strides = array<i32>} : memref<1x8x32xf32, #tpu.memory_space<vmem>>, vector<1x8x32xf32>,
    return
  }
  func.func @transform_0(%arg0: i32, %arg1: i32) -> (i32, i32, i32) {
    %c0_i32 = arith.constant 0 : i32
    %c0_i32_0 = arith.constant 0 : i32
    return %arg0, %arg1, %c0_i32 : i32, i32, i32
  }
  func.func @transform_1(%arg0: i32, %arg1: i32) -> (i32, i32) {
    %c0_i32 = arith.constant 0 : i32
    %c0_i32_0 = arith.constant 0 : i32
    %c0_i32_1 = arith.constant 0 : i32
    return %c0_i32, %c0_i32_0 : i32, i32
  }
  func.func @transform_2(%arg0: i32, %arg1: i32) -> (i32, i32) {
    %c0_i32 = arith.constant 0 : i32
    %c0_i32_0 = arith.constant 0 : i32
    %c0_i32_1 = arith.constant 0 : i32
    return %c0_i32, %c0_i32_0 : i32, i32
  }
  func.func @transform_3(%arg0: i32, %arg1: i32) -> (i32, i32) {
    %c0_i32 = arith.constant 0 : i32
    %c0_i32_0 = arith.constant 0 : i32
    %c0_i32_1 = arith.constant 0 : i32
    return %c0_i32, %c0_i32_0 : i32, i32
  }
  func.func @transform_4(%arg0: i32, %arg1: i32) -> (i32, i32) {
    %c0_i32 = arith.constant 0 : i32
    %c0_i32_0 = arith.constant 0 : i32
    %c0_i32_1 = arith.constant 0 : i32
    return %c0_i32, %c0_i32_0 : i32, i32
  }
  func.func @transform_5(%arg0: i32, %arg1: i32) -> (i32, i32) {
    %c0_i32 = arith.constant 0 : i32
    %c0_i32_0 = arith.constant 0 : i32
    %c0_i32_1 = arith.constant 0 : i32
    return %c0_i32, %c0_i32_0 : i32, i32
  }
  func.func @transform_6(%arg0: i32, %arg1: i32) -> (i32, i32) {
    %c0_i32 = arith.constant 0 : i32
    %c0_i32_0 = arith.constant 0 : i32
    %c0_i32_1 = arith.constant 0 : i32
    return %c0_i32, %c0_i32_0 : i32, i32
  }
  func.func @transform_7(%arg0: i32, %arg1: i32) -> (i32, i32, i32) {
    %c0_i32 = arith.constant 0 : i32
    %c0_i32_0 = arith.constant 0 : i32
    return %arg0, %arg1, %c0_i32 : i32, i32, i32
  }
}

module attributes {stable_mosaic.version = 11 : i64} {
  func.func @kernel(%arg0: i32, %arg1: i32, %arg2: i32, %arg3: memref<1x8x32xf32, #tpu.memory_space<vmem>>, %arg4: memref<1x4x8x4xf32, #tpu.memory_space<vmem>>, %arg5: memref<1x4x8x4xf32, #tpu.memory_space<vmem>>, %arg6: memref<1x4x8x4xf32, #tpu.memory_space<vmem>>, %arg7: memref<1x4x8x8xbf16, #tpu.memory_space<vmem>>, %arg8: memref<4x4x32xf32, #tpu.memory_space<vmem>>, %arg9: memref<1x32xf32, #tpu.memory_space<vmem>>, %arg10: memref<1x8x32xf32, #tpu.memory_space<vmem>>, %arg11: memref<4x8x1xf32, #tpu.memory_space<vmem>>, %arg12: memref<4x8x1xf32, #tpu.memory_space<vmem>>, %arg13: memref<4x8x4xf32, #tpu.memory_space<vmem>>) attributes {dimension_semantics = [#tpu.dimension_semantics<parallel>, #tpu.dimension_semantics<parallel>, #tpu.dimension_semantics<arbitrary>], iteration_bounds = array<i64: 2, 1, 1>, scalar_prefetch = 0 : i64, scratch_operands = 3 : i64, tpu.core_type = #tpu.core_type<tc>, window_params = [{transform_indices = @transform_0, window_bounds = array<i64: 1, 8, 32>}, {transform_indices = @transform_1, window_bounds = array<i64: 1, 4, 8, 4>}, {transform_indices = @transform_2, window_bounds = array<i64: 1, 4, 8, 4>}, {transform_indices = @transform_3, window_bounds = array<i64: 1, 4, 8, 4>}, {transform_indices = @transform_4, window_bounds = array<i64: 1, 4, 8, 8>}, {pipeline_mode = #tpu.pipeline_mode<synchronous>, transform_indices = @transform_5, window_bounds = array<i64: 4, 4, 32>}, {pipeline_mode = #tpu.pipeline_mode<synchronous>, transform_indices = @transform_6, window_bounds = array<i64: 1, 32>}, {transform_indices = @transform_7, window_bounds = array<i64: 1, 8, 32>}]} {
    %c0_i32 = arith.constant 0 : i32
    %0 = arith.cmpi eq, %arg2, %c0_i32 : i32
    %1 = arith.extui %0 : i1 to i32
    %c0_i32_0 = arith.constant 0 : i32
    %2 = arith.cmpi ne, %1, %c0_i32_0 : i32
    scf.if %2 {
      %cst_150 = arith.constant -1.000000e+30 : f32
      %174 = vector.broadcast %cst_150 : f32 to vector<4x8x1xf32>
      %c0_151 = arith.constant 0 : index
      %c0_152 = arith.constant 0 : index
      %c0_153 = arith.constant 0 : index
      %175 = vector.load %arg11[%c0_151, %c0_152, %c0_153] : memref<4x8x1xf32, #tpu.memory_space<vmem>>, vector<4x8x1xf32>
      tpu.vector_store %arg11[%c0_151, %c0_152, %c0_153], %174 {strides = array<i32>} : memref<4x8x1xf32, #tpu.memory_space<vmem>>, vector<4x8x1xf32>,
      %cst_154 = arith.constant 0.000000e+00 : f32
      %176 = vector.broadcast %cst_154 : f32 to vector<4x8x1xf32>
      %c0_155 = arith.constant 0 : index
      %c0_156 = arith.constant 0 : index
      %c0_157 = arith.constant 0 : index
      %177 = vector.load %arg12[%c0_155, %c0_156, %c0_157] : memref<4x8x1xf32, #tpu.memory_space<vmem>>, vector<4x8x1xf32>
      tpu.vector_store %arg12[%c0_155, %c0_156, %c0_157], %176 {strides = array<i32>} : memref<4x8x1xf32, #tpu.memory_space<vmem>>, vector<4x8x1xf32>,
      %cst_158 = arith.constant 0.000000e+00 : f32
      %178 = vector.broadcast %cst_158 : f32 to vector<4x8x4xf32>
      %c0_159 = arith.constant 0 : index
      %c0_160 = arith.constant 0 : index
      %c0_161 = arith.constant 0 : index
      %179 = vector.load %arg13[%c0_159, %c0_160, %c0_161] : memref<4x8x4xf32, #tpu.memory_space<vmem>>, vector<4x8x4xf32>
      tpu.vector_store %arg13[%c0_159, %c0_160, %c0_161], %178 {strides = array<i32>} : memref<4x8x4xf32, #tpu.memory_space<vmem>>, vector<4x8x4xf32>,
    } else {
    }
    %c0 = arith.constant 0 : index
    %c0_1 = arith.constant 0 : index
    %c0_2 = arith.constant 0 : index
    %c0_3 = arith.constant 0 : index
    %3 = vector.load %arg4[%c0, %c0_1, %c0_2, %c0_3] : memref<1x4x8x4xf32, #tpu.memory_space<vmem>>, vector<1x1x8x4xf32>
    %4 = vector.shape_cast %3 : vector<1x1x8x4xf32> to vector<8x4xf32>
    %c0_4 = arith.constant 0 : index
    %c0_5 = arith.constant 0 : index
    %c0_6 = arith.constant 0 : index
    %c0_7 = arith.constant 0 : index
    %5 = vector.load %arg5[%c0_4, %c0_5, %c0_6, %c0_7] : memref<1x4x8x4xf32, #tpu.memory_space<vmem>>, vector<1x1x8x4xf32>
    %6 = vector.shape_cast %5 : vector<1x1x8x4xf32> to vector<8x4xf32>
    %c0_8 = arith.constant 0 : index
    %c0_9 = arith.constant 0 : index
    %c0_10 = arith.constant 0 : index
    %c0_11 = arith.constant 0 : index
    %7 = vector.load %arg6[%c0_8, %c0_9, %c0_10, %c0_11] : memref<1x4x8x4xf32, #tpu.memory_space<vmem>>, vector<1x1x8x4xf32>
    %8 = vector.shape_cast %7 : vector<1x1x8x4xf32> to vector<8x4xf32>
    %cst = arith.constant dense<0.000000e+00> : vector<8x8xf32>
    %9 = tpu.matmul %4, %6, %cst {dimension_numbers = #tpu.dot_dimension_numbers<[1], [1], [0], [0], [0, 0, 1, 0], [], []>} : vector<8x4xf32>, vector<8x4xf32>, vector<8x8xf32> -> vector<8x8xf32>
    %c0_12 = arith.constant 0 : index
    %c0_13 = arith.constant 0 : index
    %c0_14 = arith.constant 0 : index
    %c0_15 = arith.constant 0 : index
    %10 = vector.load %arg7[%c0_12, %c0_13, %c0_14, %c0_15] : memref<1x4x8x8xbf16, #tpu.memory_space<vmem>>, vector<1x1x8x8xbf16>
    %11 = vector.shape_cast %10 : vector<1x1x8x8xbf16> to vector<8x8xbf16>
    %12 = arith.extf %11 : vector<8x8xbf16> to vector<8x8xf32>
    %13 = arith.addf %9, %12 : vector<8x8xf32>
    %c0_16 = arith.constant 0 : index
    %c0_17 = arith.constant 0 : index
    %c0_18 = arith.constant 0 : index
    %14 = vector.load %arg11[%c0_16, %c0_17, %c0_18] : memref<4x8x1xf32, #tpu.memory_space<vmem>>, vector<1x8x1xf32>
    %15 = vector.shape_cast %14 : vector<1x8x1xf32> to vector<8x1xf32>
    %cst_19 = arith.constant dense<0xFF800000> : vector<8xf32>
    %16 = vector.multi_reduction <maximumf>, %13, %cst_19 [1] : vector<8x8xf32> to vector<8xf32>
    %17 = vector.shape_cast %16 : vector<8xf32> to vector<8x1xf32>
    %18 = arith.maximumf %15, %17 : vector<8x1xf32>
    %19 = arith.subf %15, %18 : vector<8x1xf32>
    %20 = math.exp %19 : vector<8x1xf32>
    %21 = vector.broadcast %18 : vector<8x1xf32> to vector<8x8xf32>
    %22 = arith.subf %13, %21 : vector<8x8xf32>
    %23 = math.exp %22 : vector<8x8xf32>
    %c0_20 = arith.constant 0 : index
    %c0_21 = arith.constant 0 : index
    %c0_22 = arith.constant 0 : index
    %24 = vector.load %arg12[%c0_20, %c0_21, %c0_22] : memref<4x8x1xf32, #tpu.memory_space<vmem>>, vector<1x8x1xf32>
    %25 = vector.shape_cast %24 : vector<1x8x1xf32> to vector<8x1xf32>
    %26 = arith.mulf %20, %25 : vector<8x1xf32>
    %cst_23 = arith.constant dense<0.000000e+00> : vector<8xf32>
    %27 = vector.multi_reduction <add>, %23, %cst_23 [1] : vector<8x8xf32> to vector<8xf32>
    %28 = vector.shape_cast %27 : vector<8xf32> to vector<8x1xf32>
    %29 = arith.addf %26, %28 : vector<8x1xf32>
    %c0_24 = arith.constant 0 : index
    %c0_25 = arith.constant 0 : index
    %c0_26 = arith.constant 0 : index
    %30 = vector.load %arg12[%c0_24, %c0_25, %c0_26] : memref<4x8x1xf32, #tpu.memory_space<vmem>>, vector<1x8x1xf32>
    %31 = vector.shape_cast %30 : vector<1x8x1xf32> to vector<8x1xf32>
    %32 = vector.shape_cast %29 : vector<8x1xf32> to vector<1x8x1xf32>
    tpu.vector_store %arg12[%c0_24, %c0_25, %c0_26], %32 {strides = array<i32>} : memref<4x8x1xf32, #tpu.memory_space<vmem>>, vector<1x8x1xf32>,
    %c0_27 = arith.constant 0 : index
    %c0_28 = arith.constant 0 : index
    %c0_29 = arith.constant 0 : index
    %33 = vector.load %arg13[%c0_27, %c0_28, %c0_29] : memref<4x8x4xf32, #tpu.memory_space<vmem>>, vector<1x8x4xf32>
    %34 = vector.shape_cast %33 : vector<1x8x4xf32> to vector<8x4xf32>
    %35 = vector.broadcast %20 : vector<8x1xf32> to vector<8x4xf32>
    %36 = arith.mulf %35, %34 : vector<8x4xf32>
    %cst_30 = arith.constant dense<0.000000e+00> : vector<8x4xf32>
    %37 = tpu.matmul %23, %8, %cst_30 {dimension_numbers = #tpu.dot_dimension_numbers<[1], [0], [0], [1], [0, 0, 1, 1], [], []>} : vector<8x8xf32>, vector<8x4xf32>, vector<8x4xf32> -> vector<8x4xf32>
    %38 = arith.addf %36, %37 : vector<8x4xf32>
    %c0_31 = arith.constant 0 : index
    %c0_32 = arith.constant 0 : index
    %c0_33 = arith.constant 0 : index
    %39 = vector.load %arg13[%c0_31, %c0_32, %c0_33] : memref<4x8x4xf32, #tpu.memory_space<vmem>>, vector<1x8x4xf32>
    %40 = vector.shape_cast %39 : vector<1x8x4xf32> to vector<8x4xf32>
    %41 = vector.shape_cast %38 : vector<8x4xf32> to vector<1x8x4xf32>
    tpu.vector_store %arg13[%c0_31, %c0_32, %c0_33], %41 {strides = array<i32>} : memref<4x8x4xf32, #tpu.memory_space<vmem>>, vector<1x8x4xf32>,
    %c0_34 = arith.constant 0 : index
    %c0_35 = arith.constant 0 : index
    %c0_36 = arith.constant 0 : index
    %42 = vector.load %arg11[%c0_34, %c0_35, %c0_36] : memref<4x8x1xf32, #tpu.memory_space<vmem>>, vector<1x8x1xf32>
    %43 = vector.shape_cast %42 : vector<1x8x1xf32> to vector<8x1xf32>
    %44 = vector.shape_cast %18 : vector<8x1xf32> to vector<1x8x1xf32>
    tpu.vector_store %arg11[%c0_34, %c0_35, %c0_36], %44 {strides = array<i32>} : memref<4x8x1xf32, #tpu.memory_space<vmem>>, vector<1x8x1xf32>,
    %c0_37 = arith.constant 0 : index
    %c1 = arith.constant 1 : index
    %c0_38 = arith.constant 0 : index
    %c0_39 = arith.constant 0 : index
    %45 = vector.load %arg4[%c0_37, %c1, %c0_38, %c0_39] : memref<1x4x8x4xf32, #tpu.memory_space<vmem>>, vector<1x1x8x4xf32>
    %46 = vector.shape_cast %45 : vector<1x1x8x4xf32> to vector<8x4xf32>
    %c0_40 = arith.constant 0 : index
    %c1_41 = arith.constant 1 : index
    %c0_42 = arith.constant 0 : index
    %c0_43 = arith.constant 0 : index
    %47 = vector.load %arg5[%c0_40, %c1_41, %c0_42, %c0_43] : memref<1x4x8x4xf32, #tpu.memory_space<vmem>>, vector<1x1x8x4xf32>
    %48 = vector.shape_cast %47 : vector<1x1x8x4xf32> to vector<8x4xf32>
    %c0_44 = arith.constant 0 : index
    %c1_45 = arith.constant 1 : index
    %c0_46 = arith.constant 0 : index
    %c0_47 = arith.constant 0 : index
    %49 = vector.load %arg6[%c0_44, %c1_45, %c0_46, %c0_47] : memref<1x4x8x4xf32, #tpu.memory_space<vmem>>, vector<1x1x8x4xf32>
    %50 = vector.shape_cast %49 : vector<1x1x8x4xf32> to vector<8x4xf32>
    %cst_48 = arith.constant dense<0.000000e+00> : vector<8x8xf32>
    %51 = tpu.matmul %46, %48, %cst_48 {dimension_numbers = #tpu.dot_dimension_numbers<[1], [1], [0], [0], [0, 0, 1, 0], [], []>} : vector<8x4xf32>, vector<8x4xf32>, vector<8x8xf32> -> vector<8x8xf32>
    %c0_49 = arith.constant 0 : index
    %c1_50 = arith.constant 1 : index
    %c0_51 = arith.constant 0 : index
    %c0_52 = arith.constant 0 : index
    %52 = vector.load %arg7[%c0_49, %c1_50, %c0_51, %c0_52] : memref<1x4x8x8xbf16, #tpu.memory_space<vmem>>, vector<1x1x8x8xbf16>
    %53 = vector.shape_cast %52 : vector<1x1x8x8xbf16> to vector<8x8xbf16>
    %54 = arith.extf %53 : vector<8x8xbf16> to vector<8x8xf32>
    %55 = arith.addf %51, %54 : vector<8x8xf32>
    %c1_53 = arith.constant 1 : index
    %c0_54 = arith.constant 0 : index
    %c0_55 = arith.constant 0 : index
    %56 = vector.load %arg11[%c1_53, %c0_54, %c0_55] : memref<4x8x1xf32, #tpu.memory_space<vmem>>, vector<1x8x1xf32>
    %57 = vector.shape_cast %56 : vector<1x8x1xf32> to vector<8x1xf32>
    %cst_56 = arith.constant dense<0xFF800000> : vector<8xf32>
    %58 = vector.multi_reduction <maximumf>, %55, %cst_56 [1] : vector<8x8xf32> to vector<8xf32>
    %59 = vector.shape_cast %58 : vector<8xf32> to vector<8x1xf32>
    %60 = arith.maximumf %57, %59 : vector<8x1xf32>
    %61 = arith.subf %57, %60 : vector<8x1xf32>
    %62 = math.exp %61 : vector<8x1xf32>
    %63 = vector.broadcast %60 : vector<8x1xf32> to vector<8x8xf32>
    %64 = arith.subf %55, %63 : vector<8x8xf32>
    %65 = math.exp %64 : vector<8x8xf32>
    %c1_57 = arith.constant 1 : index
    %c0_58 = arith.constant 0 : index
    %c0_59 = arith.constant 0 : index
    %66 = vector.load %arg12[%c1_57, %c0_58, %c0_59] : memref<4x8x1xf32, #tpu.memory_space<vmem>>, vector<1x8x1xf32>
    %67 = vector.shape_cast %66 : vector<1x8x1xf32> to vector<8x1xf32>
    %68 = arith.mulf %62, %67 : vector<8x1xf32>
    %cst_60 = arith.constant dense<0.000000e+00> : vector<8xf32>
    %69 = vector.multi_reduction <add>, %65, %cst_60 [1] : vector<8x8xf32> to vector<8xf32>
    %70 = vector.shape_cast %69 : vector<8xf32> to vector<8x1xf32>
    %71 = arith.addf %68, %70 : vector<8x1xf32>
    %c1_61 = arith.constant 1 : index
    %c0_62 = arith.constant 0 : index
    %c0_63 = arith.constant 0 : index
    %72 = vector.load %arg12[%c1_61, %c0_62, %c0_63] : memref<4x8x1xf32, #tpu.memory_space<vmem>>, vector<1x8x1xf32>
    %73 = vector.shape_cast %72 : vector<1x8x1xf32> to vector<8x1xf32>
    %74 = vector.shape_cast %71 : vector<8x1xf32> to vector<1x8x1xf32>
    tpu.vector_store %arg12[%c1_61, %c0_62, %c0_63], %74 {strides = array<i32>} : memref<4x8x1xf32, #tpu.memory_space<vmem>>, vector<1x8x1xf32>,
    %c1_64 = arith.constant 1 : index
    %c0_65 = arith.constant 0 : index
    %c0_66 = arith.constant 0 : index
    %75 = vector.load %arg13[%c1_64, %c0_65, %c0_66] : memref<4x8x4xf32, #tpu.memory_space<vmem>>, vector<1x8x4xf32>
    %76 = vector.shape_cast %75 : vector<1x8x4xf32> to vector<8x4xf32>
    %77 = vector.broadcast %62 : vector<8x1xf32> to vector<8x4xf32>
    %78 = arith.mulf %77, %76 : vector<8x4xf32>
    %cst_67 = arith.constant dense<0.000000e+00> : vector<8x4xf32>
    %79 = tpu.matmul %65, %50, %cst_67 {dimension_numbers = #tpu.dot_dimension_numbers<[1], [0], [0], [1], [0, 0, 1, 1], [], []>} : vector<8x8xf32>, vector<8x4xf32>, vector<8x4xf32> -> vector<8x4xf32>
    %80 = arith.addf %78, %79 : vector<8x4xf32>
    %c1_68 = arith.constant 1 : index
    %c0_69 = arith.constant 0 : index
    %c0_70 = arith.constant 0 : index
    %81 = vector.load %arg13[%c1_68, %c0_69, %c0_70] : memref<4x8x4xf32, #tpu.memory_space<vmem>>, vector<1x8x4xf32>
    %82 = vector.shape_cast %81 : vector<1x8x4xf32> to vector<8x4xf32>
    %83 = vector.shape_cast %80 : vector<8x4xf32> to vector<1x8x4xf32>
    tpu.vector_store %arg13[%c1_68, %c0_69, %c0_70], %83 {strides = array<i32>} : memref<4x8x4xf32, #tpu.memory_space<vmem>>, vector<1x8x4xf32>,
    %c1_71 = arith.constant 1 : index
    %c0_72 = arith.constant 0 : index
    %c0_73 = arith.constant 0 : index
    %84 = vector.load %arg11[%c1_71, %c0_72, %c0_73] : memref<4x8x1xf32, #tpu.memory_space<vmem>>, vector<1x8x1xf32>
    %85 = vector.shape_cast %84 : vector<1x8x1xf32> to vector<8x1xf32>
    %86 = vector.shape_cast %60 : vector<8x1xf32> to vector<1x8x1xf32>
    tpu.vector_store %arg11[%c1_71, %c0_72, %c0_73], %86 {strides = array<i32>} : memref<4x8x1xf32, #tpu.memory_space<vmem>>, vector<1x8x1xf32>,
    %c0_74 = arith.constant 0 : index
    %c2 = arith.constant 2 : index
    %c0_75 = arith.constant 0 : index
    %c0_76 = arith.constant 0 : index
    %87 = vector.load %arg4[%c0_74, %c2, %c0_75, %c0_76] : memref<1x4x8x4xf32, #tpu.memory_space<vmem>>, vector<1x1x8x4xf32>
    %88 = vector.shape_cast %87 : vector<1x1x8x4xf32> to vector<8x4xf32>
    %c0_77 = arith.constant 0 : index
    %c2_78 = arith.constant 2 : index
    %c0_79 = arith.constant 0 : index
    %c0_80 = arith.constant 0 : index
    %89 = vector.load %arg5[%c0_77, %c2_78, %c0_79, %c0_80] : memref<1x4x8x4xf32, #tpu.memory_space<vmem>>, vector<1x1x8x4xf32>
    %90 = vector.shape_cast %89 : vector<1x1x8x4xf32> to vector<8x4xf32>
    %c0_81 = arith.constant 0 : index
    %c2_82 = arith.constant 2 : index
    %c0_83 = arith.constant 0 : index
    %c0_84 = arith.constant 0 : index
    %91 = vector.load %arg6[%c0_81, %c2_82, %c0_83, %c0_84] : memref<1x4x8x4xf32, #tpu.memory_space<vmem>>, vector<1x1x8x4xf32>
    %92 = vector.shape_cast %91 : vector<1x1x8x4xf32> to vector<8x4xf32>
    %cst_85 = arith.constant dense<0.000000e+00> : vector<8x8xf32>
    %93 = tpu.matmul %88, %90, %cst_85 {dimension_numbers = #tpu.dot_dimension_numbers<[1], [1], [0], [0], [0, 0, 1, 0], [], []>} : vector<8x4xf32>, vector<8x4xf32>, vector<8x8xf32> -> vector<8x8xf32>
    %c0_86 = arith.constant 0 : index
    %c2_87 = arith.constant 2 : index
    %c0_88 = arith.constant 0 : index
    %c0_89 = arith.constant 0 : index
    %94 = vector.load %arg7[%c0_86, %c2_87, %c0_88, %c0_89] : memref<1x4x8x8xbf16, #tpu.memory_space<vmem>>, vector<1x1x8x8xbf16>
    %95 = vector.shape_cast %94 : vector<1x1x8x8xbf16> to vector<8x8xbf16>
    %96 = arith.extf %95 : vector<8x8xbf16> to vector<8x8xf32>
    %97 = arith.addf %93, %96 : vector<8x8xf32>
    %c2_90 = arith.constant 2 : index
    %c0_91 = arith.constant 0 : index
    %c0_92 = arith.constant 0 : index
    %98 = vector.load %arg11[%c2_90, %c0_91, %c0_92] : memref<4x8x1xf32, #tpu.memory_space<vmem>>, vector<1x8x1xf32>
    %99 = vector.shape_cast %98 : vector<1x8x1xf32> to vector<8x1xf32>
    %cst_93 = arith.constant dense<0xFF800000> : vector<8xf32>
    %100 = vector.multi_reduction <maximumf>, %97, %cst_93 [1] : vector<8x8xf32> to vector<8xf32>
    %101 = vector.shape_cast %100 : vector<8xf32> to vector<8x1xf32>
    %102 = arith.maximumf %99, %101 : vector<8x1xf32>
    %103 = arith.subf %99, %102 : vector<8x1xf32>
    %104 = math.exp %103 : vector<8x1xf32>
    %105 = vector.broadcast %102 : vector<8x1xf32> to vector<8x8xf32>
    %106 = arith.subf %97, %105 : vector<8x8xf32>
    %107 = math.exp %106 : vector<8x8xf32>
    %c2_94 = arith.constant 2 : index
    %c0_95 = arith.constant 0 : index
    %c0_96 = arith.constant 0 : index
    %108 = vector.load %arg12[%c2_94, %c0_95, %c0_96] : memref<4x8x1xf32, #tpu.memory_space<vmem>>, vector<1x8x1xf32>
    %109 = vector.shape_cast %108 : vector<1x8x1xf32> to vector<8x1xf32>
    %110 = arith.mulf %104, %109 : vector<8x1xf32>
    %cst_97 = arith.constant dense<0.000000e+00> : vector<8xf32>
    %111 = vector.multi_reduction <add>, %107, %cst_97 [1] : vector<8x8xf32> to vector<8xf32>
    %112 = vector.shape_cast %111 : vector<8xf32> to vector<8x1xf32>
    %113 = arith.addf %110, %112 : vector<8x1xf32>
    %c2_98 = arith.constant 2 : index
    %c0_99 = arith.constant 0 : index
    %c0_100 = arith.constant 0 : index
    %114 = vector.load %arg12[%c2_98, %c0_99, %c0_100] : memref<4x8x1xf32, #tpu.memory_space<vmem>>, vector<1x8x1xf32>
    %115 = vector.shape_cast %114 : vector<1x8x1xf32> to vector<8x1xf32>
    %116 = vector.shape_cast %113 : vector<8x1xf32> to vector<1x8x1xf32>
    tpu.vector_store %arg12[%c2_98, %c0_99, %c0_100], %116 {strides = array<i32>} : memref<4x8x1xf32, #tpu.memory_space<vmem>>, vector<1x8x1xf32>,
    %c2_101 = arith.constant 2 : index
    %c0_102 = arith.constant 0 : index
    %c0_103 = arith.constant 0 : index
    %117 = vector.load %arg13[%c2_101, %c0_102, %c0_103] : memref<4x8x4xf32, #tpu.memory_space<vmem>>, vector<1x8x4xf32>
    %118 = vector.shape_cast %117 : vector<1x8x4xf32> to vector<8x4xf32>
    %119 = vector.broadcast %104 : vector<8x1xf32> to vector<8x4xf32>
    %120 = arith.mulf %119, %118 : vector<8x4xf32>
    %cst_104 = arith.constant dense<0.000000e+00> : vector<8x4xf32>
    %121 = tpu.matmul %107, %92, %cst_104 {dimension_numbers = #tpu.dot_dimension_numbers<[1], [0], [0], [1], [0, 0, 1, 1], [], []>} : vector<8x8xf32>, vector<8x4xf32>, vector<8x4xf32> -> vector<8x4xf32>
    %122 = arith.addf %120, %121 : vector<8x4xf32>
    %c2_105 = arith.constant 2 : index
    %c0_106 = arith.constant 0 : index
    %c0_107 = arith.constant 0 : index
    %123 = vector.load %arg13[%c2_105, %c0_106, %c0_107] : memref<4x8x4xf32, #tpu.memory_space<vmem>>, vector<1x8x4xf32>
    %124 = vector.shape_cast %123 : vector<1x8x4xf32> to vector<8x4xf32>
    %125 = vector.shape_cast %122 : vector<8x4xf32> to vector<1x8x4xf32>
    tpu.vector_store %arg13[%c2_105, %c0_106, %c0_107], %125 {strides = array<i32>} : memref<4x8x4xf32, #tpu.memory_space<vmem>>, vector<1x8x4xf32>,
    %c2_108 = arith.constant 2 : index
    %c0_109 = arith.constant 0 : index
    %c0_110 = arith.constant 0 : index
    %126 = vector.load %arg11[%c2_108, %c0_109, %c0_110] : memref<4x8x1xf32, #tpu.memory_space<vmem>>, vector<1x8x1xf32>
    %127 = vector.shape_cast %126 : vector<1x8x1xf32> to vector<8x1xf32>
    %128 = vector.shape_cast %102 : vector<8x1xf32> to vector<1x8x1xf32>
    tpu.vector_store %arg11[%c2_108, %c0_109, %c0_110], %128 {strides = array<i32>} : memref<4x8x1xf32, #tpu.memory_space<vmem>>, vector<1x8x1xf32>,
    %c0_111 = arith.constant 0 : index
    %c3 = arith.constant 3 : index
    %c0_112 = arith.constant 0 : index
    %c0_113 = arith.constant 0 : index
    %129 = vector.load %arg4[%c0_111, %c3, %c0_112, %c0_113] : memref<1x4x8x4xf32, #tpu.memory_space<vmem>>, vector<1x1x8x4xf32>
    %130 = vector.shape_cast %129 : vector<1x1x8x4xf32> to vector<8x4xf32>
    %c0_114 = arith.constant 0 : index
    %c3_115 = arith.constant 3 : index
    %c0_116 = arith.constant 0 : index
    %c0_117 = arith.constant 0 : index
    %131 = vector.load %arg5[%c0_114, %c3_115, %c0_116, %c0_117] : memref<1x4x8x4xf32, #tpu.memory_space<vmem>>, vector<1x1x8x4xf32>
    %132 = vector.shape_cast %131 : vector<1x1x8x4xf32> to vector<8x4xf32>
    %c0_118 = arith.constant 0 : index
    %c3_119 = arith.constant 3 : index
    %c0_120 = arith.constant 0 : index
    %c0_121 = arith.constant 0 : index
    %133 = vector.load %arg6[%c0_118, %c3_119, %c0_120, %c0_121] : memref<1x4x8x4xf32, #tpu.memory_space<vmem>>, vector<1x1x8x4xf32>
    %134 = vector.shape_cast %133 : vector<1x1x8x4xf32> to vector<8x4xf32>
    %cst_122 = arith.constant dense<0.000000e+00> : vector<8x8xf32>
    %135 = tpu.matmul %130, %132, %cst_122 {dimension_numbers = #tpu.dot_dimension_numbers<[1], [1], [0], [0], [0, 0, 1, 0], [], []>} : vector<8x4xf32>, vector<8x4xf32>, vector<8x8xf32> -> vector<8x8xf32>
    %c0_123 = arith.constant 0 : index
    %c3_124 = arith.constant 3 : index
    %c0_125 = arith.constant 0 : index
    %c0_126 = arith.constant 0 : index
    %136 = vector.load %arg7[%c0_123, %c3_124, %c0_125, %c0_126] : memref<1x4x8x8xbf16, #tpu.memory_space<vmem>>, vector<1x1x8x8xbf16>
    %137 = vector.shape_cast %136 : vector<1x1x8x8xbf16> to vector<8x8xbf16>
    %138 = arith.extf %137 : vector<8x8xbf16> to vector<8x8xf32>
    %139 = arith.addf %135, %138 : vector<8x8xf32>
    %c3_127 = arith.constant 3 : index
    %c0_128 = arith.constant 0 : index
    %c0_129 = arith.constant 0 : index
    %140 = vector.load %arg11[%c3_127, %c0_128, %c0_129] : memref<4x8x1xf32, #tpu.memory_space<vmem>>, vector<1x8x1xf32>
    %141 = vector.shape_cast %140 : vector<1x8x1xf32> to vector<8x1xf32>
    %cst_130 = arith.constant dense<0xFF800000> : vector<8xf32>
    %142 = vector.multi_reduction <maximumf>, %139, %cst_130 [1] : vector<8x8xf32> to vector<8xf32>
    %143 = vector.shape_cast %142 : vector<8xf32> to vector<8x1xf32>
    %144 = arith.maximumf %141, %143 : vector<8x1xf32>
    %145 = arith.subf %141, %144 : vector<8x1xf32>
    %146 = math.exp %145 : vector<8x1xf32>
    %147 = vector.broadcast %144 : vector<8x1xf32> to vector<8x8xf32>
    %148 = arith.subf %139, %147 : vector<8x8xf32>
    %149 = math.exp %148 : vector<8x8xf32>
    %c3_131 = arith.constant 3 : index
    %c0_132 = arith.constant 0 : index
    %c0_133 = arith.constant 0 : index
    %150 = vector.load %arg12[%c3_131, %c0_132, %c0_133] : memref<4x8x1xf32, #tpu.memory_space<vmem>>, vector<1x8x1xf32>
    %151 = vector.shape_cast %150 : vector<1x8x1xf32> to vector<8x1xf32>
    %152 = arith.mulf %146, %151 : vector<8x1xf32>
    %cst_134 = arith.constant dense<0.000000e+00> : vector<8xf32>
    %153 = vector.multi_reduction <add>, %149, %cst_134 [1] : vector<8x8xf32> to vector<8xf32>
    %154 = vector.shape_cast %153 : vector<8xf32> to vector<8x1xf32>
    %155 = arith.addf %152, %154 : vector<8x1xf32>
    %c3_135 = arith.constant 3 : index
    %c0_136 = arith.constant 0 : index
    %c0_137 = arith.constant 0 : index
    %156 = vector.load %arg12[%c3_135, %c0_136, %c0_137] : memref<4x8x1xf32, #tpu.memory_space<vmem>>, vector<1x8x1xf32>
    %157 = vector.shape_cast %156 : vector<1x8x1xf32> to vector<8x1xf32>
    %158 = vector.shape_cast %155 : vector<8x1xf32> to vector<1x8x1xf32>
    tpu.vector_store %arg12[%c3_135, %c0_136, %c0_137], %158 {strides = array<i32>} : memref<4x8x1xf32, #tpu.memory_space<vmem>>, vector<1x8x1xf32>,
    %c3_138 = arith.constant 3 : index
    %c0_139 = arith.constant 0 : index
    %c0_140 = arith.constant 0 : index
    %159 = vector.load %arg13[%c3_138, %c0_139, %c0_140] : memref<4x8x4xf32, #tpu.memory_space<vmem>>, vector<1x8x4xf32>
    %160 = vector.shape_cast %159 : vector<1x8x4xf32> to vector<8x4xf32>
    %161 = vector.broadcast %146 : vector<8x1xf32> to vector<8x4xf32>
    %162 = arith.mulf %161, %160 : vector<8x4xf32>
    %cst_141 = arith.constant dense<0.000000e+00> : vector<8x4xf32>
    %163 = tpu.matmul %149, %134, %cst_141 {dimension_numbers = #tpu.dot_dimension_numbers<[1], [0], [0], [1], [0, 0, 1, 1], [], []>} : vector<8x8xf32>, vector<8x4xf32>, vector<8x4xf32> -> vector<8x4xf32>
    %164 = arith.addf %162, %163 : vector<8x4xf32>
    %c3_142 = arith.constant 3 : index
    %c0_143 = arith.constant 0 : index
    %c0_144 = arith.constant 0 : index
    %165 = vector.load %arg13[%c3_142, %c0_143, %c0_144] : memref<4x8x4xf32, #tpu.memory_space<vmem>>, vector<1x8x4xf32>
    %166 = vector.shape_cast %165 : vector<1x8x4xf32> to vector<8x4xf32>
    %167 = vector.shape_cast %164 : vector<8x4xf32> to vector<1x8x4xf32>
    tpu.vector_store %arg13[%c3_142, %c0_143, %c0_144], %167 {strides = array<i32>} : memref<4x8x4xf32, #tpu.memory_space<vmem>>, vector<1x8x4xf32>,
    %c3_145 = arith.constant 3 : index
    %c0_146 = arith.constant 0 : index
    %c0_147 = arith.constant 0 : index
    %168 = vector.load %arg11[%c3_145, %c0_146, %c0_147] : memref<4x8x1xf32, #tpu.memory_space<vmem>>, vector<1x8x1xf32>
    %169 = vector.shape_cast %168 : vector<1x8x1xf32> to vector<8x1xf32>
    %170 = vector.shape_cast %144 : vector<8x1xf32> to vector<1x8x1xf32>
    tpu.vector_store %arg11[%c3_145, %c0_146, %c0_147], %170 {strides = array<i32>} : memref<4x8x1xf32, #tpu.memory_space<vmem>>, vector<1x8x1xf32>,
    %c0_i32_148 = arith.constant 0 : i32
    %171 = arith.cmpi eq, %arg2, %c0_i32_148 : i32
    %172 = arith.extui %171 : i1 to i32
    %c0_i32_149 = arith.constant 0 : i32
    %173 = arith.cmpi ne, %172, %c0_i32_149 : i32
    scf.if %173 {
      %c0_150 = arith.constant 0 : index
      %c0_151 = arith.constant 0 : index
      %c0_152 = arith.constant 0 : index
      %174 = vector.load %arg3[%c0_150, %c0_151, %c0_152] : memref<1x8x32xf32, #tpu.memory_space<vmem>>, vector<1x8x32xf32>
      %175 = vector.shape_cast %174 : vector<1x8x32xf32> to vector<8x32xf32>
      %c0_153 = arith.constant 0 : index
      %c0_154 = arith.constant 0 : index
      %176 = vector.load %arg9[%c0_153, %c0_154] : memref<1x32xf32, #tpu.memory_space<vmem>>, vector<1x32xf32>
      %177 = vector.broadcast %176 : vector<1x32xf32> to vector<8x32xf32>
      %178 = arith.addf %175, %177 : vector<8x32xf32>
      %c0_155 = arith.constant 0 : index
      %c0_156 = arith.constant 0 : index
      %c0_157 = arith.constant 0 : index
      %179 = vector.load %arg13[%c0_155, %c0_156, %c0_157] : memref<4x8x4xf32, #tpu.memory_space<vmem>>, vector<1x8x4xf32>
      %180 = vector.shape_cast %179 : vector<1x8x4xf32> to vector<8x4xf32>
      %c0_158 = arith.constant 0 : index
      %c0_159 = arith.constant 0 : index
      %c0_160 = arith.constant 0 : index
      %181 = vector.load %arg12[%c0_158, %c0_159, %c0_160] : memref<4x8x1xf32, #tpu.memory_space<vmem>>, vector<1x8x1xf32>
      %182 = vector.shape_cast %181 : vector<1x8x1xf32> to vector<8x1xf32>
      %183 = tpu.reciprocal %182 {approx = true} : vector<8x1xf32> -> vector<8x1xf32>
      %184 = vector.broadcast %183 : vector<8x1xf32> to vector<8x4xf32>
      %185 = arith.mulf %180, %184 : vector<8x4xf32>
      %c0_161 = arith.constant 0 : index
      %c0_162 = arith.constant 0 : index
      %c0_163 = arith.constant 0 : index
      %186 = vector.load %arg8[%c0_161, %c0_162, %c0_163] : memref<4x4x32xf32, #tpu.memory_space<vmem>>, vector<1x4x32xf32>
      %187 = vector.shape_cast %186 : vector<1x4x32xf32> to vector<4x32xf32>
      %cst_164 = arith.constant dense<0.000000e+00> : vector<8x32xf32>
      %188 = tpu.matmul %185, %187, %cst_164 {dimension_numbers = #tpu.dot_dimension_numbers<[1], [0], [0], [1], [0, 0, 1, 1], [], []>} : vector<8x4xf32>, vector<4x32xf32>, vector<8x32xf32> -> vector<8x32xf32>
      %189 = arith.addf %178, %188 : vector<8x32xf32>
      %c1_165 = arith.constant 1 : index
      %c0_166 = arith.constant 0 : index
      %c0_167 = arith.constant 0 : index
      %190 = vector.load %arg13[%c1_165, %c0_166, %c0_167] : memref<4x8x4xf32, #tpu.memory_space<vmem>>, vector<1x8x4xf32>
      %191 = vector.shape_cast %190 : vector<1x8x4xf32> to vector<8x4xf32>
      %c1_168 = arith.constant 1 : index
      %c0_169 = arith.constant 0 : index
      %c0_170 = arith.constant 0 : index
      %192 = vector.load %arg12[%c1_168, %c0_169, %c0_170] : memref<4x8x1xf32, #tpu.memory_space<vmem>>, vector<1x8x1xf32>
      %193 = vector.shape_cast %192 : vector<1x8x1xf32> to vector<8x1xf32>
      %194 = tpu.reciprocal %193 {approx = true} : vector<8x1xf32> -> vector<8x1xf32>
      %195 = vector.broadcast %194 : vector<8x1xf32> to vector<8x4xf32>
      %196 = arith.mulf %191, %195 : vector<8x4xf32>
      %c1_171 = arith.constant 1 : index
      %c0_172 = arith.constant 0 : index
      %c0_173 = arith.constant 0 : index
      %197 = vector.load %arg8[%c1_171, %c0_172, %c0_173] : memref<4x4x32xf32, #tpu.memory_space<vmem>>, vector<1x4x32xf32>
      %198 = vector.shape_cast %197 : vector<1x4x32xf32> to vector<4x32xf32>
      %cst_174 = arith.constant dense<0.000000e+00> : vector<8x32xf32>
      %199 = tpu.matmul %196, %198, %cst_174 {dimension_numbers = #tpu.dot_dimension_numbers<[1], [0], [0], [1], [0, 0, 1, 1], [], []>} : vector<8x4xf32>, vector<4x32xf32>, vector<8x32xf32> -> vector<8x32xf32>
      %200 = arith.addf %189, %199 : vector<8x32xf32>
      %c2_175 = arith.constant 2 : index
      %c0_176 = arith.constant 0 : index
      %c0_177 = arith.constant 0 : index
      %201 = vector.load %arg13[%c2_175, %c0_176, %c0_177] : memref<4x8x4xf32, #tpu.memory_space<vmem>>, vector<1x8x4xf32>
      %202 = vector.shape_cast %201 : vector<1x8x4xf32> to vector<8x4xf32>
      %c2_178 = arith.constant 2 : index
      %c0_179 = arith.constant 0 : index
      %c0_180 = arith.constant 0 : index
      %203 = vector.load %arg12[%c2_178, %c0_179, %c0_180] : memref<4x8x1xf32, #tpu.memory_space<vmem>>, vector<1x8x1xf32>
      %204 = vector.shape_cast %203 : vector<1x8x1xf32> to vector<8x1xf32>
      %205 = tpu.reciprocal %204 {approx = true} : vector<8x1xf32> -> vector<8x1xf32>
      %206 = vector.broadcast %205 : vector<8x1xf32> to vector<8x4xf32>
      %207 = arith.mulf %202, %206 : vector<8x4xf32>
      %c2_181 = arith.constant 2 : index
      %c0_182 = arith.constant 0 : index
      %c0_183 = arith.constant 0 : index
      %208 = vector.load %arg8[%c2_181, %c0_182, %c0_183] : memref<4x4x32xf32, #tpu.memory_space<vmem>>, vector<1x4x32xf32>
      %209 = vector.shape_cast %208 : vector<1x4x32xf32> to vector<4x32xf32>
      %cst_184 = arith.constant dense<0.000000e+00> : vector<8x32xf32>
      %210 = tpu.matmul %207, %209, %cst_184 {dimension_numbers = #tpu.dot_dimension_numbers<[1], [0], [0], [1], [0, 0, 1, 1], [], []>} : vector<8x4xf32>, vector<4x32xf32>, vector<8x32xf32> -> vector<8x32xf32>
      %211 = arith.addf %200, %210 : vector<8x32xf32>
      %c3_185 = arith.constant 3 : index
      %c0_186 = arith.constant 0 : index
      %c0_187 = arith.constant 0 : index
      %212 = vector.load %arg13[%c3_185, %c0_186, %c0_187] : memref<4x8x4xf32, #tpu.memory_space<vmem>>, vector<1x8x4xf32>
      %213 = vector.shape_cast %212 : vector<1x8x4xf32> to vector<8x4xf32>
      %c3_188 = arith.constant 3 : index
      %c0_189 = arith.constant 0 : index
      %c0_190 = arith.constant 0 : index
      %214 = vector.load %arg12[%c3_188, %c0_189, %c0_190] : memref<4x8x1xf32, #tpu.memory_space<vmem>>, vector<1x8x1xf32>
      %215 = vector.shape_cast %214 : vector<1x8x1xf32> to vector<8x1xf32>
      %216 = tpu.reciprocal %215 {approx = true} : vector<8x1xf32> -> vector<8x1xf32>
      %217 = vector.broadcast %216 : vector<8x1xf32> to vector<8x4xf32>
      %218 = arith.mulf %213, %217 : vector<8x4xf32>
      %c3_191 = arith.constant 3 : index
      %c0_192 = arith.constant 0 : index
      %c0_193 = arith.constant 0 : index
      %219 = vector.load %arg8[%c3_191, %c0_192, %c0_193] : memref<4x4x32xf32, #tpu.memory_space<vmem>>, vector<1x4x32xf32>
      %220 = vector.shape_cast %219 : vector<1x4x32xf32> to vector<4x32xf32>
      %cst_194 = arith.constant dense<0.000000e+00> : vector<8x32xf32>
      %221 = tpu.matmul %218, %220, %cst_194 {dimension_numbers = #tpu.dot_dimension_numbers<[1], [0], [0], [1], [0, 0, 1, 1], [], []>} : vector<8x4xf32>, vector<4x32xf32>, vector<8x32xf32> -> vector<8x32xf32>
      %222 = arith.addf %211, %221 : vector<8x32xf32>
      %c0_195 = arith.constant 0 : index
      %c0_196 = arith.constant 0 : index
      %c0_197 = arith.constant 0 : index
      %223 = vector.load %arg10[%c0_195, %c0_196, %c0_197] : memref<1x8x32xf32, #tpu.memory_space<vmem>>, vector<1x8x32xf32>
      %224 = vector.shape_cast %223 : vector<1x8x32xf32> to vector<8x32xf32>
      %225 = vector.shape_cast %222 : vector<8x32xf32> to vector<1x8x32xf32>
      tpu.vector_store %arg10[%c0_195, %c0_196, %c0_197], %225 {strides = array<i32>} : memref<1x8x32xf32, #tpu.memory_space<vmem>>, vector<1x8x32xf32>,
    } else {
    }
    return
  }
  func.func @transform_0(%arg0: i32, %arg1: i32, %arg2: i32) -> (i32, i32, i32) {
    %c0_i32 = arith.constant 0 : i32
    %c0_i32_0 = arith.constant 0 : i32
    return %arg0, %arg1, %c0_i32 : i32, i32, i32
  }
  func.func @transform_1(%arg0: i32, %arg1: i32, %arg2: i32) -> (i32, i32, i32, i32) {
    %c0_i32 = arith.constant 0 : i32
    %c0_i32_0 = arith.constant 0 : i32
    %c0_i32_1 = arith.constant 0 : i32
    return %arg0, %c0_i32, %arg1, %c0_i32_0 : i32, i32, i32, i32
  }
  func.func @transform_2(%arg0: i32, %arg1: i32, %arg2: i32) -> (i32, i32, i32, i32) {
    %c0_i32 = arith.constant 0 : i32
    %c0_i32_0 = arith.constant 0 : i32
    %c0_i32_1 = arith.constant 0 : i32
    return %arg0, %c0_i32, %arg2, %c0_i32_0 : i32, i32, i32, i32
  }
  func.func @transform_3(%arg0: i32, %arg1: i32, %arg2: i32) -> (i32, i32, i32, i32) {
    %c0_i32 = arith.constant 0 : i32
    %c0_i32_0 = arith.constant 0 : i32
    %c0_i32_1 = arith.constant 0 : i32
    return %arg0, %c0_i32, %arg2, %c0_i32_0 : i32, i32, i32, i32
  }
  func.func @transform_4(%arg0: i32, %arg1: i32, %arg2: i32) -> (i32, i32, i32, i32) {
    %c0_i32 = arith.constant 0 : i32
    %c0_i32_0 = arith.constant 0 : i32
    return %arg0, %c0_i32, %arg1, %arg2 : i32, i32, i32, i32
  }
  func.func @transform_5(%arg0: i32, %arg1: i32, %arg2: i32) -> (i32, i32, i32) {
    %c0_i32 = arith.constant 0 : i32
    %c0_i32_0 = arith.constant 0 : i32
    %c0_i32_1 = arith.constant 0 : i32
    %c0_i32_2 = arith.constant 0 : i32
    return %c0_i32, %c0_i32_0, %c0_i32_1 : i32, i32, i32
  }
  func.func @transform_6(%arg0: i32, %arg1: i32, %arg2: i32) -> (i32, i32) {
    %c0_i32 = arith.constant 0 : i32
    %c0_i32_0 = arith.constant 0 : i32
    %c0_i32_1 = arith.constant 0 : i32
    return %c0_i32, %c0_i32_0 : i32, i32
  }
  func.func @transform_7(%arg0: i32, %arg1: i32, %arg2: i32) -> (i32, i32, i32) {
    %c0_i32 = arith.constant 0 : i32
    %c0_i32_0 = arith.constant 0 : i32
    return %arg0, %arg1, %c0_i32 : i32, i32, i32
  }
}

module attributes {stable_mosaic.version = 11 : i64} {
  func.func @_ab_kernel(%arg0: i32, %arg1: i32, %arg2: memref<1x8x32xf32, #tpu.memory_space<vmem>>, %arg3: memref<1x32xf32, #tpu.memory_space<vmem>>, %arg4: memref<1x32xf32, #tpu.memory_space<vmem>>, %arg5: memref<32x32xf32, #tpu.memory_space<vmem>>, %arg6: memref<1x32xf32, #tpu.memory_space<vmem>>, %arg7: memref<1x8x32xf32, #tpu.memory_space<vmem>>) attributes {dimension_semantics = [#tpu.dimension_semantics<parallel>, #tpu.dimension_semantics<parallel>], iteration_bounds = array<i64: 2, 1>, scalar_prefetch = 0 : i64, scratch_operands = 0 : i64, tpu.core_type = #tpu.core_type<tc>, window_params = [{transform_indices = @transform_0, window_bounds = array<i64: 1, 8, 32>}, {pipeline_mode = #tpu.pipeline_mode<synchronous>, transform_indices = @transform_1, window_bounds = array<i64: 1, 32>}, {pipeline_mode = #tpu.pipeline_mode<synchronous>, transform_indices = @transform_2, window_bounds = array<i64: 1, 32>}, {pipeline_mode = #tpu.pipeline_mode<synchronous>, transform_indices = @transform_3, window_bounds = array<i64: 32, 32>}, {pipeline_mode = #tpu.pipeline_mode<synchronous>, transform_indices = @transform_4, window_bounds = array<i64: 1, 32>}, {transform_indices = @transform_5, window_bounds = array<i64: 1, 8, 32>}]} {
    %c0 = arith.constant 0 : index
    %c0_0 = arith.constant 0 : index
    %c0_1 = arith.constant 0 : index
    %0 = vector.load %arg2[%c0, %c0_0, %c0_1] : memref<1x8x32xf32, #tpu.memory_space<vmem>>, vector<1x8x32xf32>
    %1 = vector.shape_cast %0 : vector<1x8x32xf32> to vector<8x32xf32>
    %c0_2 = arith.constant 0 : index
    %c0_3 = arith.constant 0 : index
    %2 = vector.load %arg3[%c0_2, %c0_3] : memref<1x32xf32, #tpu.memory_space<vmem>>, vector<1x32xf32>
    %c0_4 = arith.constant 0 : index
    %c0_5 = arith.constant 0 : index
    %3 = vector.load %arg4[%c0_4, %c0_5] : memref<1x32xf32, #tpu.memory_space<vmem>>, vector<1x32xf32>
    %cst = arith.constant dense<0.000000e+00> : vector<8xf32>
    %4 = vector.multi_reduction <add>, %1, %cst [1] : vector<8x32xf32> to vector<8xf32>
    %5 = vector.shape_cast %4 : vector<8xf32> to vector<8x1xf32>
    %cst_6 = arith.constant 3.200000e+01 : f32
    %6 = vector.broadcast %cst_6 : f32 to vector<8x1xf32>
    %7 = arith.divf %5, %6 : vector<8x1xf32>
    %8 = vector.broadcast %7 : vector<8x1xf32> to vector<8x32xf32>
    %9 = arith.subf %1, %8 : vector<8x32xf32>
    %10 = arith.mulf %9, %9 : vector<8x32xf32>
    %cst_7 = arith.constant dense<0.000000e+00> : vector<8xf32>
    %11 = vector.multi_reduction <add>, %10, %cst_7 [1] : vector<8x32xf32> to vector<8xf32>
    %12 = vector.shape_cast %11 : vector<8xf32> to vector<8x1xf32>
    %cst_8 = arith.constant 3.200000e+01 : f32
    %13 = vector.broadcast %cst_8 : f32 to vector<8x1xf32>
    %14 = arith.divf %12, %13 : vector<8x1xf32>
    %15 = vector.broadcast %7 : vector<8x1xf32> to vector<8x32xf32>
    %16 = arith.subf %1, %15 : vector<8x32xf32>
    %cst_9 = arith.constant 9.99999974E-6 : f32
    %17 = vector.broadcast %cst_9 : f32 to vector<8x1xf32>
    %18 = arith.addf %14, %17 : vector<8x1xf32>
    %19 = math.rsqrt %18 : vector<8x1xf32>
    %20 = vector.broadcast %19 : vector<8x1xf32> to vector<8x32xf32>
    %21 = arith.mulf %16, %20 : vector<8x32xf32>
    %22 = vector.broadcast %2 : vector<1x32xf32> to vector<8x32xf32>
    %23 = arith.mulf %21, %22 : vector<8x32xf32>
    %24 = vector.broadcast %3 : vector<1x32xf32> to vector<8x32xf32>
    %25 = arith.addf %23, %24 : vector<8x32xf32>
    %c0_10 = arith.constant 0 : index
    %c0_11 = arith.constant 0 : index
    %26 = vector.load %arg5[%c0_10, %c0_11] : memref<32x32xf32, #tpu.memory_space<vmem>>, vector<32x32xf32>
    %cst_12 = arith.constant dense<0.000000e+00> : vector<8x32xf32>
    %27 = tpu.matmul %25, %26, %cst_12 {dimension_numbers = #tpu.dot_dimension_numbers<[1], [0], [0], [1], [0, 0, 1, 1], [], []>} : vector<8x32xf32>, vector<32x32xf32>, vector<8x32xf32> -> vector<8x32xf32>
    %c0_13 = arith.constant 0 : index
    %c0_14 = arith.constant 0 : index
    %28 = vector.load %arg6[%c0_13, %c0_14] : memref<1x32xf32, #tpu.memory_space<vmem>>, vector<1x32xf32>
    %29 = vector.broadcast %28 : vector<1x32xf32> to vector<8x32xf32>
    %30 = arith.addf %27, %29 : vector<8x32xf32>
    %c0_15 = arith.constant 0 : index
    %c0_16 = arith.constant 0 : index
    %c0_17 = arith.constant 0 : index
    %31 = vector.load %arg7[%c0_15, %c0_16, %c0_17] : memref<1x8x32xf32, #tpu.memory_space<vmem>>, vector<1x8x32xf32>
    %32 = vector.shape_cast %31 : vector<1x8x32xf32> to vector<8x32xf32>
    %33 = vector.shape_cast %30 : vector<8x32xf32> to vector<1x8x32xf32>
    tpu.vector_store %arg7[%c0_15, %c0_16, %c0_17], %33 {strides = array<i32>} : memref<1x8x32xf32, #tpu.memory_space<vmem>>, vector<1x8x32xf32>,
    return
  }
  func.func @transform_0(%arg0: i32, %arg1: i32) -> (i32, i32, i32) {
    %c0_i32 = arith.constant 0 : i32
    %c0_i32_0 = arith.constant 0 : i32
    return %arg0, %arg1, %c0_i32 : i32, i32, i32
  }
  func.func @transform_1(%arg0: i32, %arg1: i32) -> (i32, i32) {
    %c0_i32 = arith.constant 0 : i32
    %c0_i32_0 = arith.constant 0 : i32
    %c0_i32_1 = arith.constant 0 : i32
    return %c0_i32, %c0_i32_0 : i32, i32
  }
  func.func @transform_2(%arg0: i32, %arg1: i32) -> (i32, i32) {
    %c0_i32 = arith.constant 0 : i32
    %c0_i32_0 = arith.constant 0 : i32
    %c0_i32_1 = arith.constant 0 : i32
    return %c0_i32, %c0_i32_0 : i32, i32
  }
  func.func @transform_3(%arg0: i32, %arg1: i32) -> (i32, i32) {
    %c0_i32 = arith.constant 0 : i32
    %c0_i32_0 = arith.constant 0 : i32
    %c0_i32_1 = arith.constant 0 : i32
    return %c0_i32, %c0_i32_0 : i32, i32
  }
  func.func @transform_4(%arg0: i32, %arg1: i32) -> (i32, i32) {
    %c0_i32 = arith.constant 0 : i32
    %c0_i32_0 = arith.constant 0 : i32
    %c0_i32_1 = arith.constant 0 : i32
    return %c0_i32, %c0_i32_0 : i32, i32
  }
  func.func @transform_5(%arg0: i32, %arg1: i32) -> (i32, i32, i32) {
    %c0_i32 = arith.constant 0 : i32
    %c0_i32_0 = arith.constant 0 : i32
    return %arg0, %arg1, %c0_i32 : i32, i32, i32
  }
}

module attributes {stable_mosaic.version = 11 : i64} {
  func.func @_opm_kernel(%arg0: i32, %arg1: i32, %arg2: i32, %arg3: memref<1x8x128xf32, #tpu.memory_space<vmem>>, %arg4: memref<1x8x16xf32, #tpu.memory_space<vmem>>, %arg5: memref<1x16x128xf32, #tpu.memory_space<vmem>>, %arg6: memref<1x128xf32, #tpu.memory_space<vmem>>, %arg7: memref<1x8x128xf32, #tpu.memory_space<vmem>>) attributes {dimension_semantics = [#tpu.dimension_semantics<parallel>, #tpu.dimension_semantics<parallel>, #tpu.dimension_semantics<parallel>], iteration_bounds = array<i64: 2, 1, 1>, scalar_prefetch = 0 : i64, scratch_operands = 0 : i64, tpu.core_type = #tpu.core_type<tc>, window_params = [{transform_indices = @transform_0, window_bounds = array<i64: 1, 8, 128>}, {transform_indices = @transform_1, window_bounds = array<i64: 1, 8, 16>}, {transform_indices = @transform_2, window_bounds = array<i64: 1, 16, 128>}, {pipeline_mode = #tpu.pipeline_mode<synchronous>, transform_indices = @transform_3, window_bounds = array<i64: 1, 128>}, {transform_indices = @transform_4, window_bounds = array<i64: 1, 8, 128>}]} {
    %c0 = arith.constant 0 : index
    %c0_0 = arith.constant 0 : index
    %c0_1 = arith.constant 0 : index
    %0 = vector.load %arg3[%c0, %c0_0, %c0_1] : memref<1x8x128xf32, #tpu.memory_space<vmem>>, vector<1x8x128xf32>
    %1 = vector.shape_cast %0 : vector<1x8x128xf32> to vector<8x128xf32>
    %c0_2 = arith.constant 0 : index
    %c0_3 = arith.constant 0 : index
    %c0_4 = arith.constant 0 : index
    %2 = vector.load %arg4[%c0_2, %c0_3, %c0_4] : memref<1x8x16xf32, #tpu.memory_space<vmem>>, vector<1x8x16xf32>
    %3 = vector.shape_cast %2 : vector<1x8x16xf32> to vector<8x16xf32>
    %c0_5 = arith.constant 0 : index
    %c0_6 = arith.constant 0 : index
    %c0_7 = arith.constant 0 : index
    %4 = vector.load %arg5[%c0_5, %c0_6, %c0_7] : memref<1x16x128xf32, #tpu.memory_space<vmem>>, vector<1x16x128xf32>
    %5 = vector.shape_cast %4 : vector<1x16x128xf32> to vector<16x128xf32>
    %cst = arith.constant dense<0.000000e+00> : vector<8x128xf32>
    %6 = tpu.matmul %3, %5, %cst {dimension_numbers = #tpu.dot_dimension_numbers<[1], [0], [0], [1], [0, 0, 1, 1], [], []>} : vector<8x16xf32>, vector<16x128xf32>, vector<8x128xf32> -> vector<8x128xf32>
    %7 = arith.addf %1, %6 : vector<8x128xf32>
    %c0_8 = arith.constant 0 : index
    %c0_9 = arith.constant 0 : index
    %8 = vector.load %arg6[%c0_8, %c0_9] : memref<1x128xf32, #tpu.memory_space<vmem>>, vector<1x128xf32>
    %9 = vector.broadcast %8 : vector<1x128xf32> to vector<8x128xf32>
    %10 = arith.addf %7, %9 : vector<8x128xf32>
    %c0_10 = arith.constant 0 : index
    %c0_11 = arith.constant 0 : index
    %c0_12 = arith.constant 0 : index
    %11 = vector.load %arg7[%c0_10, %c0_11, %c0_12] : memref<1x8x128xf32, #tpu.memory_space<vmem>>, vector<1x8x128xf32>
    %12 = vector.shape_cast %11 : vector<1x8x128xf32> to vector<8x128xf32>
    %13 = vector.shape_cast %10 : vector<8x128xf32> to vector<1x8x128xf32>
    tpu.vector_store %arg7[%c0_10, %c0_11, %c0_12], %13 {strides = array<i32>} : memref<1x8x128xf32, #tpu.memory_space<vmem>>, vector<1x8x128xf32>,
    return
  }
  func.func @transform_0(%arg0: i32, %arg1: i32, %arg2: i32) -> (i32, i32, i32) {
    %c0_i32 = arith.constant 0 : i32
    return %arg0, %arg1, %arg2 : i32, i32, i32
  }
  func.func @transform_1(%arg0: i32, %arg1: i32, %arg2: i32) -> (i32, i32, i32) {
    %c0_i32 = arith.constant 0 : i32
    %c0_i32_0 = arith.constant 0 : i32
    return %arg0, %arg1, %c0_i32 : i32, i32, i32
  }
  func.func @transform_2(%arg0: i32, %arg1: i32, %arg2: i32) -> (i32, i32, i32) {
    %c0_i32 = arith.constant 0 : i32
    %c0_i32_0 = arith.constant 0 : i32
    return %arg0, %c0_i32, %arg2 : i32, i32, i32
  }
  func.func @transform_3(%arg0: i32, %arg1: i32, %arg2: i32) -> (i32, i32) {
    %c0_i32 = arith.constant 0 : i32
    %c0_i32_0 = arith.constant 0 : i32
    %c0_i32_1 = arith.constant 0 : i32
    return %c0_i32, %c0_i32_0 : i32, i32
  }
  func.func @transform_4(%arg0: i32, %arg1: i32, %arg2: i32) -> (i32, i32, i32) {
    %c0_i32 = arith.constant 0 : i32
    return %arg0, %arg1, %arg2 : i32, i32, i32
  }
}

</mosaic_0001>

<llo_original>
// kernel: bioformer_block.7
$region0: #{bioformer_block.7}
  #allocation0 [shape = 'u32[]', space=smem, size = 0x4, offset = 0x4, fixed_abs, tag = 'smem constant byte address 0x4 - core index']
  #allocation1 [shape = 'u32[72,128]{1,0:T(1,128)}', space=vmem, size = 0x9000, scoped, tag = 'internal scratch']
  %s0 = inlined_call_operand.vmem [shape: f32[2,8,32], index: 0, kind: input, shape index: {}]
  %s1 = inlined_call_operand.vmem [shape: f32[1,32], index: 1, kind: input, shape index: {}]
  %s2 = inlined_call_operand.vmem [shape: f32[1,32], index: 2, kind: input, shape index: {}]
  %s3 = inlined_call_operand.vmem [shape: f32[32,48], index: 3, kind: input, shape index: {}]
  %s4 = inlined_call_operand.vmem [shape: f32[2,4,8,4], index: 4, kind: output, shape index: {0}]
  %s5 = inlined_call_operand.vmem [shape: f32[2,4,8,4], index: 5, kind: output, shape index: {1}]
  %s6 = inlined_call_operand.vmem [shape: f32[2,4,8,4], index: 6, kind: output, shape index: {2}]
  %7 = xla_tuple %s4, %s5, %s6
  %s8 = sld [smem:[#allocation0]]
  $region65: #{bioformer_block.7} parent=0
    _
  %s10 = ssub.s32 1, %s8
  %s11 = scalar_select 0, %s10, %s8
  loop: start=0, step=1, limit=4
  $region2: #{bioformer_block.7} parent=0 // loop_pre_header
    _
  $region3: #{bioformer_block.7} parent=0 // loop_header
    %s13 = sphi 0, %s17
    %p14 = scmp.ge.s32.totalorder %s13, 4
    %s20 = sphi 0, %s32
    %s21 = sphi 0, %s28
    %s22 = sphi 0, %s20
    %s23 = sphi 0, %s21
    %s24 = sphi 0, %s22
    %s25 = sphi 0, %s23
    %s37 = sphi 0, %s39
    %s40 = sphi 0, %s37
    %s41 = sphi 0, %s40
    %s57 = sphi 0, %s41
    %s61 = sphi 0, %s61
    %s63 = sphi 0, %s61
    %s64 = sphi 0, %s63
    %s78 = sphi 0, %s64
    %s82 = sphi 0, %s82
    %s84 = sphi 0, %s82
    %s85 = sphi 0, %s84
    %s99 = sphi 0, %s85
    %s103 = sphi 0, %s103
    %s105 = sphi 0, %s103
    %s106 = sphi 0, %s105
    %s120 = sphi 0, %s106
    %s128 = sphi 0, %s130
    %s131 = sphi 0, %s128
    %s132 = sphi 0, %s131
    %s148 = sphi 0, %s132
    %s156 = sphi 0, %s158
    %s159 = sphi 0, %s156
    %s160 = sphi 0, %s159
    %s176 = sphi 0, %s160
    %s184 = sphi 0, %s186
    %s187 = sphi 0, %s184
    %s188 = sphi 0, %s187
    %s204 = sphi 0, %s188
  $region4: #{bioformer_block.7} parent=0 // loop_header_branch
    %16 = sbr.rel (%p14) target = $region8
  $region5: #{bioformer_block.7} parent=0 // loop_body
    %s18 = ssub.s32 %s13, 1
    %s19 = ssub.s32 %s13, 2
    %s26 = sadd.s32 1, %s21
    %p27 = scmp.ge.s32.totalorder %s26, 1
    %s28 = scalar_select %p27, 0, %s26
    %s29 = sadd.s32 1, %s20
    %s30 = scalar_select %p27, %s29, %s20
    %p31 = scmp.ge.s32.totalorder %s30, 2
    %s32 = scalar_select %p31, 0, %s30
    %s33 = ssub.s32 %s20, %s32
    %s34 = ssub.s32 %s21, %s28
    %s35 = sor.u32 %s33, %s34
    %p36 = scmp.eq.s32.totalorder %s35, 0
    %s38 = sadd.s32 %s37, 1
    %s39 = scalar_select %p36, %s37, %s38
    %p42 = pneg %p36
    %p43 = scmp.eq.s32.totalorder %s13, 1
    %p44 = por %p42, %p43
    %p45 = scmp.ne.s32.totalorder %s37, %s40
    %p46 = scmp.eq.s32.totalorder %s13, 0
    %p47 = por %p45, %p46
    %p48 = scmp.ne.s32.totalorder %s37, %s40
    %p49 = scmp.eq.s32.totalorder %s18, 1
    %p50 = por %p48, %p49
    %p51 = scmp.ne.s32.totalorder %s40, %s41
    %p52 = scmp.eq.s32.totalorder %s18, 0
    %p53 = por %p51, %p52
    %p54 = scmp.ne.s32.totalorder %s40, %s41
    %p55 = scmp.eq.s32.totalorder %s19, 1
    %p56 = por %p54, %p55
    %p58 = scmp.ne.s32.totalorder %s41, %s57
    %p59 = scmp.eq.s32.totalorder %s19, 0
    %p60 = por %p58, %p59
    %s62 = sadd.s32 %s61, 1
    %p65 = scmp.eq.s32.totalorder %s13, 1
    %p66 = scmp.ne.s32.totalorder %s61, %s63
    %p67 = scmp.eq.s32.totalorder %s13, 0
    %p68 = por %p66, %p67
    %p69 = scmp.ne.s32.totalorder %s61, %s63
    %p70 = scmp.eq.s32.totalorder %s18, 1
    %p71 = por %p69, %p70
    %p72 = scmp.ne.s32.totalorder %s63, %s64
    %p73 = scmp.eq.s32.totalorder %s18, 0
    %p74 = por %p72, %p73
    %p75 = scmp.ne.s32.totalorder %s63, %s64
    %p76 = scmp.eq.s32.totalorder %s19, 1
    %p77 = por %p75, %p76
    %p79 = scmp.ne.s32.totalorder %s64, %s78
    %p80 = scmp.eq.s32.totalorder %s19, 0
    %p81 = por %p79, %p80
    %s83 = sadd.s32 %s82, 1
    %p86 = scmp.eq.s32.totalorder %s13, 1
    %p87 = scmp.ne.s32.totalorder %s82, %s84
    %p88 = scmp.eq.s32.totalorder %s13, 0
    %p89 = por %p87, %p88
    %p90 = scmp.ne.s32.totalorder %s82, %s84
    %p91 = scmp.eq.s32.totalorder %s18, 1
    %p92 = por %p90, %p91
    %p93 = scmp.ne.s32.totalorder %s84, %s85
    %p94 = scmp.eq.s32.totalorder %s18, 0
    %p95 = por %p93, %p94
    %p96 = scmp.ne.s32.totalorder %s84, %s85
    %p97 = scmp.eq.s32.totalorder %s19, 1
    %p98 = por %p96, %p97
    %p100 = scmp.ne.s32.totalorder %s85, %s99
    %p101 = scmp.eq.s32.totalorder %s19, 0
    %p102 = por %p100, %p101
    %s104 = sadd.s32 %s103, 1
    %p107 = scmp.eq.s32.totalorder %s13, 1
    %p108 = scmp.ne.s32.totalorder %s103, %s105
    %p109 = scmp.eq.s32.totalorder %s13, 0
    %p110 = por %p108, %p109
    %p111 = scmp.ne.s32.totalorder %s103, %s105
    %p112 = scmp.eq.s32.totalorder %s18, 1
    %p113 = por %p111, %p112
    %p114 = scmp.ne.s32.totalorder %s105, %s106
    %p115 = scmp.eq.s32.totalorder %s18, 0
    %p116 = por %p114, %p115
    %p117 = scmp.ne.s32.totalorder %s105, %s106
    %p118 = scmp.eq.s32.totalorder %s19, 1
    %p119 = por %p117, %p118
    %p121 = scmp.ne.s32.totalorder %s106, %s120
    %p122 = scmp.eq.s32.totalorder %s19, 0
    %p123 = por %p121, %p122
    %s124 = ssub.s32 %s20, %s32
    %s125 = ssub.s32 %s21, %s28
    %s126 = sor.u32 %s124, %s125
    %p127 = scmp.eq.s32.totalorder %s126, 0
    %s129 = sadd.s32 %s128, 1
    %s130 = scalar_select %p127, %s128, %s129
    %p133 = pneg %p127
    %p134 = scmp.eq.s32.totalorder %s13, 1
    %p135 = por %p133, %p134
    %p136 = scmp.ne.s32.totalorder %s128, %s131
    %p137 = scmp.eq.s32.totalorder %s13, 0
    %p138 = por %p136, %p137
    %p139 = scmp.ne.s32.totalorder %s128, %s131
    %p140 = scmp.eq.s32.totalorder %s18, 1
    %p141 = por %p139, %p140
    %p142 = scmp.ne.s32.totalorder %s131, %s132
    %p143 = scmp.eq.s32.totalorder %s18, 0
    %p144 = por %p142, %p143
    %p145 = scmp.ne.s32.totalorder %s131, %s132
    %p146 = scmp.eq.s32.totalorder %s19, 1
    %p147 = por %p145, %p146
    %p149 = scmp.ne.s32.totalorder %s132, %s148
    %p150 = scmp.eq.s32.totalorder %s19, 0
    %p151 = por %p149, %p150
    %s152 = ssub.s32 %s20, %s32
    %s153 = ssub.s32 %s21, %s28
    %s154 = sor.u32 %s152, %s153
    %p155 = scmp.eq.s32.totalorder %s154, 0
    %s157 = sadd.s32 %s156, 1
    %s158 = scalar_select %p155, %s156, %s157
    %p161 = pneg %p155
    %p162 = scmp.eq.s32.totalorder %s13, 1
    %p163 = por %p161, %p162
    %p164 = scmp.ne.s32.totalorder %s156, %s159
    %p165 = scmp.eq.s32.totalorder %s13, 0
    %p166 = por %p164, %p165
    %p167 = scmp.ne.s32.totalorder %s156, %s159
    %p168 = scmp.eq.s32.totalorder %s18, 1
    %p169 = por %p167, %p168
    %p170 = scmp.ne.s32.totalorder %s159, %s160
    %p171 = scmp.eq.s32.totalorder %s18, 0
    %p172 = por %p170, %p171
    %p173 = scmp.ne.s32.totalorder %s159, %s160
    %p174 = scmp.eq.s32.totalorder %s19, 1
    %p175 = por %p173, %p174
    %p177 = scmp.ne.s32.totalorder %s160, %s176
    %p178 = scmp.eq.s32.totalorder %s19, 0
    %p179 = por %p177, %p178
    %s180 = ssub.s32 %s20, %s32
    %s181 = ssub.s32 %s21, %s28
    %s182 = sor.u32 %s180, %s181
    %p183 = scmp.eq.s32.totalorder %s182, 0
    %s185 = sadd.s32 %s184, 1
    %s186 = scalar_select %p183, %s184, %s185
    %p189 = pneg %p183
    %p190 = scmp.eq.s32.totalorder %s13, 1
    %p191 = por %p189, %p190
    %p192 = scmp.ne.s32.totalorder %s184, %s187
    %p193 = scmp.eq.s32.totalorder %s13, 0
    %p194 = por %p192, %p193
    %p195 = scmp.ne.s32.totalorder %s184, %s187
    %p196 = scmp.eq.s32.totalorder %s18, 1
    %p197 = por %p195, %p196
    %p198 = scmp.ne.s32.totalorder %s187, %s188
    %p199 = scmp.eq.s32.totalorder %s18, 0
    %p200 = por %p198, %p199
    %p201 = scmp.ne.s32.totalorder %s187, %s188
    %p202 = scmp.eq.s32.totalorder %s19, 1
    %p203 = por %p201, %p202
    %p205 = scmp.ne.s32.totalorder %s188, %s204
    %p206 = scmp.eq.s32.totalorder %s19, 0
    %p207 = por %p205, %p206
    %p208 = scmp.le.s32.totalorder 1, %s13
    %p209 = scmp.lt.s32.totalorder %s13, 3
    %p210 = pnand %p208, %p209
    %p211 = pneg %p210
    // Predicated region
    $region9: #{bioformer_block.7} parent=5 // pred_check
      _
    $region10: #{bioformer_block.7} parent=5 // pred_check_branch
      %213 = sbr.rel (%p210) target = $region12
    $region11: #{bioformer_block.7} parent=5 // pred_region
      %s214 = ssub.s32 %s13, 1
      // Predicated region
      $region13: #{bioformer_block.7} parent=11 // pred_check
        %p215 = pneg %p74
      $region14: #{bioformer_block.7} parent=11 // pred_check_branch
        %217 = sbr.rel (%p215) target = $region16
      $region15: #{bioformer_block.7} parent=11 // pred_region
        _
      $region16: #{bioformer_block.7} parent=11 // pred_fallthru
        _
      // Predicated region
      $region17: #{bioformer_block.7} parent=11 // pred_check
        %p218 = pneg %p95
      $region18: #{bioformer_block.7} parent=11 // pred_check_branch
        %220 = sbr.rel (%p218) target = $region20
      $region19: #{bioformer_block.7} parent=11 // pred_region
        _
      $region20: #{bioformer_block.7} parent=11 // pred_fallthru
        _
      // Predicated region
      $region21: #{bioformer_block.7} parent=11 // pred_check
        %p221 = pneg %p116
      $region22: #{bioformer_block.7} parent=11 // pred_check_branch
        %223 = sbr.rel (%p221) target = $region24
      $region23: #{bioformer_block.7} parent=11 // pred_region
        _
      $region24: #{bioformer_block.7} parent=11 // pred_fallthru
        _
    $region12: #{bioformer_block.7} parent=5 // pred_fallthru
      _
    %p224 = scmp.lt.s32.totalorder %s13, 2
    // Predicated region
    $region25: #{bioformer_block.7} parent=5 // pred_check
      %p225 = pneg %p224
    $region26: #{bioformer_block.7} parent=5 // pred_check_branch
      %227 = sbr.rel (%p225) target = $region28
    $region27: #{bioformer_block.7} parent=5 // pred_region
      // Predicated region
      $region29: #{bioformer_block.7} parent=27 // pred_check
        %p228 = pneg %p47
      $region30: #{bioformer_block.7} parent=27 // pred_check_branch
        %230 = sbr.rel (%p228) target = $region32
      $region31: #{bioformer_block.7} parent=27 // pred_region
        %p231 = scmp.lt.s32.totalorder %s20, 1
        %s232 = scalar_select %p231, %s20, 1
        %p233 = scmp.lt.s32.totalorder %s21, 0
        %s234 = scalar_select %p233, %s21, 0
        %s235 = sadd.s32 %s234, %s232
        %s236 = smul.addr %s235, 8
        %s237 = scalar_lea.vmem %s0, %s236
      $region32: #{bioformer_block.7} parent=27 // pred_fallthru
        _
    $region28: #{bioformer_block.7} parent=5 // pred_fallthru
      _
    %p238 = scmp.le.s32.totalorder 1, %s13
    %p239 = scmp.lt.s32.totalorder %s13, 3
    %p240 = pnand %p238, %p239
    %p241 = pneg %p240
    // Predicated region
    $region33: #{bioformer_block.7} parent=5 // pred_check
      _
    $region34: #{bioformer_block.7} parent=5 // pred_check_branch
      %243 = sbr.rel (%p240) target = $region36
    $region35: #{bioformer_block.7} parent=5 // pred_region
      %s244 = ssub.s32 %s13, 1
      %p245 = scmp.lt.s32.totalorder %s22, 1
      %s246 = scalar_select %p245, %s22, 1
      %p247 = scmp.lt.s32.totalorder %s23, 0
      %s248 = scalar_select %p247, %s23, 0
      %s249 = sadd.s32 %s248, %s246
      %s250 = smul.addr %s249, 8
      %s251 = scalar_lea.vmem %s0, %s250
      %p252 = pneg %p53
      %p253 = pneg %p50
      %p254 = pneg %p74
      %p255 = pneg %p71
      %p256 = pneg %p95
      %p257 = pneg %p92
      %p258 = pneg %p116
      %p259 = pneg %p113
      %p260 = pneg %p144
      %p261 = pneg %p141
      %p262 = scmp.lt.s32.totalorder %s22, 1
      %s263 = scalar_select %p262, %s22, 1
      %p264 = scmp.lt.s32.totalorder %s23, 0
      %s265 = scalar_select %p264, %s23, 0
      %s266 = smul.addr %s263, 4
      %s267 = sadd.s32 %s265, %s266
      %s268 = smul.addr %s267, 8
      %s269 = scalar_lea.vmem %s4, %s268
      %p270 = pneg %p172
      %p271 = pneg %p169
      %p272 = scmp.lt.s32.totalorder %s22, 1
      %s273 = scalar_select %p272, %s22, 1
      %p274 = scmp.lt.s32.totalorder %s23, 0
      %s275 = scalar_select %p274, %s23, 0
      %s276 = smul.addr %s273, 4
      %s277 = sadd.s32 %s275, %s276
      %s278 = smul.addr %s277, 8
      %s279 = scalar_lea.vmem %s5, %s278
      %p280 = pneg %p200
      %p281 = pneg %p197
      %p282 = scmp.lt.s32.totalorder %s22, 1
      %s283 = scalar_select %p282, %s22, 1
      %p284 = scmp.lt.s32.totalorder %s23, 0
      %s285 = scalar_select %p284, %s23, 0
      %s286 = smul.addr %s283, 4
      %s287 = sadd.s32 %s285, %s286
      %s288 = smul.addr %s287, 8
      %s289 = scalar_lea.vmem %s6, %s288
      %p290 = scmp.lt.s32.totalorder %s22, 1
      %s291 = scalar_select %p290, %s22, 1
      %p292 = scmp.lt.s32.totalorder %s23, 0
      %s293 = scalar_select %p292, %s23, 0
      %s294 = sadd.s32 %s293, %s291
      %s295 = smul.addr %s294, 8
      %s296 = scalar_lea.vmem %s0, %s295
      %p297 = scmp.lt.s32.totalorder %s22, 1
      %s298 = scalar_select %p297, %s22, 1
      %p299 = scmp.lt.s32.totalorder %s23, 0
      %s300 = scalar_select %p299, %s23, 0
      %s301 = smul.addr %s298, 4
      %s302 = sadd.s32 %s300, %s301
      %s303 = smul.addr %s302, 8
      %s304 = scalar_lea.vmem %s4, %s303
      %p305 = scmp.lt.s32.totalorder %s22, 1
      %s306 = scalar_select %p305, %s22, 1
      %p307 = scmp.lt.s32.totalorder %s23, 0
      %s308 = scalar_select %p307, %s23, 0
      %s309 = smul.addr %s306, 4
      %s310 = sadd.s32 %s308, %s309
      %s311 = smul.addr %s310, 8
      %s312 = scalar_lea.vmem %s5, %s311
      %p313 = scmp.lt.s32.totalorder %s22, 1
      %s314 = scalar_select %p313, %s22, 1
      %p315 = scmp.lt.s32.totalorder %s23, 0
      %s316 = scalar_select %p315, %s23, 0
      %s317 = smul.addr %s314, 4
      %s318 = sadd.s32 %s316, %s317
      %s319 = smul.addr %s318, 8
      %s320 = scalar_lea.vmem %s6, %s319
      %v321 = vld [vmem:[%s296] sm:$0xff]
      %v322 = vld [vmem:[%s1] sm:$0x1]
      %v323 = vld [vmem:[%s2] sm:$0x1]
      %vm324 = vcmask 261120
      %v325 = vsel %vm324, %v321, 0.0
      %326 = vadd.xlane.f32.xlu0 %v325
      %v327 = vpop.xlane.xlu0 %326
      %v328 = vrcp.pop 32.0
      %v329 = vmul.f32 32.0, %v328
      %v330 = vsub.f32 1.0, %v329
      %v331 = vmul.f32 %v328, %v330
      %v332 = vadd.f32 %v328, %v331
      %vm333 = vweird.f32 %v328
      %v334 = vsel %vm333, %v328, %v332
      %v335 = vmul.f32 %v327, %v334
      %v336 = vsub.f32 %v321, %v335
      %v337 = vmul.f32 %v336, %v336
      %v338 = vsel %vm324, %v337, 0.0
      %339 = vadd.xlane.f32.xlu0 %v338
      %v340 = vpop.xlane.xlu0 %339
      %v341 = vmul.f32 %v340, %v334
      %v342 = vadd.f32 %v341, 1e-05
      %v343 = vrsqrt.pop %v342
      %v344 = vmul.f32 %v343, %v342
      %v345 = vmul.f32 %v344, %v343
      %v346 = vmul.f32 0.5, %v345
      %v347 = vsub.f32 1.5, %v346
      %v348 = vmul.f32 %v343, %v347
      %vm349 = vweird.f32 %v342
      %vm350 = vweird.f32 %v343
      %vm351 = vmor %vm349, %vm350
      %v352 = vsel %vm351, %v343, %v348
      %v353 = vmul.f32 %v336, %v352
      %v355 = vperm.slane %v322, 0
      %v357 = vmul.f32 %v353, %v355
      %v359 = vperm.slane %v323, 0
      %v361 = vadd.f32 %v357, %v359
      %v362 = vld [vmem:[%s3] sm:$0xff]
      %v363 = vld [vmem:[%s3 + $0x8] sm:$0xff]
      %v364 = vld [vmem:[%s3 + $0x10] sm:$0xff]
      %v365 = vld [vmem:[%s3 + $0x18] sm:$0xff]
      %v367 = vsel %vm324, %v361, 0
      %369 = vmatpush.msra.mxu0 0.0
      %370 = vmatpush.msra.mxu0 0.0
      %371 = vmatpush.msra.mxu0 0.0
      %372 = vmatpush.msra.mxu0 0.0
      %373 = vmatpush.msra.mxu0 0.0
      %374 = vmatpush.msra.mxu0 0.0
      %375 = vmatpush.msra.mxu0 0.0
      %376 = vmatpush.msra.mxu0 0.0
      %377 = vmatpush.msra.mxu0 0.0
      %378 = vmatpush.msra.mxu0 0.0
      %379 = vmatpush.msra.mxu0 0.0
      %380 = vmatpush.msra.mxu0 0.0
      %381 = vmatpush.msra.mxu0 %v365
      %382 = vmatpush.msra.mxu0 %v364
      %383 = vmatpush.msra.mxu0 %v363
      %384 = vmatpush.msra.mxu0 %v362
      %385 = vmatmul.f32.gmra.mxu0 %v367
      %v386 = vpop.f32.mrf.mxu0
      %v387 = vadd.f32 0.0, %v386
      %388 = vdwg.mxu0
      %vm389 = vcmask 31744
      %390 = vst.msk [vmem:[%s304] sm:$0xff] %vm389, %v387
      %392 = vrot.lane.b32.xlu0 %v387, 112
      %v393 = vpop.permute.xlu0 %392
      %395 = vst.msk [vmem:[%s312] sm:$0xff] %vm389, %v393
      %396 = vrot.lane.b32.xlu0 %v387, 96
      %v397 = vpop.permute.xlu0 %396
      %399 = vst.msk [vmem:[%s320] sm:$0xff] %vm389, %v397
      %400 = vrot.lane.b32.xlu0 %v387, 124
      %v401 = vpop.permute.xlu0 %400
      %s403 = scalar_lea.vmem %s304, 8
      %404 = vst.msk [vmem:[%s403] sm:$0xff] %vm389, %v401
      %405 = vrot.lane.b32.xlu0 %v387, 108
      %v406 = vpop.permute.xlu0 %405
      %s408 = scalar_lea.vmem %s312, 8
      %409 = vst.msk [vmem:[%s408] sm:$0xff] %vm389, %v406
      %410 = vrot.lane.b32.xlu0 %v387, 92
      %v411 = vpop.permute.xlu0 %410
      %s413 = scalar_lea.vmem %s320, 8
      %414 = vst.msk [vmem:[%s413] sm:$0xff] %vm389, %v411
      %415 = vrot.lane.b32.xlu0 %v387, 120
      %v416 = vpop.permute.xlu0 %415
      %s418 = scalar_lea.vmem %s304, 16
      %419 = vst.msk [vmem:[%s418] sm:$0xff] %vm389, %v416
      %420 = vrot.lane.b32.xlu0 %v387, 104
      %v421 = vpop.permute.xlu0 %420
      %s423 = scalar_lea.vmem %s312, 16
      %424 = vst.msk [vmem:[%s423] sm:$0xff] %vm389, %v421
      %425 = vrot.lane.b32.xlu0 %v387, 88
      %v426 = vpop.permute.xlu0 %425
      %s428 = scalar_lea.vmem %s320, 16
      %429 = vst.msk [vmem:[%s428] sm:$0xff] %vm389, %v426
      %430 = vrot.lane.b32.xlu0 %v387, 116
      %v431 = vpop.permute.xlu0 %430
      %s433 = scalar_lea.vmem %s304, 24
      %434 = vst.msk [vmem:[%s433] sm:$0xff] %vm389, %v431
      %435 = vrot.lane.b32.xlu0 %v387, 100
      %v436 = vpop.permute.xlu0 %435
      %s438 = scalar_lea.vmem %s312, 24
      %439 = vst.msk [vmem:[%s438] sm:$0xff] %vm389, %v436
      %440 = vrot.lane.b32.xlu0 %v387, 84
      %v441 = vpop.permute.xlu0 %440
      %s443 = scalar_lea.vmem %s320, 24
      %444 = vst.msk [vmem:[%s443] sm:$0xff] %vm389, %v441
      %p445 = scmp.lt.s32.totalorder %s22, 1
      %s446 = scalar_select %p445, %s22, 1
      %p447 = scmp.lt.s32.totalorder %s23, 0
      %s448 = scalar_select %p447, %s23, 0
      %s449 = smul.addr %s446, 4
      %s450 = sadd.s32 %s448, %s449
      %s451 = smul.addr %s450, 8
      %s452 = scalar_lea.vmem %s4, %s451
      %p453 = scmp.lt.s32.totalorder %s22, 1
      %s454 = scalar_select %p453, %s22, 1
      %p455 = scmp.lt.s32.totalorder %s23, 0
      %s456 = scalar_select %p455, %s23, 0
      %s457 = smul.addr %s454, 4
      %s458 = sadd.s32 %s456, %s457
      %s459 = smul.addr %s458, 8
      %s460 = scalar_lea.vmem %s5, %s459
      %p461 = scmp.lt.s32.totalorder %s22, 1
      %s462 = scalar_select %p461, %s22, 1
      %p463 = scmp.lt.s32.totalorder %s23, 0
      %s464 = scalar_select %p463, %s23, 0
      %s465 = smul.addr %s462, 4
      %s466 = sadd.s32 %s464, %s465
      %s467 = smul.addr %s466, 8
      %s468 = scalar_lea.vmem %s6, %s467
      // Predicated region
      $region37: #{bioformer_block.7} parent=35 // pred_check
        %p469 = pneg %p141
      $region38: #{bioformer_block.7} parent=35 // pred_check_branch
        %471 = sbr.rel (%p469) target = $region40
      $region39: #{bioformer_block.7} parent=35 // pred_region
        _
      $region40: #{bioformer_block.7} parent=35 // pred_fallthru
        _
      // Predicated region
      $region41: #{bioformer_block.7} parent=35 // pred_check
        %p472 = pneg %p169
      $region42: #{bioformer_block.7} parent=35 // pred_check_branch
        %474 = sbr.rel (%p472) target = $region44
      $region43: #{bioformer_block.7} parent=35 // pred_region
        _
      $region44: #{bioformer_block.7} parent=35 // pred_fallthru
        _
      // Predicated region
      $region45: #{bioformer_block.7} parent=35 // pred_check
        %p475 = pneg %p197
      $region46: #{bioformer_block.7} parent=35 // pred_check_branch
        %477 = sbr.rel (%p475) target = $region48
      $region47: #{bioformer_block.7} parent=35 // pred_region
        _
      $region48: #{bioformer_block.7} parent=35 // pred_fallthru
        _
    $region36: #{bioformer_block.7} parent=5 // pred_fallthru
      _
    %p478 = scmp.le.s32.totalorder 2, %s13
    // Predicated region
    $region49: #{bioformer_block.7} parent=5 // pred_check
      %p479 = pneg %p478
    $region50: #{bioformer_block.7} parent=5 // pred_check_branch
      %481 = sbr.rel (%p479) target = $region52
    $region51: #{bioformer_block.7} parent=5 // pred_region
      %s482 = ssub.s32 %s13, 2
      // Predicated region
      $region53: #{bioformer_block.7} parent=51 // pred_check
        %p483 = pneg %p147
      $region54: #{bioformer_block.7} parent=51 // pred_check_branch
        %485 = sbr.rel (%p483) target = $region56
      $region55: #{bioformer_block.7} parent=51 // pred_region
        %p486 = scmp.lt.s32.totalorder %s24, 1
        %s487 = scalar_select %p486, %s24, 1
        %p488 = scmp.lt.s32.totalorder %s25, 0
        %s489 = scalar_select %p488, %s25, 0
        %s490 = smul.addr %s487, 4
        %s491 = sadd.s32 %s489, %s490
        %s492 = smul.addr %s491, 8
        %s493 = scalar_lea.vmem %s4, %s492
      $region56: #{bioformer_block.7} parent=51 // pred_fallthru
        _
      // Predicated region
      $region57: #{bioformer_block.7} parent=51 // pred_check
        %p494 = pneg %p175
      $region58: #{bioformer_block.7} parent=51 // pred_check_branch
        %496 = sbr.rel (%p494) target = $region60
      $region59: #{bioformer_block.7} parent=51 // pred_region
        %p497 = scmp.lt.s32.totalorder %s24, 1
        %s498 = scalar_select %p497, %s24, 1
        %p499 = scmp.lt.s32.totalorder %s25, 0
        %s500 = scalar_select %p499, %s25, 0
        %s501 = smul.addr %s498, 4
        %s502 = sadd.s32 %s500, %s501
        %s503 = smul.addr %s502, 8
        %s504 = scalar_lea.vmem %s5, %s503
      $region60: #{bioformer_block.7} parent=51 // pred_fallthru
        _
      // Predicated region
      $region61: #{bioformer_block.7} parent=51 // pred_check
        %p505 = pneg %p203
      $region62: #{bioformer_block.7} parent=51 // pred_check_branch
        %507 = sbr.rel (%p505) target = $region64
      $region63: #{bioformer_block.7} parent=51 // pred_region
        %p508 = scmp.lt.s32.totalorder %s24, 1
        %s509 = scalar_select %p508, %s24, 1
        %p510 = scmp.lt.s32.totalorder %s25, 0
        %s511 = scalar_select %p510, %s25, 0
        %s512 = smul.addr %s509, 4
        %s513 = sadd.s32 %s511, %s512
        %s514 = smul.addr %s513, 8
        %s515 = scalar_lea.vmem %s6, %s514
      $region64: #{bioformer_block.7} parent=51 // pred_fallthru
        _
    $region52: #{bioformer_block.7} parent=5 // pred_fallthru
      _
  $region6: #{bioformer_block.7} parent=0 // loop_footer
    %s17 = sadd.s32 1, %s13
  $region7: #{bioformer_block.7} parent=0 // loop_footer_branch
    %12 = sbr.rel target = $region3
  $region8: #{bioformer_block.7} parent=0 // loop_exit
    _

// kernel: bioformer_block.9
$region0: #{bioformer_block.9}
  #allocation0 [shape = 'u32[]', space=smem, size = 0x4, offset = 0x4, fixed_abs, tag = 'smem constant byte address 0x4 - core index']
  #allocation1 [shape = 'u32[72,128]{1,0:T(1,128)}', space=vmem, size = 0x9000, scoped, tag = 'internal scratch']
  %s0 = inlined_call_operand.vmem [shape: f32[2,8,32], index: 0, kind: input, shape index: {}]
  %s1 = inlined_call_operand.vmem [shape: f32[1,32], index: 1, kind: input, shape index: {}]
  %s2 = inlined_call_operand.vmem [shape: f32[1,32], index: 2, kind: input, shape index: {}]
  %s3 = inlined_call_operand.vmem [shape: f32[32,128], index: 3, kind: input, shape index: {}]
  %s4 = inlined_call_operand.vmem [shape: f32[1,128], index: 4, kind: input, shape index: {}]
  %s5 = inlined_call_operand.vmem [shape: f32[128,32], index: 5, kind: input, shape index: {}]
  %s6 = inlined_call_operand.vmem [shape: f32[1,32], index: 6, kind: input, shape index: {}]
  %s7 = inlined_call_operand.vmem [shape: f32[2,8,32], index: 7, kind: output, shape index: {}]
  %s8 = sld [smem:[#allocation0]]
  $region61: #{bioformer_block.9} parent=0
    _
  %s10 = ssub.s32 1, %s8
  %s11 = scalar_select 0, %s10, %s8
  loop: start=0, step=1, limit=4
  $region2: #{bioformer_block.9} parent=0 // loop_pre_header
    _
  $region3: #{bioformer_block.9} parent=0 // loop_header
    %s13 = sphi 0, %s17
    %p14 = scmp.ge.s32.totalorder %s13, 4
    %s20 = sphi 0, %s32
    %s21 = sphi 0, %s28
    %s22 = sphi 0, %s20
    %s23 = sphi 0, %s21
    %s24 = sphi 0, %s22
    %s25 = sphi 0, %s23
    %s37 = sphi 0, %s39
    %s40 = sphi 0, %s37
    %s41 = sphi 0, %s40
    %s57 = sphi 0, %s41
    %s61 = sphi 0, %s61
    %s63 = sphi 0, %s61
    %s64 = sphi 0, %s63
    %s78 = sphi 0, %s64
    %s82 = sphi 0, %s82
    %s84 = sphi 0, %s82
    %s85 = sphi 0, %s84
    %s99 = sphi 0, %s85
    %s103 = sphi 0, %s103
    %s105 = sphi 0, %s103
    %s106 = sphi 0, %s105
    %s120 = sphi 0, %s106
    %s124 = sphi 0, %s124
    %s126 = sphi 0, %s124
    %s127 = sphi 0, %s126
    %s141 = sphi 0, %s127
    %s145 = sphi 0, %s145
    %s147 = sphi 0, %s145
    %s148 = sphi 0, %s147
    %s162 = sphi 0, %s148
    %s166 = sphi 0, %s166
    %s168 = sphi 0, %s166
    %s169 = sphi 0, %s168
    %s183 = sphi 0, %s169
    %s191 = sphi 0, %s193
    %s194 = sphi 0, %s191
    %s195 = sphi 0, %s194
    %s211 = sphi 0, %s195
  $region4: #{bioformer_block.9} parent=0 // loop_header_branch
    %16 = sbr.rel (%p14) target = $region8
  $region5: #{bioformer_block.9} parent=0 // loop_body
    %s18 = ssub.s32 %s13, 1
    %s19 = ssub.s32 %s13, 2
    %s26 = sadd.s32 1, %s21
    %p27 = scmp.ge.s32.totalorder %s26, 1
    %s28 = scalar_select %p27, 0, %s26
    %s29 = sadd.s32 1, %s20
    %s30 = scalar_select %p27, %s29, %s20
    %p31 = scmp.ge.s32.totalorder %s30, 2
    %s32 = scalar_select %p31, 0, %s30
    %s33 = ssub.s32 %s20, %s32
    %s34 = ssub.s32 %s21, %s28
    %s35 = sor.u32 %s33, %s34
    %p36 = scmp.eq.s32.totalorder %s35, 0
    %s38 = sadd.s32 %s37, 1
    %s39 = scalar_select %p36, %s37, %s38
    %p42 = pneg %p36
    %p43 = scmp.eq.s32.totalorder %s13, 1
    %p44 = por %p42, %p43
    %p45 = scmp.ne.s32.totalorder %s37, %s40
    %p46 = scmp.eq.s32.totalorder %s13, 0
    %p47 = por %p45, %p46
    %p48 = scmp.ne.s32.totalorder %s37, %s40
    %p49 = scmp.eq.s32.totalorder %s18, 1
    %p50 = por %p48, %p49
    %p51 = scmp.ne.s32.totalorder %s40, %s41
    %p52 = scmp.eq.s32.totalorder %s18, 0
    %p53 = por %p51, %p52
    %p54 = scmp.ne.s32.totalorder %s40, %s41
    %p55 = scmp.eq.s32.totalorder %s19, 1
    %p56 = por %p54, %p55
    %p58 = scmp.ne.s32.totalorder %s41, %s57
    %p59 = scmp.eq.s32.totalorder %s19, 0
    %p60 = por %p58, %p59
    %s62 = sadd.s32 %s61, 1
    %p65 = scmp.eq.s32.totalorder %s13, 1
    %p66 = scmp.ne.s32.totalorder %s61, %s63
    %p67 = scmp.eq.s32.totalorder %s13, 0
    %p68 = por %p66, %p67
    %p69 = scmp.ne.s32.totalorder %s61, %s63
    %p70 = scmp.eq.s32.totalorder %s18, 1
    %p71 = por %p69, %p70
    %p72 = scmp.ne.s32.totalorder %s63, %s64
    %p73 = scmp.eq.s32.totalorder %s18, 0
    %p74 = por %p72, %p73
    %p75 = scmp.ne.s32.totalorder %s63, %s64
    %p76 = scmp.eq.s32.totalorder %s19, 1
    %p77 = por %p75, %p76
    %p79 = scmp.ne.s32.totalorder %s64, %s78
    %p80 = scmp.eq.s32.totalorder %s19, 0
    %p81 = por %p79, %p80
    %s83 = sadd.s32 %s82, 1
    %p86 = scmp.eq.s32.totalorder %s13, 1
    %p87 = scmp.ne.s32.totalorder %s82, %s84
    %p88 = scmp.eq.s32.totalorder %s13, 0
    %p89 = por %p87, %p88
    %p90 = scmp.ne.s32.totalorder %s82, %s84
    %p91 = scmp.eq.s32.totalorder %s18, 1
    %p92 = por %p90, %p91
    %p93 = scmp.ne.s32.totalorder %s84, %s85
    %p94 = scmp.eq.s32.totalorder %s18, 0
    %p95 = por %p93, %p94
    %p96 = scmp.ne.s32.totalorder %s84, %s85
    %p97 = scmp.eq.s32.totalorder %s19, 1
    %p98 = por %p96, %p97
    %p100 = scmp.ne.s32.totalorder %s85, %s99
    %p101 = scmp.eq.s32.totalorder %s19, 0
    %p102 = por %p100, %p101
    %s104 = sadd.s32 %s103, 1
    %p107 = scmp.eq.s32.totalorder %s13, 1
    %p108 = scmp.ne.s32.totalorder %s103, %s105
    %p109 = scmp.eq.s32.totalorder %s13, 0
    %p110 = por %p108, %p109
    %p111 = scmp.ne.s32.totalorder %s103, %s105
    %p112 = scmp.eq.s32.totalorder %s18, 1
    %p113 = por %p111, %p112
    %p114 = scmp.ne.s32.totalorder %s105, %s106
    %p115 = scmp.eq.s32.totalorder %s18, 0
    %p116 = por %p114, %p115
    %p117 = scmp.ne.s32.totalorder %s105, %s106
    %p118 = scmp.eq.s32.totalorder %s19, 1
    %p119 = por %p117, %p118
    %p121 = scmp.ne.s32.totalorder %s106, %s120
    %p122 = scmp.eq.s32.totalorder %s19, 0
    %p123 = por %p121, %p122
    %s125 = sadd.s32 %s124, 1
    %p128 = scmp.eq.s32.totalorder %s13, 1
    %p129 = scmp.ne.s32.totalorder %s124, %s126
    %p130 = scmp.eq.s32.totalorder %s13, 0
    %p131 = por %p129, %p130
    %p132 = scmp.ne.s32.totalorder %s124, %s126
    %p133 = scmp.eq.s32.totalorder %s18, 1
    %p134 = por %p132, %p133
    %p135 = scmp.ne.s32.totalorder %s126, %s127
    %p136 = scmp.eq.s32.totalorder %s18, 0
    %p137 = por %p135, %p136
    %p138 = scmp.ne.s32.totalorder %s126, %s127
    %p139 = scmp.eq.s32.totalorder %s19, 1
    %p140 = por %p138, %p139
    %p142 = scmp.ne.s32.totalorder %s127, %s141
    %p143 = scmp.eq.s32.totalorder %s19, 0
    %p144 = por %p142, %p143
    %s146 = sadd.s32 %s145, 1
    %p149 = scmp.eq.s32.totalorder %s13, 1
    %p150 = scmp.ne.s32.totalorder %s145, %s147
    %p151 = scmp.eq.s32.totalorder %s13, 0
    %p152 = por %p150, %p151
    %p153 = scmp.ne.s32.totalorder %s145, %s147
    %p154 = scmp.eq.s32.totalorder %s18, 1
    %p155 = por %p153, %p154
    %p156 = scmp.ne.s32.totalorder %s147, %s148
    %p157 = scmp.eq.s32.totalorder %s18, 0
    %p158 = por %p156, %p157
    %p159 = scmp.ne.s32.totalorder %s147, %s148
    %p160 = scmp.eq.s32.totalorder %s19, 1
    %p161 = por %p159, %p160
    %p163 = scmp.ne.s32.totalorder %s148, %s162
    %p164 = scmp.eq.s32.totalorder %s19, 0
    %p165 = por %p163, %p164
    %s167 = sadd.s32 %s166, 1
    %p170 = scmp.eq.s32.totalorder %s13, 1
    %p171 = scmp.ne.s32.totalorder %s166, %s168
    %p172 = scmp.eq.s32.totalorder %s13, 0
    %p173 = por %p171, %p172
    %p174 = scmp.ne.s32.totalorder %s166, %s168
    %p175 = scmp.eq.s32.totalorder %s18, 1
    %p176 = por %p174, %p175
    %p177 = scmp.ne.s32.totalorder %s168, %s169
    %p178 = scmp.eq.s32.totalorder %s18, 0
    %p179 = por %p177, %p178
    %p180 = scmp.ne.s32.totalorder %s168, %s169
    %p181 = scmp.eq.s32.totalorder %s19, 1
    %p182 = por %p180, %p181
    %p184 = scmp.ne.s32.totalorder %s169, %s183
    %p185 = scmp.eq.s32.totalorder %s19, 0
    %p186 = por %p184, %p185
    %s187 = ssub.s32 %s20, %s32
    %s188 = ssub.s32 %s21, %s28
    %s189 = sor.u32 %s187, %s188
    %p190 = scmp.eq.s32.totalorder %s189, 0
    %s192 = sadd.s32 %s191, 1
    %s193 = scalar_select %p190, %s191, %s192
    %p196 = pneg %p190
    %p197 = scmp.eq.s32.totalorder %s13, 1
    %p198 = por %p196, %p197
    %p199 = scmp.ne.s32.totalorder %s191, %s194
    %p200 = scmp.eq.s32.totalorder %s13, 0
    %p201 = por %p199, %p200
    %p202 = scmp.ne.s32.totalorder %s191, %s194
    %p203 = scmp.eq.s32.totalorder %s18, 1
    %p204 = por %p202, %p203
    %p205 = scmp.ne.s32.totalorder %s194, %s195
    %p206 = scmp.eq.s32.totalorder %s18, 0
    %p207 = por %p205, %p206
    %p208 = scmp.ne.s32.totalorder %s194, %s195
    %p209 = scmp.eq.s32.totalorder %s19, 1
    %p210 = por %p208, %p209
    %p212 = scmp.ne.s32.totalorder %s195, %s211
    %p213 = scmp.eq.s32.totalorder %s19, 0
    %p214 = por %p212, %p213
    %p215 = scmp.le.s32.totalorder 1, %s13
    %p216 = scmp.lt.s32.totalorder %s13, 3
    %p217 = pnand %p215, %p216
    %p218 = pneg %p217
    // Predicated region
    $region9: #{bioformer_block.9} parent=5 // pred_check
      _
    $region10: #{bioformer_block.9} parent=5 // pred_check_branch
      %220 = sbr.rel (%p217) target = $region12
    $region11: #{bioformer_block.9} parent=5 // pred_region
      %s221 = ssub.s32 %s13, 1
      // Predicated region
      $region13: #{bioformer_block.9} parent=11 // pred_check
        %p222 = pneg %p74
      $region14: #{bioformer_block.9} parent=11 // pred_check_branch
        %224 = sbr.rel (%p222) target = $region16
      $region15: #{bioformer_block.9} parent=11 // pred_region
        _
      $region16: #{bioformer_block.9} parent=11 // pred_fallthru
        _
      // Predicated region
      $region17: #{bioformer_block.9} parent=11 // pred_check
        %p225 = pneg %p95
      $region18: #{bioformer_block.9} parent=11 // pred_check_branch
        %227 = sbr.rel (%p225) target = $region20
      $region19: #{bioformer_block.9} parent=11 // pred_region
        _
      $region20: #{bioformer_block.9} parent=11 // pred_fallthru
        _
      // Predicated region
      $region21: #{bioformer_block.9} parent=11 // pred_check
        %p228 = pneg %p116
      $region22: #{bioformer_block.9} parent=11 // pred_check_branch
        %230 = sbr.rel (%p228) target = $region24
      $region23: #{bioformer_block.9} parent=11 // pred_region
        _
      $region24: #{bioformer_block.9} parent=11 // pred_fallthru
        _
      // Predicated region
      $region25: #{bioformer_block.9} parent=11 // pred_check
        %p231 = pneg %p137
      $region26: #{bioformer_block.9} parent=11 // pred_check_branch
        %233 = sbr.rel (%p231) target = $region28
      $region27: #{bioformer_block.9} parent=11 // pred_region
        _
      $region28: #{bioformer_block.9} parent=11 // pred_fallthru
        _
      // Predicated region
      $region29: #{bioformer_block.9} parent=11 // pred_check
        %p234 = pneg %p158
      $region30: #{bioformer_block.9} parent=11 // pred_check_branch
        %236 = sbr.rel (%p234) target = $region32
      $region31: #{bioformer_block.9} parent=11 // pred_region
        _
      $region32: #{bioformer_block.9} parent=11 // pred_fallthru
        _
      // Predicated region
      $region33: #{bioformer_block.9} parent=11 // pred_check
        %p237 = pneg %p179
      $region34: #{bioformer_block.9} parent=11 // pred_check_branch
        %239 = sbr.rel (%p237) target = $region36
      $region35: #{bioformer_block.9} parent=11 // pred_region
        _
      $region36: #{bioformer_block.9} parent=11 // pred_fallthru
        _
    $region12: #{bioformer_block.9} parent=5 // pred_fallthru
      _
    %p240 = scmp.lt.s32.totalorder %s13, 2
    // Predicated region
    $region37: #{bioformer_block.9} parent=5 // pred_check
      %p241 = pneg %p240
    $region38: #{bioformer_block.9} parent=5 // pred_check_branch
      %243 = sbr.rel (%p241) target = $region40
    $region39: #{bioformer_block.9} parent=5 // pred_region
      // Predicated region
      $region41: #{bioformer_block.9} parent=39 // pred_check
        %p244 = pneg %p47
      $region42: #{bioformer_block.9} parent=39 // pred_check_branch
        %246 = sbr.rel (%p244) target = $region44
      $region43: #{bioformer_block.9} parent=39 // pred_region
        %p247 = scmp.lt.s32.totalorder %s20, 1
        %s248 = scalar_select %p247, %s20, 1
        %p249 = scmp.lt.s32.totalorder %s21, 0
        %s250 = scalar_select %p249, %s21, 0
        %s251 = sadd.s32 %s250, %s248
        %s252 = smul.addr %s251, 8
        %s253 = scalar_lea.vmem %s0, %s252
      $region44: #{bioformer_block.9} parent=39 // pred_fallthru
        _
    $region40: #{bioformer_block.9} parent=5 // pred_fallthru
      _
    %p254 = scmp.le.s32.totalorder 1, %s13
    %p255 = scmp.lt.s32.totalorder %s13, 3
    %p256 = pnand %p254, %p255
    %p257 = pneg %p256
    // Predicated region
    $region45: #{bioformer_block.9} parent=5 // pred_check
      _
    $region46: #{bioformer_block.9} parent=5 // pred_check_branch
      %259 = sbr.rel (%p256) target = $region48
    $region47: #{bioformer_block.9} parent=5 // pred_region
      %s260 = ssub.s32 %s13, 1
      %p261 = scmp.lt.s32.totalorder %s22, 1
      %s262 = scalar_select %p261, %s22, 1
      %p263 = scmp.lt.s32.totalorder %s23, 0
      %s264 = scalar_select %p263, %s23, 0
      %s265 = sadd.s32 %s264, %s262
      %s266 = smul.addr %s265, 8
      %s267 = scalar_lea.vmem %s0, %s266
      %p268 = pneg %p53
      %p269 = pneg %p50
      %p270 = pneg %p74
      %p271 = pneg %p71
      %p272 = pneg %p95
      %p273 = pneg %p92
      %p274 = pneg %p116
      %p275 = pneg %p113
      %p276 = pneg %p137
      %p277 = pneg %p134
      %p278 = pneg %p158
      %p279 = pneg %p155
      %p280 = pneg %p179
      %p281 = pneg %p176
      %p282 = pneg %p207
      %p283 = pneg %p204
      %p284 = scmp.lt.s32.totalorder %s22, 1
      %s285 = scalar_select %p284, %s22, 1
      %p286 = scmp.lt.s32.totalorder %s23, 0
      %s287 = scalar_select %p286, %s23, 0
      %s288 = sadd.s32 %s287, %s285
      %s289 = smul.addr %s288, 8
      %s290 = scalar_lea.vmem %s7, %s289
      %p291 = scmp.lt.s32.totalorder %s22, 1
      %s292 = scalar_select %p291, %s22, 1
      %p293 = scmp.lt.s32.totalorder %s23, 0
      %s294 = scalar_select %p293, %s23, 0
      %s295 = sadd.s32 %s294, %s292
      %s296 = smul.addr %s295, 8
      %s297 = scalar_lea.vmem %s0, %s296
      %p298 = scmp.lt.s32.totalorder %s22, 1
      %s299 = scalar_select %p298, %s22, 1
      %p300 = scmp.lt.s32.totalorder %s23, 0
      %s301 = scalar_select %p300, %s23, 0
      %s302 = sadd.s32 %s301, %s299
      %s303 = smul.addr %s302, 8
      %s304 = scalar_lea.vmem %s7, %s303
      %v305 = vld [vmem:[%s297] sm:$0xff]
      %v306 = vld [vmem:[%s1] sm:$0x1]
      %v307 = vld [vmem:[%s2] sm:$0x1]
      %vm308 = vcmask 261120
      %v309 = vsel %vm308, %v305, 0.0
      %310 = vadd.xlane.f32.xlu0 %v309
      %v311 = vpop.xlane.xlu0 %310
      %v312 = vrcp.pop 32.0
      %v313 = vmul.f32 32.0, %v312
      %v314 = vsub.f32 1.0, %v313
      %v315 = vmul.f32 %v312, %v314
      %v316 = vadd.f32 %v312, %v315
      %vm317 = vweird.f32 %v312
      %v318 = vsel %vm317, %v312, %v316
      %v319 = vmul.f32 %v311, %v318
      %v320 = vsub.f32 %v305, %v319
      %v321 = vmul.f32 %v320, %v320
      %v322 = vsel %vm308, %v321, 0.0
      %323 = vadd.xlane.f32.xlu0 %v322
      %v324 = vpop.xlane.xlu0 %323
      %v325 = vmul.f32 %v324, %v318
      %v326 = vadd.f32 %v325, 1e-05
      %v327 = vrsqrt.pop %v326
      %v328 = vmul.f32 %v327, %v326
      %v329 = vmul.f32 %v328, %v327
      %v330 = vmul.f32 0.5, %v329
      %v331 = vsub.f32 1.5, %v330
      %v332 = vmul.f32 %v327, %v331
      %vm333 = vweird.f32 %v326
      %vm334 = vweird.f32 %v327
      %vm335 = vmor %vm333, %vm334
      %v336 = vsel %vm335, %v327, %v332
      %v337 = vmul.f32 %v320, %v336
      %v339 = vperm.slane %v306, 0
      %v341 = vmul.f32 %v337, %v339
      %v343 = vperm.slane %v307, 0
      %v345 = vadd.f32 %v341, %v343
      %v346 = vld [vmem:[%s3] sm:$0xff]
      %v347 = vld [vmem:[%s3 + $0x8] sm:$0xff]
      %v348 = vld [vmem:[%s3 + $0x10] sm:$0xff]
      %v349 = vld [vmem:[%s3 + $0x18] sm:$0xff]
      %v350 = vld [vmem:[%s4] sm:$0x1]
      %v352 = vperm.slane %v350, 0
      %v355 = vsel %vm308, %v345, 0
      %357 = vmatpush.msra.mxu0 0.0
      %358 = vmatpush.msra.mxu0 0.0
      %359 = vmatpush.msra.mxu0 0.0
      %360 = vmatpush.msra.mxu0 0.0
      %361 = vmatpush.msra.mxu0 0.0
      %362 = vmatpush.msra.mxu0 0.0
      %363 = vmatpush.msra.mxu0 0.0
      %364 = vmatpush.msra.mxu0 0.0
      %365 = vmatpush.msra.mxu0 0.0
      %366 = vmatpush.msra.mxu0 0.0
      %367 = vmatpush.msra.mxu0 0.0
      %368 = vmatpush.msra.mxu0 0.0
      %369 = vmatpush.msra.mxu0 %v349
      %370 = vmatpush.msra.mxu0 %v348
      %371 = vmatpush.msra.mxu0 %v347
      %372 = vmatpush.msra.mxu0 %v346
      %373 = vmatmul.f32.gmra.mxu0 %v355
      %v374 = vpop.f32.mrf.mxu0
      %v375 = vadd.f32 %v352, %v374
      %376 = vdwg.mxu0
      %v377 = vmax.f32 %v375, 0.0
      %v378 = vld [vmem:[%s5] sm:$0xff]
      %v379 = vld [vmem:[%s5 + $0x8] sm:$0xff]
      %v380 = vld [vmem:[%s5 + $0x10] sm:$0xff]
      %v381 = vld [vmem:[%s5 + $0x18] sm:$0xff]
      %v382 = vld [vmem:[%s5 + $0x20] sm:$0xff]
      %v383 = vld [vmem:[%s5 + $0x28] sm:$0xff]
      %v384 = vld [vmem:[%s5 + $0x30] sm:$0xff]
      %v385 = vld [vmem:[%s5 + $0x38] sm:$0xff]
      %v386 = vld [vmem:[%s5 + $0x40] sm:$0xff]
      %v387 = vld [vmem:[%s5 + $0x48] sm:$0xff]
      %v388 = vld [vmem:[%s5 + $0x50] sm:$0xff]
      %v389 = vld [vmem:[%s5 + $0x58] sm:$0xff]
      %v390 = vld [vmem:[%s5 + $0x60] sm:$0xff]
      %v391 = vld [vmem:[%s5 + $0x68] sm:$0xff]
      %v392 = vld [vmem:[%s5 + $0x70] sm:$0xff]
      %v393 = vld [vmem:[%s5 + $0x78] sm:$0xff]
      %394 = vmatpush.msra.mxu0 %v393
      %395 = vmatpush.msra.mxu0 %v392
      %396 = vmatpush.msra.mxu0 %v391
      %397 = vmatpush.msra.mxu0 %v390
      %398 = vmatpush.msra.mxu0 %v389
      %399 = vmatpush.msra.mxu0 %v388
      %400 = vmatpush.msra.mxu0 %v387
      %401 = vmatpush.msra.mxu0 %v386
      %402 = vmatpush.msra.mxu0 %v385
      %403 = vmatpush.msra.mxu0 %v384
      %404 = vmatpush.msra.mxu0 %v383
      %405 = vmatpush.msra.mxu0 %v382
      %406 = vmatpush.msra.mxu0 %v381
      %407 = vmatpush.msra.mxu0 %v380
      %408 = vmatpush.msra.mxu0 %v379
      %409 = vmatpush.msra.mxu0 %v378
      %410 = vmatmul.f32.gmra.mxu0 %v377
      %v411 = vpop.f32.mrf.mxu0
      %v412 = vadd.f32 0.0, %v411
      %413 = vdwg.mxu0
      %v414 = vadd.f32 %v305, %v412
      %v415 = vld [vmem:[%s6] sm:$0x1]
      %v417 = vperm.slane %v415, 0
      %v419 = vadd.f32 %v414, %v417
      %420 = vst.msk [vmem:[%s304] sm:$0xff] %vm308, %v419
      %p421 = scmp.lt.s32.totalorder %s22, 1
      %s422 = scalar_select %p421, %s22, 1
      %p423 = scmp.lt.s32.totalorder %s23, 0
      %s424 = scalar_select %p423, %s23, 0
      %s425 = sadd.s32 %s424, %s422
      %s426 = smul.addr %s425, 8
      %s427 = scalar_lea.vmem %s7, %s426
      // Predicated region
      $region49: #{bioformer_block.9} parent=47 // pred_check
        %p428 = pneg %p204
      $region50: #{bioformer_block.9} parent=47 // pred_check_branch
        %430 = sbr.rel (%p428) target = $region52
      $region51: #{bioformer_block.9} parent=47 // pred_region
        _
      $region52: #{bioformer_block.9} parent=47 // pred_fallthru
        _
    $region48: #{bioformer_block.9} parent=5 // pred_fallthru
      _
    %p431 = scmp.le.s32.totalorder 2, %s13
    // Predicated region
    $region53: #{bioformer_block.9} parent=5 // pred_check
      %p432 = pneg %p431
    $region54: #{bioformer_block.9} parent=5 // pred_check_branch
      %434 = sbr.rel (%p432) target = $region56
    $region55: #{bioformer_block.9} parent=5 // pred_region
      %s435 = ssub.s32 %s13, 2
      // Predicated region
      $region57: #{bioformer_block.9} parent=55 // pred_check
        %p436 = pneg %p210
      $region58: #{bioformer_block.9} parent=55 // pred_check_branch
        %438 = sbr.rel (%p436) target = $region60
      $region59: #{bioformer_block.9} parent=55 // pred_region
        %p439 = scmp.lt.s32.totalorder %s24, 1
        %s440 = scalar_select %p439, %s24, 1
        %p441 = scmp.lt.s32.totalorder %s25, 0
        %s442 = scalar_select %p441, %s25, 0
        %s443 = sadd.s32 %s442, %s440
        %s444 = smul.addr %s443, 8
        %s445 = scalar_lea.vmem %s7, %s444
      $region60: #{bioformer_block.9} parent=55 // pred_fallthru
        _
    $region56: #{bioformer_block.9} parent=5 // pred_fallthru
      _
  $region6: #{bioformer_block.9} parent=0 // loop_footer
    %s17 = sadd.s32 1, %s13
  $region7: #{bioformer_block.9} parent=0 // loop_footer_branch
    %12 = sbr.rel target = $region3
  $region8: #{bioformer_block.9} parent=0 // loop_exit
    _

// kernel: bioformer_block.6
$region0: #{bioformer_block.6}
  #allocation0 [shape = 'u32[]', space=smem, size = 0x4, offset = 0x4, fixed_abs, tag = 'smem constant byte address 0x4 - core index']
  #allocation1 [shape = 'u32[72,128]{1,0:T(1,128)}', space=vmem, size = 0x9000, scoped, tag = 'internal scratch']
  %s0 = inlined_call_operand.vmem [shape: f32[2,64,16], index: 0, kind: input, shape index: {}]
  %s1 = inlined_call_operand.vmem [shape: f32[1,16], index: 1, kind: input, shape index: {}]
  %s2 = inlined_call_operand.vmem [shape: f32[1,16], index: 2, kind: input, shape index: {}]
  %s3 = inlined_call_operand.vmem [shape: f32[4,16], index: 3, kind: input, shape index: {}]
  %s4 = inlined_call_operand.vmem [shape: bf16[2,4,64], index: 4, kind: output, shape index: {}]
  %s5 = sld [smem:[#allocation0]]
  $region49: #{bioformer_block.6} parent=0
    _
  %s7 = ssub.s32 1, %s5
  %s8 = scalar_select 0, %s7, %s5
  loop: start=0, step=1, limit=4
  $region2: #{bioformer_block.6} parent=0 // loop_pre_header
    _
  $region3: #{bioformer_block.6} parent=0 // loop_header
    %s10 = sphi 0, %s14
    %p11 = scmp.ge.s32.totalorder %s10, 4
    %s17 = sphi 0, %s29
    %s18 = sphi 0, %s25
    %s19 = sphi 0, %s17
    %s20 = sphi 0, %s18
    %s21 = sphi 0, %s19
    %s22 = sphi 0, %s20
    %s34 = sphi 0, %s36
    %s37 = sphi 0, %s34
    %s38 = sphi 0, %s37
    %s54 = sphi 0, %s38
    %s58 = sphi 0, %s58
    %s60 = sphi 0, %s58
    %s61 = sphi 0, %s60
    %s75 = sphi 0, %s61
    %s79 = sphi 0, %s79
    %s81 = sphi 0, %s79
    %s82 = sphi 0, %s81
    %s96 = sphi 0, %s82
    %s100 = sphi 0, %s100
    %s102 = sphi 0, %s100
    %s103 = sphi 0, %s102
    %s117 = sphi 0, %s103
    %s125 = sphi 0, %s127
    %s128 = sphi 0, %s125
    %s129 = sphi 0, %s128
    %s145 = sphi 0, %s129
  $region4: #{bioformer_block.6} parent=0 // loop_header_branch
    %13 = sbr.rel (%p11) target = $region8
  $region5: #{bioformer_block.6} parent=0 // loop_body
    %s15 = ssub.s32 %s10, 1
    %s16 = ssub.s32 %s10, 2
    %s23 = sadd.s32 1, %s18
    %p24 = scmp.ge.s32.totalorder %s23, 1
    %s25 = scalar_select %p24, 0, %s23
    %s26 = sadd.s32 1, %s17
    %s27 = scalar_select %p24, %s26, %s17
    %p28 = scmp.ge.s32.totalorder %s27, 2
    %s29 = scalar_select %p28, 0, %s27
    %s30 = ssub.s32 %s17, %s29
    %s31 = ssub.s32 %s18, %s25
    %s32 = sor.u32 %s30, %s31
    %p33 = scmp.eq.s32.totalorder %s32, 0
    %s35 = sadd.s32 %s34, 1
    %s36 = scalar_select %p33, %s34, %s35
    %p39 = pneg %p33
    %p40 = scmp.eq.s32.totalorder %s10, 1
    %p41 = por %p39, %p40
    %p42 = scmp.ne.s32.totalorder %s34, %s37
    %p43 = scmp.eq.s32.totalorder %s10, 0
    %p44 = por %p42, %p43
    %p45 = scmp.ne.s32.totalorder %s34, %s37
    %p46 = scmp.eq.s32.totalorder %s15, 1
    %p47 = por %p45, %p46
    %p48 = scmp.ne.s32.totalorder %s37, %s38
    %p49 = scmp.eq.s32.totalorder %s15, 0
    %p50 = por %p48, %p49
    %p51 = scmp.ne.s32.totalorder %s37, %s38
    %p52 = scmp.eq.s32.totalorder %s16, 1
    %p53 = por %p51, %p52
    %p55 = scmp.ne.s32.totalorder %s38, %s54
    %p56 = scmp.eq.s32.totalorder %s16, 0
    %p57 = por %p55, %p56
    %s59 = sadd.s32 %s58, 1
    %p62 = scmp.eq.s32.totalorder %s10, 1
    %p63 = scmp.ne.s32.totalorder %s58, %s60
    %p64 = scmp.eq.s32.totalorder %s10, 0
    %p65 = por %p63, %p64
    %p66 = scmp.ne.s32.totalorder %s58, %s60
    %p67 = scmp.eq.s32.totalorder %s15, 1
    %p68 = por %p66, %p67
    %p69 = scmp.ne.s32.totalorder %s60, %s61
    %p70 = scmp.eq.s32.totalorder %s15, 0
    %p71 = por %p69, %p70
    %p72 = scmp.ne.s32.totalorder %s60, %s61
    %p73 = scmp.eq.s32.totalorder %s16, 1
    %p74 = por %p72, %p73
    %p76 = scmp.ne.s32.totalorder %s61, %s75
    %p77 = scmp.eq.s32.totalorder %s16, 0
    %p78 = por %p76, %p77
    %s80 = sadd.s32 %s79, 1
    %p83 = scmp.eq.s32.totalorder %s10, 1
    %p84 = scmp.ne.s32.totalorder %s79, %s81
    %p85 = scmp.eq.s32.totalorder %s10, 0
    %p86 = por %p84, %p85
    %p87 = scmp.ne.s32.totalorder %s79, %s81
    %p88 = scmp.eq.s32.totalorder %s15, 1
    %p89 = por %p87, %p88
    %p90 = scmp.ne.s32.totalorder %s81, %s82
    %p91 = scmp.eq.s32.totalorder %s15, 0
    %p92 = por %p90, %p91
    %p93 = scmp.ne.s32.totalorder %s81, %s82
    %p94 = scmp.eq.s32.totalorder %s16, 1
    %p95 = por %p93, %p94
    %p97 = scmp.ne.s32.totalorder %s82, %s96
    %p98 = scmp.eq.s32.totalorder %s16, 0
    %p99 = por %p97, %p98
    %s101 = sadd.s32 %s100, 1
    %p104 = scmp.eq.s32.totalorder %s10, 1
    %p105 = scmp.ne.s32.totalorder %s100, %s102
    %p106 = scmp.eq.s32.totalorder %s10, 0
    %p107 = por %p105, %p106
    %p108 = scmp.ne.s32.totalorder %s100, %s102
    %p109 = scmp.eq.s32.totalorder %s15, 1
    %p110 = por %p108, %p109
    %p111 = scmp.ne.s32.totalorder %s102, %s103
    %p112 = scmp.eq.s32.totalorder %s15, 0
    %p113 = por %p111, %p112
    %p114 = scmp.ne.s32.totalorder %s102, %s103
    %p115 = scmp.eq.s32.totalorder %s16, 1
    %p116 = por %p114, %p115
    %p118 = scmp.ne.s32.totalorder %s103, %s117
    %p119 = scmp.eq.s32.totalorder %s16, 0
    %p120 = por %p118, %p119
    %s121 = ssub.s32 %s17, %s29
    %s122 = ssub.s32 %s18, %s25
    %s123 = sor.u32 %s121, %s122
    %p124 = scmp.eq.s32.totalorder %s123, 0
    %s126 = sadd.s32 %s125, 1
    %s127 = scalar_select %p124, %s125, %s126
    %p130 = pneg %p124
    %p131 = scmp.eq.s32.totalorder %s10, 1
    %p132 = por %p130, %p131
    %p133 = scmp.ne.s32.totalorder %s125, %s128
    %p134 = scmp.eq.s32.totalorder %s10, 0
    %p135 = por %p133, %p134
    %p136 = scmp.ne.s32.totalorder %s125, %s128
    %p137 = scmp.eq.s32.totalorder %s15, 1
    %p138 = por %p136, %p137
    %p139 = scmp.ne.s32.totalorder %s128, %s129
    %p140 = scmp.eq.s32.totalorder %s15, 0
    %p141 = por %p139, %p140
    %p142 = scmp.ne.s32.totalorder %s128, %s129
    %p143 = scmp.eq.s32.totalorder %s16, 1
    %p144 = por %p142, %p143
    %p146 = scmp.ne.s32.totalorder %s129, %s145
    %p147 = scmp.eq.s32.totalorder %s16, 0
    %p148 = por %p146, %p147
    %p149 = scmp.le.s32.totalorder 1, %s10
    %p150 = scmp.lt.s32.totalorder %s10, 3
    %p151 = pnand %p149, %p150
    %p152 = pneg %p151
    // Predicated region
    $region9: #{bioformer_block.6} parent=5 // pred_check
      _
    $region10: #{bioformer_block.6} parent=5 // pred_check_branch
      %154 = sbr.rel (%p151) target = $region12
    $region11: #{bioformer_block.6} parent=5 // pred_region
      %s155 = ssub.s32 %s10, 1
      // Predicated region
      $region13: #{bioformer_block.6} parent=11 // pred_check
        %p156 = pneg %p71
      $region14: #{bioformer_block.6} parent=11 // pred_check_branch
        %158 = sbr.rel (%p156) target = $region16
      $region15: #{bioformer_block.6} parent=11 // pred_region
        _
      $region16: #{bioformer_block.6} parent=11 // pred_fallthru
        _
      // Predicated region
      $region17: #{bioformer_block.6} parent=11 // pred_check
        %p159 = pneg %p92
      $region18: #{bioformer_block.6} parent=11 // pred_check_branch
        %161 = sbr.rel (%p159) target = $region20
      $region19: #{bioformer_block.6} parent=11 // pred_region
        _
      $region20: #{bioformer_block.6} parent=11 // pred_fallthru
        _
      // Predicated region
      $region21: #{bioformer_block.6} parent=11 // pred_check
        %p162 = pneg %p113
      $region22: #{bioformer_block.6} parent=11 // pred_check_branch
        %164 = sbr.rel (%p162) target = $region24
      $region23: #{bioformer_block.6} parent=11 // pred_region
        _
      $region24: #{bioformer_block.6} parent=11 // pred_fallthru
        _
    $region12: #{bioformer_block.6} parent=5 // pred_fallthru
      _
    %p165 = scmp.lt.s32.totalorder %s10, 2
    // Predicated region
    $region25: #{bioformer_block.6} parent=5 // pred_check
      %p166 = pneg %p165
    $region26: #{bioformer_block.6} parent=5 // pred_check_branch
      %168 = sbr.rel (%p166) target = $region28
    $region27: #{bioformer_block.6} parent=5 // pred_region
      // Predicated region
      $region29: #{bioformer_block.6} parent=27 // pred_check
        %p169 = pneg %p44
      $region30: #{bioformer_block.6} parent=27 // pred_check_branch
        %171 = sbr.rel (%p169) target = $region32
      $region31: #{bioformer_block.6} parent=27 // pred_region
        %s172 = smul.u32 8, %s18
        %p173 = scmp.lt.s32.totalorder %s17, 1
        %s174 = scalar_select %p173, %s17, 1
        %p175 = scmp.lt.s32.totalorder %s172, 7
        %s176 = scalar_select %p175, %s172, 7
        %s177 = smul.addr %s174, 8
        %s178 = sadd.s32 %s176, %s177
        %s179 = smul.addr %s178, 8
        %s180 = scalar_lea.vmem %s0, %s179
        %s181 = smul.u32 8, %s18
      $region32: #{bioformer_block.6} parent=27 // pred_fallthru
        _
    $region28: #{bioformer_block.6} parent=5 // pred_fallthru
      _
    %p182 = scmp.le.s32.totalorder 1, %s10
    %p183 = scmp.lt.s32.totalorder %s10, 3
    %p184 = pnand %p182, %p183
    %p185 = pneg %p184
    // Predicated region
    $region33: #{bioformer_block.6} parent=5 // pred_check
      _
    $region34: #{bioformer_block.6} parent=5 // pred_check_branch
      %187 = sbr.rel (%p184) target = $region36
    $region35: #{bioformer_block.6} parent=5 // pred_region
      %s188 = ssub.s32 %s10, 1
      %s189 = smul.u32 8, %s20
      %p190 = scmp.lt.s32.totalorder %s19, 1
      %s191 = scalar_select %p190, %s19, 1
      %p192 = scmp.lt.s32.totalorder %s189, 7
      %s193 = scalar_select %p192, %s189, 7
      %s194 = smul.addr %s191, 8
      %s195 = sadd.s32 %s193, %s194
      %s196 = smul.addr %s195, 8
      %s197 = scalar_lea.vmem %s0, %s196
      %p198 = pneg %p50
      %p199 = pneg %p47
      %p200 = pneg %p71
      %p201 = pneg %p68
      %p202 = pneg %p92
      %p203 = pneg %p89
      %p204 = pneg %p113
      %p205 = pneg %p110
      %p206 = pneg %p141
      %p207 = pneg %p138
      %p208 = scmp.lt.s32.totalorder %s19, 1
      %s209 = scalar_select %p208, %s19, 1
      %p210 = scmp.lt.s32.totalorder %s20, 0
      %s211 = scalar_select %p210, %s20, 0
      %s212 = sadd.s32 %s211, %s209
      %s213 = smul.addr %s212, 2
      %s214 = scalar_lea.vmem %s4, %s213
      %s215 = smul.u32 8, %s20
      %p216 = scmp.lt.s32.totalorder %s19, 1
      %s217 = scalar_select %p216, %s19, 1
      %p218 = scmp.lt.s32.totalorder %s215, 7
      %s219 = scalar_select %p218, %s215, 7
      %s220 = smul.addr %s217, 8
      %s221 = sadd.s32 %s219, %s220
      %s222 = smul.addr %s221, 8
      %s223 = scalar_lea.vmem %s0, %s222
      %s224 = smul.u32 8, %s20
      %p225 = scmp.lt.s32.totalorder %s19, 1
      %s226 = scalar_select %p225, %s19, 1
      %p227 = scmp.lt.s32.totalorder %s20, 0
      %s228 = scalar_select %p227, %s20, 0
      %s229 = sadd.s32 %s228, %s226
      %s230 = smul.addr %s229, 2
      %s231 = scalar_lea.vmem %s4, %s230
      %v232 = vld [vmem:[%s223] sm:$0xff]
      %v233 = vld [vmem:[%s223 + $0x8] sm:$0xff]
      %v234 = vld [vmem:[%s223 + $0x10] sm:$0xff]
      %v235 = vld [vmem:[%s223 + $0x18] sm:$0xff]
      %v236 = vld [vmem:[%s223 + $0x20] sm:$0xff]
      %v237 = vld [vmem:[%s223 + $0x28] sm:$0xff]
      %v238 = vld [vmem:[%s223 + $0x30] sm:$0xff]
      %v239 = vld [vmem:[%s223 + $0x38] sm:$0xff]
      %v240 = vld [vmem:[%s1] sm:$0x1]
      %v241 = vld [vmem:[%s2] sm:$0x1]
      %vm242 = vcmask 130048
      %v243 = vsel %vm242, %v232, 0.0
      %244 = vadd.xlane.f32.xlu0 %v243
      %v245 = vpop.xlane.xlu0 %244
      %v246 = vsel %vm242, %v233, 0.0
      %247 = vadd.xlane.f32.xlu0 %v246
      %v248 = vpop.xlane.xlu0 %247
      %v249 = vsel %vm242, %v234, 0.0
      %250 = vadd.xlane.f32.xlu0 %v249
      %v251 = vpop.xlane.xlu0 %250
      %v252 = vsel %vm242, %v235, 0.0
      %253 = vadd.xlane.f32.xlu0 %v252
      %v254 = vpop.xlane.xlu0 %253
      %v255 = vsel %vm242, %v236, 0.0
      %256 = vadd.xlane.f32.xlu0 %v255
      %v257 = vpop.xlane.xlu0 %256
      %v258 = vsel %vm242, %v237, 0.0
      %259 = vadd.xlane.f32.xlu0 %v258
      %v260 = vpop.xlane.xlu0 %259
      %v261 = vsel %vm242, %v238, 0.0
      %262 = vadd.xlane.f32.xlu0 %v261
      %v263 = vpop.xlane.xlu0 %262
      %v264 = vsel %vm242, %v239, 0.0
      %265 = vadd.xlane.f32.xlu0 %v264
      %v266 = vpop.xlane.xlu0 %265
      %v267 = vrcp.pop 16.0
      %v268 = vmul.f32 16.0, %v267
      %v269 = vsub.f32 1.0, %v268
      %v270 = vmul.f32 %v267, %v269
      %v271 = vadd.f32 %v267, %v270
      %vm272 = vweird.f32 %v267
      %v273 = vsel %vm272, %v267, %v271
      %v274 = vmul.f32 %v245, %v273
      %v275 = vmul.f32 %v248, %v273
      %v276 = vmul.f32 %v251, %v273
      %v277 = vmul.f32 %v254, %v273
      %v278 = vmul.f32 %v257, %v273
      %v279 = vmul.f32 %v260, %v273
      %v280 = vmul.f32 %v263, %v273
      %v281 = vmul.f32 %v266, %v273
      %v282 = vsub.f32 %v232, %v274
      %v283 = vsub.f32 %v233, %v275
      %v284 = vsub.f32 %v234, %v276
      %v285 = vsub.f32 %v235, %v277
      %v286 = vsub.f32 %v236, %v278
      %v287 = vsub.f32 %v237, %v279
      %v288 = vsub.f32 %v238, %v280
      %v289 = vsub.f32 %v239, %v281
      %v290 = vmul.f32 %v282, %v282
      %v291 = vmul.f32 %v283, %v283
      %v292 = vmul.f32 %v284, %v284
      %v293 = vmul.f32 %v285, %v285
      %v294 = vmul.f32 %v286, %v286
      %v295 = vmul.f32 %v287, %v287
      %v296 = vmul.f32 %v288, %v288
      %v297 = vmul.f32 %v289, %v289
      %v298 = vsel %vm242, %v290, 0.0
      %299 = vadd.xlane.f32.xlu0 %v298
      %v300 = vpop.xlane.xlu0 %299
      %v301 = vsel %vm242, %v291, 0.0
      %302 = vadd.xlane.f32.xlu0 %v301
      %v303 = vpop.xlane.xlu0 %302
      %v304 = vsel %vm242, %v292, 0.0
      %305 = vadd.xlane.f32.xlu0 %v304
      %v306 = vpop.xlane.xlu0 %305
      %v307 = vsel %vm242, %v293, 0.0
      %308 = vadd.xlane.f32.xlu0 %v307
      %v309 = vpop.xlane.xlu0 %308
      %v310 = vsel %vm242, %v294, 0.0
      %311 = vadd.xlane.f32.xlu0 %v310
      %v312 = vpop.xlane.xlu0 %311
      %v313 = vsel %vm242, %v295, 0.0
      %314 = vadd.xlane.f32.xlu0 %v313
      %v315 = vpop.xlane.xlu0 %314
      %v316 = vsel %vm242, %v296, 0.0
      %317 = vadd.xlane.f32.xlu0 %v316
      %v318 = vpop.xlane.xlu0 %317
      %v319 = vsel %vm242, %v297, 0.0
      %320 = vadd.xlane.f32.xlu0 %v319
      %v321 = vpop.xlane.xlu0 %320
      %v322 = vmul.f32 %v300, %v273
      %v323 = vmul.f32 %v303, %v273
      %v324 = vmul.f32 %v306, %v273
      %v325 = vmul.f32 %v309, %v273
      %v326 = vmul.f32 %v312, %v273
      %v327 = vmul.f32 %v315, %v273
      %v328 = vmul.f32 %v318, %v273
      %v329 = vmul.f32 %v321, %v273
      %v330 = vadd.f32 %v322, 1e-05
      %v331 = vadd.f32 %v323, 1e-05
      %v332 = vadd.f32 %v324, 1e-05
      %v333 = vadd.f32 %v325, 1e-05
      %v334 = vadd.f32 %v326, 1e-05
      %v335 = vadd.f32 %v327, 1e-05
      %v336 = vadd.f32 %v328, 1e-05
      %v337 = vadd.f32 %v329, 1e-05
      %v338 = vrsqrt.pop %v330
      %v339 = vmul.f32 %v338, %v330
      %v340 = vmul.f32 %v339, %v338
      %v341 = vmul.f32 0.5, %v340
      %v342 = vsub.f32 1.5, %v341
      %v343 = vmul.f32 %v338, %v342
      %vm344 = vweird.f32 %v330
      %vm345 = vweird.f32 %v338
      %vm346 = vmor %vm344, %vm345
      %v347 = vsel %vm346, %v338, %v343
      %v348 = vrsqrt.pop %v331
      %v349 = vmul.f32 %v348, %v331
      %v350 = vmul.f32 %v349, %v348
      %v351 = vmul.f32 0.5, %v350
      %v352 = vsub.f32 1.5, %v351
      %v353 = vmul.f32 %v348, %v352
      %vm354 = vweird.f32 %v331
      %vm355 = vweird.f32 %v348
      %vm356 = vmor %vm354, %vm355
      %v357 = vsel %vm356, %v348, %v353
      %v358 = vrsqrt.pop %v332
      %v359 = vmul.f32 %v358, %v332
      %v360 = vmul.f32 %v359, %v358
      %v361 = vmul.f32 0.5, %v360
      %v362 = vsub.f32 1.5, %v361
      %v363 = vmul.f32 %v358, %v362
      %vm364 = vweird.f32 %v332
      %vm365 = vweird.f32 %v358
      %vm366 = vmor %vm364, %vm365
      %v367 = vsel %vm366, %v358, %v363
      %v368 = vrsqrt.pop %v333
      %v369 = vmul.f32 %v368, %v333
      %v370 = vmul.f32 %v369, %v368
      %v371 = vmul.f32 0.5, %v370
      %v372 = vsub.f32 1.5, %v371
      %v373 = vmul.f32 %v368, %v372
      %vm374 = vweird.f32 %v333
      %vm375 = vweird.f32 %v368
      %vm376 = vmor %vm374, %vm375
      %v377 = vsel %vm376, %v368, %v373
      %v378 = vrsqrt.pop %v334
      %v379 = vmul.f32 %v378, %v334
      %v380 = vmul.f32 %v379, %v378
      %v381 = vmul.f32 0.5, %v380
      %v382 = vsub.f32 1.5, %v381
      %v383 = vmul.f32 %v378, %v382
      %vm384 = vweird.f32 %v334
      %vm385 = vweird.f32 %v378
      %vm386 = vmor %vm384, %vm385
      %v387 = vsel %vm386, %v378, %v383
      %v388 = vrsqrt.pop %v335
      %v389 = vmul.f32 %v388, %v335
      %v390 = vmul.f32 %v389, %v388
      %v391 = vmul.f32 0.5, %v390
      %v392 = vsub.f32 1.5, %v391
      %v393 = vmul.f32 %v388, %v392
      %vm394 = vweird.f32 %v335
      %vm395 = vweird.f32 %v388
      %vm396 = vmor %vm394, %vm395
      %v397 = vsel %vm396, %v388, %v393
      %v398 = vrsqrt.pop %v336
      %v399 = vmul.f32 %v398, %v336
      %v400 = vmul.f32 %v399, %v398
      %v401 = vmul.f32 0.5, %v400
      %v402 = vsub.f32 1.5, %v401
      %v403 = vmul.f32 %v398, %v402
      %vm404 = vweird.f32 %v336
      %vm405 = vweird.f32 %v398
      %vm406 = vmor %vm404, %vm405
      %v407 = vsel %vm406, %v398, %v403
      %v408 = vrsqrt.pop %v337
      %v409 = vmul.f32 %v408, %v337
      %v410 = vmul.f32 %v409, %v408
      %v411 = vmul.f32 0.5, %v410
      %v412 = vsub.f32 1.5, %v411
      %v413 = vmul.f32 %v408, %v412
      %vm414 = vweird.f32 %v337
      %vm415 = vweird.f32 %v408
      %vm416 = vmor %vm414, %vm415
      %v417 = vsel %vm416, %v408, %v413
      %v418 = vmul.f32 %v282, %v347
      %v419 = vmul.f32 %v283, %v357
      %v420 = vmul.f32 %v284, %v367
      %v421 = vmul.f32 %v285, %v377
      %v422 = vmul.f32 %v286, %v387
      %v423 = vmul.f32 %v287, %v397
      %v424 = vmul.f32 %v288, %v407
      %v425 = vmul.f32 %v289, %v417
      %v427 = vperm.slane %v240, 0
      %v429 = vmul.f32 %v418, %v427
      %v430 = vmul.f32 %v419, %v427
      %v431 = vmul.f32 %v420, %v427
      %v432 = vmul.f32 %v421, %v427
      %v433 = vmul.f32 %v422, %v427
      %v434 = vmul.f32 %v423, %v427
      %v435 = vmul.f32 %v424, %v427
      %v436 = vmul.f32 %v425, %v427
      %v438 = vperm.slane %v241, 0
      %v440 = vadd.f32 %v429, %v438
      %v441 = vadd.f32 %v430, %v438
      %v442 = vadd.f32 %v431, %v438
      %v443 = vadd.f32 %v432, %v438
      %v444 = vadd.f32 %v433, %v438
      %v445 = vadd.f32 %v434, %v438
      %v446 = vadd.f32 %v435, %v438
      %v447 = vadd.f32 %v436, %v438
      %v448 = vld [vmem:[%s3] sm:$0xf]
      %v450 = vsel %vm242, %v448, 0
      %v453 = vsel %vm242, %v440, 0
      %v456 = vsel %vm242, %v441, 0
      %v459 = vsel %vm242, %v442, 0
      %v462 = vsel %vm242, %v443, 0
      %v465 = vsel %vm242, %v444, 0
      %v468 = vsel %vm242, %v445, 0
      %v471 = vsel %vm242, %v446, 0
      %v474 = vsel %vm242, %v447, 0
      %476 = vmatpush.xpose.msra.mxu0 0.0
      %477 = vmatpush.xpose.msra.mxu0 0.0
      %478 = vmatpush.xpose.msra.mxu0 0.0
      %479 = vmatpush.xpose.msra.mxu0 0.0
      %480 = vmatpush.xpose.msra.mxu0 0.0
      %481 = vmatpush.xpose.msra.mxu0 0.0
      %482 = vmatpush.xpose.msra.mxu0 0.0
      %483 = vmatpush.xpose.msra.mxu0 0.0
      %484 = vmatpush.xpose.msra.mxu0 %v474
      %485 = vmatpush.xpose.msra.mxu0 %v471
      %486 = vmatpush.xpose.msra.mxu0 %v468
      %487 = vmatpush.xpose.msra.mxu0 %v465
      %488 = vmatpush.xpose.msra.mxu0 %v462
      %489 = vmatpush.xpose.msra.mxu0 %v459
      %490 = vmatpush.xpose.msra.mxu0 %v456
      %491 = vmatpush.xpose.msra.mxu0 %v453
      %492 = vmatmul.f32.gmra.mxu0 %v450
      %v493 = vpop.f32.mrf.mxu0
      %v494 = vadd.f32 0.0, %v493
      %495 = vdwg.mxu0
      %v496 = vpack.c.bf16 %v494, %v494
      %vm497 = vcmask 517120
      %498 = vst.msk [vmem:[%s231] sm:$0x3] %vm497, %v496
      %p499 = scmp.lt.s32.totalorder %s19, 1
      %s500 = scalar_select %p499, %s19, 1
      %p501 = scmp.lt.s32.totalorder %s20, 0
      %s502 = scalar_select %p501, %s20, 0
      %s503 = sadd.s32 %s502, %s500
      %s504 = smul.addr %s503, 2
      %s505 = scalar_lea.vmem %s4, %s504
      // Predicated region
      $region37: #{bioformer_block.6} parent=35 // pred_check
        %p506 = pneg %p138
      $region38: #{bioformer_block.6} parent=35 // pred_check_branch
        %508 = sbr.rel (%p506) target = $region40
      $region39: #{bioformer_block.6} parent=35 // pred_region
        _
      $region40: #{bioformer_block.6} parent=35 // pred_fallthru
        _
    $region36: #{bioformer_block.6} parent=5 // pred_fallthru
      _
    %p509 = scmp.le.s32.totalorder 2, %s10
    // Predicated region
    $region41: #{bioformer_block.6} parent=5 // pred_check
      %p510 = pneg %p509
    $region42: #{bioformer_block.6} parent=5 // pred_check_branch
      %512 = sbr.rel (%p510) target = $region44
    $region43: #{bioformer_block.6} parent=5 // pred_region
      %s513 = ssub.s32 %s10, 2
      // Predicated region
      $region45: #{bioformer_block.6} parent=43 // pred_check
        %p514 = pneg %p144
      $region46: #{bioformer_block.6} parent=43 // pred_check_branch
        %516 = sbr.rel (%p514) target = $region48
      $region47: #{bioformer_block.6} parent=43 // pred_region
        %p517 = scmp.lt.s32.totalorder %s21, 1
        %s518 = scalar_select %p517, %s21, 1
        %p519 = scmp.lt.s32.totalorder %s22, 0
        %s520 = scalar_select %p519, %s22, 0
        %s521 = sadd.s32 %s520, %s518
        %s522 = smul.addr %s521, 2
        %s523 = scalar_lea.vmem %s4, %s522
      $region48: #{bioformer_block.6} parent=43 // pred_fallthru
        _
    $region44: #{bioformer_block.6} parent=5 // pred_fallthru
      _
  $region6: #{bioformer_block.6} parent=0 // loop_footer
    %s14 = sadd.s32 1, %s10
  $region7: #{bioformer_block.6} parent=0 // loop_footer_branch
    %9 = sbr.rel target = $region3
  $region8: #{bioformer_block.6} parent=0 // loop_exit
    _

// kernel: bioformer_block.8
$region0: #{bioformer_block.8}
  #allocation0 [shape = 'u32[]', space=smem, size = 0x4, offset = 0x4, fixed_abs, tag = 'smem constant byte address 0x4 - core index']
  #allocation1 [shape = 'u32[72,128]{1,0:T(1,128)}', space=vmem, size = 0x9000, scoped, tag = 'internal scratch']
  #allocation2 [shape = 'f32[4,8,1]{2,1,0:T(8,128)}', space=vmem, size = 0x4000, scoped, tag = 'scratch operand']
  #allocation3 [shape = 'f32[4,8,1]{2,1,0:T(8,128)}', space=vmem, size = 0x4000, scoped, tag = 'scratch operand']
  #allocation4 [shape = 'f32[4,8,4]{2,1,0:T(8,128)}', space=vmem, size = 0x4000, scoped, tag = 'scratch operand']
  %s0 = inlined_call_operand.vmem [shape: f32[2,8,32], index: 0, kind: input, shape index: {}]
  %s1 = inlined_call_operand.vmem [shape: f32[2,4,8,4], index: 1, kind: input, shape index: {}]
  %s2 = inlined_call_operand.vmem [shape: f32[2,4,8,4], index: 2, kind: input, shape index: {}]
  %s3 = inlined_call_operand.vmem [shape: f32[2,4,8,4], index: 3, kind: input, shape index: {}]
  %s4 = inlined_call_operand.vmem [shape: bf16[2,4,8,8], index: 4, kind: input, shape index: {}]
  %s5 = inlined_call_operand.vmem [shape: f32[4,4,32], index: 5, kind: input, shape index: {}]
  %s6 = inlined_call_operand.vmem [shape: f32[1,32], index: 6, kind: input, shape index: {}]
  %s7 = inlined_call_operand.vmem [shape: f32[2,8,32], index: 7, kind: output, shape index: {}]
  %s8 = sld [smem:[#allocation0]]
  $region69: #{bioformer_block.8} parent=0
    _
  %s10 = ssub.s32 1, %s8
  %s11 = scalar_select 0, %s10, %s8
  loop: start=0, step=1, limit=4
  $region2: #{bioformer_block.8} parent=0 // loop_pre_header
    _
  $region3: #{bioformer_block.8} parent=0 // loop_header
    %s13 = sphi 0, %s17
    %p14 = scmp.ge.s32.totalorder %s13, 4
    %s20 = sphi 0, %s39
    %s21 = sphi 0, %s35
    %s22 = sphi 0, %s31
    %s23 = sphi 0, %s20
    %s24 = sphi 0, %s21
    %s25 = sphi 0, %s22
    %s26 = sphi 0, %s23
    %s27 = sphi 0, %s24
    %s28 = sphi 0, %s25
    %s44 = sphi 0, %s46
    %s47 = sphi 0, %s44
    %s48 = sphi 0, %s47
    %s64 = sphi 0, %s48
    %s72 = sphi 0, %s74
    %s75 = sphi 0, %s72
    %s76 = sphi 0, %s75
    %s92 = sphi 0, %s76
    %s100 = sphi 0, %s102
    %s103 = sphi 0, %s100
    %s104 = sphi 0, %s103
    %s120 = sphi 0, %s104
    %s128 = sphi 0, %s130
    %s131 = sphi 0, %s128
    %s132 = sphi 0, %s131
    %s148 = sphi 0, %s132
    %s158 = sphi 0, %s160
    %s161 = sphi 0, %s158
    %s162 = sphi 0, %s161
    %s178 = sphi 0, %s162
    %s182 = sphi 0, %s182
    %s184 = sphi 0, %s182
    %s185 = sphi 0, %s184
    %s199 = sphi 0, %s185
    %s203 = sphi 0, %s203
    %s205 = sphi 0, %s203
    %s206 = sphi 0, %s205
    %s220 = sphi 0, %s206
    %s228 = sphi 0, %s230
    %s231 = sphi 0, %s228
    %s232 = sphi 0, %s231
    %s248 = sphi 0, %s232
  $region4: #{bioformer_block.8} parent=0 // loop_header_branch
    %16 = sbr.rel (%p14) target = $region8
  $region5: #{bioformer_block.8} parent=0 // loop_body
    %s18 = ssub.s32 %s13, 1
    %s19 = ssub.s32 %s13, 2
    %s29 = sadd.s32 1, %s22
    %p30 = scmp.ge.s32.totalorder %s29, 1
    %s31 = scalar_select %p30, 0, %s29
    %s32 = sadd.s32 1, %s21
    %s33 = scalar_select %p30, %s32, %s21
    %p34 = scmp.ge.s32.totalorder %s33, 1
    %s35 = scalar_select %p34, 0, %s33
    %s36 = sadd.s32 1, %s20
    %s37 = scalar_select %p34, %s36, %s20
    %p38 = scmp.ge.s32.totalorder %s37, 2
    %s39 = scalar_select %p38, 0, %s37
    %s40 = ssub.s32 %s20, %s39
    %s41 = ssub.s32 %s21, %s35
    %s42 = sor.u32 %s40, %s41
    %p43 = scmp.eq.s32.totalorder %s42, 0
    %s45 = sadd.s32 %s44, 1
    %s46 = scalar_select %p43, %s44, %s45
    %p49 = pneg %p43
    %p50 = scmp.eq.s32.totalorder %s13, 1
    %p51 = por %p49, %p50
    %p52 = scmp.ne.s32.totalorder %s44, %s47
    %p53 = scmp.eq.s32.totalorder %s13, 0
    %p54 = por %p52, %p53
    %p55 = scmp.ne.s32.totalorder %s44, %s47
    %p56 = scmp.eq.s32.totalorder %s18, 1
    %p57 = por %p55, %p56
    %p58 = scmp.ne.s32.totalorder %s47, %s48
    %p59 = scmp.eq.s32.totalorder %s18, 0
    %p60 = por %p58, %p59
    %p61 = scmp.ne.s32.totalorder %s47, %s48
    %p62 = scmp.eq.s32.totalorder %s19, 1
    %p63 = por %p61, %p62
    %p65 = scmp.ne.s32.totalorder %s48, %s64
    %p66 = scmp.eq.s32.totalorder %s19, 0
    %p67 = por %p65, %p66
    %s68 = ssub.s32 %s20, %s39
    %s69 = ssub.s32 %s21, %s35
    %s70 = sor.u32 %s68, %s69
    %p71 = scmp.eq.s32.totalorder %s70, 0
    %s73 = sadd.s32 %s72, 1
    %s74 = scalar_select %p71, %s72, %s73
    %p77 = pneg %p71
    %p78 = scmp.eq.s32.totalorder %s13, 1
    %p79 = por %p77, %p78
    %p80 = scmp.ne.s32.totalorder %s72, %s75
    %p81 = scmp.eq.s32.totalorder %s13, 0
    %p82 = por %p80, %p81
    %p83 = scmp.ne.s32.totalorder %s72, %s75
    %p84 = scmp.eq.s32.totalorder %s18, 1
    %p85 = por %p83, %p84
    %p86 = scmp.ne.s32.totalorder %s75, %s76
    %p87 = scmp.eq.s32.totalorder %s18, 0
    %p88 = por %p86, %p87
    %p89 = scmp.ne.s32.totalorder %s75, %s76
    %p90 = scmp.eq.s32.totalorder %s19, 1
    %p91 = por %p89, %p90
    %p93 = scmp.ne.s32.totalorder %s76, %s92
    %p94 = scmp.eq.s32.totalorder %s19, 0
    %p95 = por %p93, %p94
    %s96 = ssub.s32 %s20, %s39
    %s97 = ssub.s32 %s22, %s31
    %s98 = sor.u32 %s96, %s97
    %p99 = scmp.eq.s32.totalorder %s98, 0
    %s101 = sadd.s32 %s100, 1
    %s102 = scalar_select %p99, %s100, %s101
    %p105 = pneg %p99
    %p106 = scmp.eq.s32.totalorder %s13, 1
    %p107 = por %p105, %p106
    %p108 = scmp.ne.s32.totalorder %s100, %s103
    %p109 = scmp.eq.s32.totalorder %s13, 0
    %p110 = por %p108, %p109
    %p111 = scmp.ne.s32.totalorder %s100, %s103
    %p112 = scmp.eq.s32.totalorder %s18, 1
    %p113 = por %p111, %p112
    %p114 = scmp.ne.s32.totalorder %s103, %s104
    %p115 = scmp.eq.s32.totalorder %s18, 0
    %p116 = por %p114, %p115
    %p117 = scmp.ne.s32.totalorder %s103, %s104
    %p118 = scmp.eq.s32.totalorder %s19, 1
    %p119 = por %p117, %p118
    %p121 = scmp.ne.s32.totalorder %s104, %s120
    %p122 = scmp.eq.s32.totalorder %s19, 0
    %p123 = por %p121, %p122
    %s124 = ssub.s32 %s20, %s39
    %s125 = ssub.s32 %s22, %s31
    %s126 = sor.u32 %s124, %s125
    %p127 = scmp.eq.s32.totalorder %s126, 0
    %s129 = sadd.s32 %s128, 1
    %s130 = scalar_select %p127, %s128, %s129
    %p133 = pneg %p127
    %p134 = scmp.eq.s32.totalorder %s13, 1
    %p135 = por %p133, %p134
    %p136 = scmp.ne.s32.totalorder %s128, %s131
    %p137 = scmp.eq.s32.totalorder %s13, 0
    %p138 = por %p136, %p137
    %p139 = scmp.ne.s32.totalorder %s128, %s131
    %p140 = scmp.eq.s32.totalorder %s18, 1
    %p141 = por %p139, %p140
    %p142 = scmp.ne.s32.totalorder %s131, %s132
    %p143 = scmp.eq.s32.totalorder %s18, 0
    %p144 = por %p142, %p143
    %p145 = scmp.ne.s32.totalorder %s131, %s132
    %p146 = scmp.eq.s32.totalorder %s19, 1
    %p147 = por %p145, %p146
    %p149 = scmp.ne.s32.totalorder %s132, %s148
    %p150 = scmp.eq.s32.totalorder %s19, 0
    %p151 = por %p149, %p150
    %s152 = ssub.s32 %s20, %s39
    %s153 = ssub.s32 %s21, %s35
    %s154 = sor.u32 %s152, %s153
    %s155 = ssub.s32 %s22, %s31
    %s156 = sor.u32 %s154, %s155
    %p157 = scmp.eq.s32.totalorder %s156, 0
    %s159 = sadd.s32 %s158, 1
    %s160 = scalar_select %p157, %s158, %s159
    %p163 = pneg %p157
    %p164 = scmp.eq.s32.totalorder %s13, 1
    %p165 = por %p163, %p164
    %p166 = scmp.ne.s32.totalorder %s158, %s161
    %p167 = scmp.eq.s32.totalorder %s13, 0
    %p168 = por %p166, %p167
    %p169 = scmp.ne.s32.totalorder %s158, %s161
    %p170 = scmp.eq.s32.totalorder %s18, 1
    %p171 = por %p169, %p170
    %p172 = scmp.ne.s32.totalorder %s161, %s162
    %p173 = scmp.eq.s32.totalorder %s18, 0
    %p174 = por %p172, %p173
    %p175 = scmp.ne.s32.totalorder %s161, %s162
    %p176 = scmp.eq.s32.totalorder %s19, 1
    %p177 = por %p175, %p176
    %p179 = scmp.ne.s32.totalorder %s162, %s178
    %p180 = scmp.eq.s32.totalorder %s19, 0
    %p181 = por %p179, %p180
    %s183 = sadd.s32 %s182, 1
    %p186 = scmp.eq.s32.totalorder %s13, 1
    %p187 = scmp.ne.s32.totalorder %s182, %s184
    %p188 = scmp.eq.s32.totalorder %s13, 0
    %p189 = por %p187, %p188
    %p190 = scmp.ne.s32.totalorder %s182, %s184
    %p191 = scmp.eq.s32.totalorder %s18, 1
    %p192 = por %p190, %p191
    %p193 = scmp.ne.s32.totalorder %s184, %s185
    %p194 = scmp.eq.s32.totalorder %s18, 0
    %p195 = por %p193, %p194
    %p196 = scmp.ne.s32.totalorder %s184, %s185
    %p197 = scmp.eq.s32.totalorder %s19, 1
    %p198 = por %p196, %p197
    %p200 = scmp.ne.s32.totalorder %s185, %s199
    %p201 = scmp.eq.s32.totalorder %s19, 0
    %p202 = por %p200, %p201
    %s204 = sadd.s32 %s203, 1
    %p207 = scmp.eq.s32.totalorder %s13, 1
    %p208 = scmp.ne.s32.totalorder %s203, %s205
    %p209 = scmp.eq.s32.totalorder %s13, 0
    %p210 = por %p208, %p209
    %p211 = scmp.ne.s32.totalorder %s203, %s205
    %p212 = scmp.eq.s32.totalorder %s18, 1
    %p213 = por %p211, %p212
    %p214 = scmp.ne.s32.totalorder %s205, %s206
    %p215 = scmp.eq.s32.totalorder %s18, 0
    %p216 = por %p214, %p215
    %p217 = scmp.ne.s32.totalorder %s205, %s206
    %p218 = scmp.eq.s32.totalorder %s19, 1
    %p219 = por %p217, %p218
    %p221 = scmp.ne.s32.totalorder %s206, %s220
    %p222 = scmp.eq.s32.totalorder %s19, 0
    %p223 = por %p221, %p222
    %s224 = ssub.s32 %s20, %s39
    %s225 = ssub.s32 %s21, %s35
    %s226 = sor.u32 %s224, %s225
    %p227 = scmp.eq.s32.totalorder %s226, 0
    %s229 = sadd.s32 %s228, 1
    %s230 = scalar_select %p227, %s228, %s229
    %p233 = pneg %p227
    %p234 = scmp.eq.s32.totalorder %s13, 1
    %p235 = por %p233, %p234
    %p236 = scmp.ne.s32.totalorder %s228, %s231
    %p237 = scmp.eq.s32.totalorder %s13, 0
    %p238 = por %p236, %p237
    %p239 = scmp.ne.s32.totalorder %s228, %s231
    %p240 = scmp.eq.s32.totalorder %s18, 1
    %p241 = por %p239, %p240
    %p242 = scmp.ne.s32.totalorder %s231, %s232
    %p243 = scmp.eq.s32.totalorder %s18, 0
    %p244 = por %p242, %p243
    %p245 = scmp.ne.s32.totalorder %s231, %s232
    %p246 = scmp.eq.s32.totalorder %s19, 1
    %p247 = por %p245, %p246
    %p249 = scmp.ne.s32.totalorder %s232, %s248
    %p250 = scmp.eq.s32.totalorder %s19, 0
    %p251 = por %p249, %p250
    %p252 = scmp.le.s32.totalorder 1, %s13
    %p253 = scmp.lt.s32.totalorder %s13, 3
    %p254 = pnand %p252, %p253
    %p255 = pneg %p254
    // Predicated region
    $region9: #{bioformer_block.8} parent=5 // pred_check
      _
    $region10: #{bioformer_block.8} parent=5 // pred_check_branch
      %257 = sbr.rel (%p254) target = $region12
    $region11: #{bioformer_block.8} parent=5 // pred_region
      %s258 = ssub.s32 %s13, 1
      // Predicated region
      $region13: #{bioformer_block.8} parent=11 // pred_check
        %p259 = pneg %p195
      $region14: #{bioformer_block.8} parent=11 // pred_check_branch
        %261 = sbr.rel (%p259) target = $region16
      $region15: #{bioformer_block.8} parent=11 // pred_region
        _
      $region16: #{bioformer_block.8} parent=11 // pred_fallthru
        _
      // Predicated region
      $region17: #{bioformer_block.8} parent=11 // pred_check
        %p262 = pneg %p216
      $region18: #{bioformer_block.8} parent=11 // pred_check_branch
        %264 = sbr.rel (%p262) target = $region20
      $region19: #{bioformer_block.8} parent=11 // pred_region
        _
      $region20: #{bioformer_block.8} parent=11 // pred_fallthru
        _
    $region12: #{bioformer_block.8} parent=5 // pred_fallthru
      _
    %p265 = scmp.lt.s32.totalorder %s13, 2
    // Predicated region
    $region21: #{bioformer_block.8} parent=5 // pred_check
      %p266 = pneg %p265
    $region22: #{bioformer_block.8} parent=5 // pred_check_branch
      %268 = sbr.rel (%p266) target = $region24
    $region23: #{bioformer_block.8} parent=5 // pred_region
      // Predicated region
      $region25: #{bioformer_block.8} parent=23 // pred_check
        %p269 = pneg %p54
      $region26: #{bioformer_block.8} parent=23 // pred_check_branch
        %271 = sbr.rel (%p269) target = $region28
      $region27: #{bioformer_block.8} parent=23 // pred_region
        %p272 = scmp.lt.s32.totalorder %s20, 1
        %s273 = scalar_select %p272, %s20, 1
        %p274 = scmp.lt.s32.totalorder %s21, 0
        %s275 = scalar_select %p274, %s21, 0
        %s276 = sadd.s32 %s275, %s273
        %s277 = smul.addr %s276, 8
        %s278 = scalar_lea.vmem %s0, %s277
      $region28: #{bioformer_block.8} parent=23 // pred_fallthru
        _
      // Predicated region
      $region29: #{bioformer_block.8} parent=23 // pred_check
        %p279 = pneg %p82
      $region30: #{bioformer_block.8} parent=23 // pred_check_branch
        %281 = sbr.rel (%p279) target = $region32
      $region31: #{bioformer_block.8} parent=23 // pred_region
        %p282 = scmp.lt.s32.totalorder %s20, 1
        %s283 = scalar_select %p282, %s20, 1
        %p284 = scmp.lt.s32.totalorder %s21, 0
        %s285 = scalar_select %p284, %s21, 0
        %s286 = smul.addr %s283, 4
        %s287 = sadd.s32 %s285, %s286
        %s288 = smul.addr %s287, 8
        %s289 = scalar_lea.vmem %s1, %s288
      $region32: #{bioformer_block.8} parent=23 // pred_fallthru
        _
      // Predicated region
      $region33: #{bioformer_block.8} parent=23 // pred_check
        %p290 = pneg %p110
      $region34: #{bioformer_block.8} parent=23 // pred_check_branch
        %292 = sbr.rel (%p290) target = $region36
      $region35: #{bioformer_block.8} parent=23 // pred_region
        %p293 = scmp.lt.s32.totalorder %s20, 1
        %s294 = scalar_select %p293, %s20, 1
        %p295 = scmp.lt.s32.totalorder %s22, 0
        %s296 = scalar_select %p295, %s22, 0
        %s297 = smul.addr %s294, 4
        %s298 = sadd.s32 %s296, %s297
        %s299 = smul.addr %s298, 8
        %s300 = scalar_lea.vmem %s2, %s299
      $region36: #{bioformer_block.8} parent=23 // pred_fallthru
        _
      // Predicated region
      $region37: #{bioformer_block.8} parent=23 // pred_check
        %p301 = pneg %p138
      $region38: #{bioformer_block.8} parent=23 // pred_check_branch
        %303 = sbr.rel (%p301) target = $region40
      $region39: #{bioformer_block.8} parent=23 // pred_region
        %p304 = scmp.lt.s32.totalorder %s20, 1
        %s305 = scalar_select %p304, %s20, 1
        %p306 = scmp.lt.s32.totalorder %s22, 0
        %s307 = scalar_select %p306, %s22, 0
        %s308 = smul.addr %s305, 4
        %s309 = sadd.s32 %s307, %s308
        %s310 = smul.addr %s309, 8
        %s311 = scalar_lea.vmem %s3, %s310
      $region40: #{bioformer_block.8} parent=23 // pred_fallthru
        _
      // Predicated region
      $region41: #{bioformer_block.8} parent=23 // pred_check
        %p312 = pneg %p168
      $region42: #{bioformer_block.8} parent=23 // pred_check_branch
        %314 = sbr.rel (%p312) target = $region44
      $region43: #{bioformer_block.8} parent=23 // pred_region
        %p315 = scmp.lt.s32.totalorder %s20, 1
        %s316 = scalar_select %p315, %s20, 1
        %p317 = scmp.lt.s32.totalorder %s21, 0
        %s318 = scalar_select %p317, %s21, 0
        %p319 = scmp.lt.s32.totalorder %s22, 0
        %s320 = scalar_select %p319, %s22, 0
        %s321 = sadd.s32 %s320, %s318
        %s322 = smul.addr %s316, 4
        %s323 = sadd.s32 %s321, %s322
        %s324 = smul.addr %s323, 4
        %s325 = scalar_lea.vmem %s4, %s324
      $region44: #{bioformer_block.8} parent=23 // pred_fallthru
        _
    $region24: #{bioformer_block.8} parent=5 // pred_fallthru
      _
    %p326 = scmp.le.s32.totalorder 1, %s13
    %p327 = scmp.lt.s32.totalorder %s13, 3
    %p328 = pnand %p326, %p327
    %p329 = pneg %p328
    // Predicated region
    $region45: #{bioformer_block.8} parent=5 // pred_check
      _
    $region46: #{bioformer_block.8} parent=5 // pred_check_branch
      %331 = sbr.rel (%p328) target = $region48
    $region47: #{bioformer_block.8} parent=5 // pred_region
      %s332 = ssub.s32 %s13, 1
      %p333 = scmp.lt.s32.totalorder %s23, 1
      %s334 = scalar_select %p333, %s23, 1
      %p335 = scmp.lt.s32.totalorder %s24, 0
      %s336 = scalar_select %p335, %s24, 0
      %s337 = sadd.s32 %s336, %s334
      %s338 = smul.addr %s337, 8
      %s339 = scalar_lea.vmem %s0, %s338
      %p340 = pneg %p60
      %p341 = pneg %p57
      %p342 = scmp.lt.s32.totalorder %s23, 1
      %s343 = scalar_select %p342, %s23, 1
      %p344 = scmp.lt.s32.totalorder %s24, 0
      %s345 = scalar_select %p344, %s24, 0
      %s346 = smul.addr %s343, 4
      %s347 = sadd.s32 %s345, %s346
      %s348 = smul.addr %s347, 8
      %s349 = scalar_lea.vmem %s1, %s348
      %p350 = pneg %p88
      %p351 = pneg %p85
      %p352 = scmp.lt.s32.totalorder %s23, 1
      %s353 = scalar_select %p352, %s23, 1
      %p354 = scmp.lt.s32.totalorder %s25, 0
      %s355 = scalar_select %p354, %s25, 0
      %s356 = smul.addr %s353, 4
      %s357 = sadd.s32 %s355, %s356
      %s358 = smul.addr %s357, 8
      %s359 = scalar_lea.vmem %s2, %s358
      %p360 = pneg %p116
      %p361 = pneg %p113
      %p362 = scmp.lt.s32.totalorder %s23, 1
      %s363 = scalar_select %p362, %s23, 1
      %p364 = scmp.lt.s32.totalorder %s25, 0
      %s365 = scalar_select %p364, %s25, 0
      %s366 = smul.addr %s363, 4
      %s367 = sadd.s32 %s365, %s366
      %s368 = smul.addr %s367, 8
      %s369 = scalar_lea.vmem %s3, %s368
      %p370 = pneg %p144
      %p371 = pneg %p141
      %p372 = scmp.lt.s32.totalorder %s23, 1
      %s373 = scalar_select %p372, %s23, 1
      %p374 = scmp.lt.s32.totalorder %s24, 0
      %s375 = scalar_select %p374, %s24, 0
      %p376 = scmp.lt.s32.totalorder %s25, 0
      %s377 = scalar_select %p376, %s25, 0
      %s378 = sadd.s32 %s377, %s375
      %s379 = smul.addr %s373, 4
      %s380 = sadd.s32 %s378, %s379
      %s381 = smul.addr %s380, 4
      %s382 = scalar_lea.vmem %s4, %s381
      %p383 = pneg %p174
      %p384 = pneg %p171
      %p385 = pneg %p195
      %p386 = pneg %p192
      %p387 = pneg %p216
      %p388 = pneg %p213
      %p389 = pneg %p244
      %p390 = pneg %p241
      %p391 = scmp.lt.s32.totalorder %s23, 1
      %s392 = scalar_select %p391, %s23, 1
      %p393 = scmp.lt.s32.totalorder %s24, 0
      %s394 = scalar_select %p393, %s24, 0
      %s395 = sadd.s32 %s394, %s392
      %s396 = smul.addr %s395, 8
      %s397 = scalar_lea.vmem %s7, %s396
      %p398 = scmp.lt.s32.totalorder %s23, 1
      %s399 = scalar_select %p398, %s23, 1
      %p400 = scmp.lt.s32.totalorder %s24, 0
      %s401 = scalar_select %p400, %s24, 0
      %s402 = sadd.s32 %s401, %s399
      %s403 = smul.addr %s402, 8
      %s404 = scalar_lea.vmem %s0, %s403
      %p405 = scmp.lt.s32.totalorder %s23, 1
      %s406 = scalar_select %p405, %s23, 1
      %p407 = scmp.lt.s32.totalorder %s24, 0
      %s408 = scalar_select %p407, %s24, 0
      %s409 = smul.addr %s406, 4
      %s410 = sadd.s32 %s408, %s409
      %s411 = smul.addr %s410, 8
      %s412 = scalar_lea.vmem %s1, %s411
      %p413 = scmp.lt.s32.totalorder %s23, 1
      %s414 = scalar_select %p413, %s23, 1
      %p415 = scmp.lt.s32.totalorder %s25, 0
      %s416 = scalar_select %p415, %s25, 0
      %s417 = smul.addr %s414, 4
      %s418 = sadd.s32 %s416, %s417
      %s419 = smul.addr %s418, 8
      %s420 = scalar_lea.vmem %s2, %s419
      %p421 = scmp.lt.s32.totalorder %s23, 1
      %s422 = scalar_select %p421, %s23, 1
      %p423 = scmp.lt.s32.totalorder %s25, 0
      %s424 = scalar_select %p423, %s25, 0
      %s425 = smul.addr %s422, 4
      %s426 = sadd.s32 %s424, %s425
      %s427 = smul.addr %s426, 8
      %s428 = scalar_lea.vmem %s3, %s427
      %p429 = scmp.lt.s32.totalorder %s23, 1
      %s430 = scalar_select %p429, %s23, 1
      %p431 = scmp.lt.s32.totalorder %s24, 0
      %s432 = scalar_select %p431, %s24, 0
      %p433 = scmp.lt.s32.totalorder %s25, 0
      %s434 = scalar_select %p433, %s25, 0
      %s435 = sadd.s32 %s434, %s432
      %s436 = smul.addr %s430, 4
      %s437 = sadd.s32 %s435, %s436
      %s438 = smul.addr %s437, 4
      %s439 = scalar_lea.vmem %s4, %s438
      %p440 = scmp.lt.s32.totalorder %s23, 1
      %s441 = scalar_select %p440, %s23, 1
      %p442 = scmp.lt.s32.totalorder %s24, 0
      %s443 = scalar_select %p442, %s24, 0
      %s444 = sadd.s32 %s443, %s441
      %s445 = smul.addr %s444, 8
      %s446 = scalar_lea.vmem %s7, %s445
      %p447 = scmp.eq.s32.totalorder %s25, 0
      // Predicated region
      $region49: #{bioformer_block.8} parent=47 // pred_check
        %p448 = pneg %p447
      $region50: #{bioformer_block.8} parent=47 // pred_check_branch
        %450 = sbr.rel (%p448) target = $region52
      $region51: #{bioformer_block.8} parent=47 // pred_region
        %vm451 = vcmask 7168
        %452 = vst.msk [vmem:[#allocation2] sm:$0xff] %vm451, -1e+30
        %453 = vst.msk [vmem:[#allocation2 + $0x8] sm:$0xff] %vm451, -1e+30
        %454 = vst.msk [vmem:[#allocation2 + $0x10] sm:$0xff] %vm451, -1e+30
        %455 = vst.msk [vmem:[#allocation2 + $0x18] sm:$0xff] %vm451, -1e+30
        %456 = vst.msk [vmem:[#allocation3] sm:$0xff] %vm451, 0.0
        %457 = vst.msk [vmem:[#allocation3 + $0x8] sm:$0xff] %vm451, 0.0
        %458 = vst.msk [vmem:[#allocation3 + $0x10] sm:$0xff] %vm451, 0.0
        %459 = vst.msk [vmem:[#allocation3 + $0x18] sm:$0xff] %vm451, 0.0
        %vm460 = vcmask 31744
        %461 = vst.msk [vmem:[#allocation4] sm:$0xff] %vm460, 0.0
        %462 = vst.msk [vmem:[#allocation4 + $0x8] sm:$0xff] %vm460, 0.0
        %463 = vst.msk [vmem:[#allocation4 + $0x10] sm:$0xff] %vm460, 0.0
        %464 = vst.msk [vmem:[#allocation4 + $0x18] sm:$0xff] %vm460, 0.0
      $region52: #{bioformer_block.8} parent=47 // pred_fallthru
        _
      %v465 = vld [vmem:[%s412] sm:$0xff]
      %v466 = vld [vmem:[%s420] sm:$0xff]
      %v467 = vld [vmem:[%s428] sm:$0xff]
      %v468 = vld [vmem:[%s439] sm:$0xf]
      %v469 = vunpack.c.l.bf16 %v468
      %vm470 = vcmask 31744
      %v472 = vsel %vm470, %v465, 0
      %v475 = vsel %vm470, %v466, 0
      %477 = vmatpush.xpose.msra.mxu0 0.0
      %478 = vmatpush.xpose.msra.mxu0 0.0
      %479 = vmatpush.xpose.msra.mxu0 0.0
      %480 = vmatpush.xpose.msra.mxu0 0.0
      %481 = vmatpush.xpose.msra.mxu0 0.0
      %482 = vmatpush.xpose.msra.mxu0 0.0
      %483 = vmatpush.xpose.msra.mxu0 0.0
      %484 = vmatpush.xpose.msra.mxu0 0.0
      %485 = vmatpush.xpose.msra.mxu0 0.0
      %486 = vmatpush.xpose.msra.mxu0 0.0
      %487 = vmatpush.xpose.msra.mxu0 0.0
      %488 = vmatpush.xpose.msra.mxu0 0.0
      %489 = vmatpush.xpose.msra.mxu0 0.0
      %490 = vmatpush.xpose.msra.mxu0 0.0
      %491 = vmatpush.xpose.msra.mxu0 0.0
      %492 = vmatpush.xpose.msra.mxu0 %v475
      %493 = vmatmul.f32.gmra.mxu0 %v472
      %v494 = vpop.f32.mrf.mxu0
      %v495 = vadd.f32 %v469, %v494
      %496 = vdwg.mxu0
      %v497 = vld [vmem:[#allocation2] sm:$0xff]
      %vm498 = vcmask 64512
      %v499 = vsel %vm498, %v495, -inf
      %500 = vmax.xlane.f32.xlu0 %v499
      %v501 = vpop.xlane.xlu0 %500
      %v502 = vmax.f32 %v497, %v501
      %v503 = vsub.f32 %v497, %v502
      %v504 = vmul.f32 %v503, 1.442695
      %v505 = vpow.pop %v504
      %507 = vset.pattern.permute.xlu0 0
      %508 = vperm.xlu0 %507, %v502
      %v509 = vpop.permute.xlu0 %508
      %v511 = vsub.f32 %v495, %v509
      %v512 = vmul.f32 %v511, 1.442695
      %v513 = vpow.pop %v512
      %v514 = vld [vmem:[#allocation3] sm:$0xff]
      %v515 = vmul.f32 %v505, %v514
      %v516 = vsel %vm498, %v513, 0.0
      %517 = vadd.xlane.f32.xlu0 %v516
      %v518 = vpop.xlane.xlu0 %517
      %v519 = vadd.f32 %v515, %v518
      %vm520 = vcmask 7168
      %521 = vst.msk [vmem:[#allocation3] sm:$0xff] %vm520, %v519
      %v522 = vld [vmem:[#allocation4] sm:$0xff]
      %524 = vset.pattern.permute.xlu0 0
      %525 = vperm.xlu0 %524, %v505
      %v526 = vpop.permute.xlu0 %525
      %v528 = vmul.f32 %v526, %v522
      %v530 = vsel %vm498, %v513, 0
      %532 = vmatpush.msra.mxu0 0.0
      %533 = vmatpush.msra.mxu0 0.0
      %534 = vmatpush.msra.mxu0 0.0
      %535 = vmatpush.msra.mxu0 0.0
      %536 = vmatpush.msra.mxu0 0.0
      %537 = vmatpush.msra.mxu0 0.0
      %538 = vmatpush.msra.mxu0 0.0
      %539 = vmatpush.msra.mxu0 0.0
      %540 = vmatpush.msra.mxu0 0.0
      %541 = vmatpush.msra.mxu0 0.0
      %542 = vmatpush.msra.mxu0 0.0
      %543 = vmatpush.msra.mxu0 0.0
      %544 = vmatpush.msra.mxu0 0.0
      %545 = vmatpush.msra.mxu0 0.0
      %546 = vmatpush.msra.mxu0 0.0
      %547 = vmatpush.msra.mxu0 %v467
      %548 = vmatmul.f32.gmra.mxu0 %v530
      %v549 = vpop.f32.mrf.mxu0
      %v550 = vadd.f32 0.0, %v549
      %551 = vdwg.mxu0
      %v552 = vadd.f32 %v528, %v550
      %553 = vst.msk [vmem:[#allocation4] sm:$0xff] %vm470, %v552
      %554 = vst.msk [vmem:[#allocation2] sm:$0xff] %vm520, %v502
      %s555 = scalar_lea.vmem %s412, 8
      %v556 = vld [vmem:[%s555] sm:$0xff]
      %s557 = scalar_lea.vmem %s420, 8
      %v558 = vld [vmem:[%s557] sm:$0xff]
      %s559 = scalar_lea.vmem %s428, 8
      %v560 = vld [vmem:[%s559] sm:$0xff]
      %s561 = scalar_lea.vmem %s439, 4
      %v562 = vld [vmem:[%s561] sm:$0xf]
      %v563 = vunpack.c.l.bf16 %v562
      %v565 = vsel %vm470, %v556, 0
      %v568 = vsel %vm470, %v558, 0
      %570 = vmatpush.xpose.msra.mxu0 0.0
      %571 = vmatpush.xpose.msra.mxu0 0.0
      %572 = vmatpush.xpose.msra.mxu0 0.0
      %573 = vmatpush.xpose.msra.mxu0 0.0
      %574 = vmatpush.xpose.msra.mxu0 0.0
      %575 = vmatpush.xpose.msra.mxu0 0.0
      %576 = vmatpush.xpose.msra.mxu0 0.0
      %577 = vmatpush.xpose.msra.mxu0 0.0
      %578 = vmatpush.xpose.msra.mxu0 0.0
      %579 = vmatpush.xpose.msra.mxu0 0.0
      %580 = vmatpush.xpose.msra.mxu0 0.0
      %581 = vmatpush.xpose.msra.mxu0 0.0
      %582 = vmatpush.xpose.msra.mxu0 0.0
      %583 = vmatpush.xpose.msra.mxu0 0.0
      %584 = vmatpush.xpose.msra.mxu0 0.0
      %585 = vmatpush.xpose.msra.mxu0 %v568
      %586 = vmatmul.f32.gmra.mxu0 %v565
      %v587 = vpop.f32.mrf.mxu0
      %v588 = vadd.f32 %v563, %v587
      %589 = vdwg.mxu0
      %s590 = scalar_lea.vmem [#allocation2], 8
      %v591 = vld [vmem:[%s590] sm:$0xff]
      %v592 = vsel %vm498, %v588, -inf
      %593 = vmax.xlane.f32.xlu0 %v592
      %v594 = vpop.xlane.xlu0 %593
      %v595 = vmax.f32 %v591, %v594
      %v596 = vsub.f32 %v591, %v595
      %v597 = vmul.f32 %v596, 1.442695
      %v598 = vpow.pop %v597
      %600 = vset.pattern.permute.xlu0 0
      %601 = vperm.xlu0 %600, %v595
      %v602 = vpop.permute.xlu0 %601
      %v604 = vsub.f32 %v588, %v602
      %v605 = vmul.f32 %v604, 1.442695
      %v606 = vpow.pop %v605
      %s607 = scalar_lea.vmem [#allocation3], 8
      %v608 = vld [vmem:[%s607] sm:$0xff]
      %v609 = vmul.f32 %v598, %v608
      %v610 = vsel %vm498, %v606, 0.0
      %611 = vadd.xlane.f32.xlu0 %v610
      %v612 = vpop.xlane.xlu0 %611
      %v613 = vadd.f32 %v609, %v612
      %614 = vst.msk [vmem:[%s607] sm:$0xff] %vm520, %v613
      %s615 = scalar_lea.vmem [#allocation4], 8
      %v616 = vld [vmem:[%s615] sm:$0xff]
      %618 = vset.pattern.permute.xlu0 0
      %619 = vperm.xlu0 %618, %v598
      %v620 = vpop.permute.xlu0 %619
      %v622 = vmul.f32 %v620, %v616
      %v624 = vsel %vm498, %v606, 0
      %626 = vmatpush.msra.mxu0 0.0
      %627 = vmatpush.msra.mxu0 0.0
      %628 = vmatpush.msra.mxu0 0.0
      %629 = vmatpush.msra.mxu0 0.0
      %630 = vmatpush.msra.mxu0 0.0
      %631 = vmatpush.msra.mxu0 0.0
      %632 = vmatpush.msra.mxu0 0.0
      %633 = vmatpush.msra.mxu0 0.0
      %634 = vmatpush.msra.mxu0 0.0
      %635 = vmatpush.msra.mxu0 0.0
      %636 = vmatpush.msra.mxu0 0.0
      %637 = vmatpush.msra.mxu0 0.0
      %638 = vmatpush.msra.mxu0 0.0
      %639 = vmatpush.msra.mxu0 0.0
      %640 = vmatpush.msra.mxu0 0.0
      %641 = vmatpush.msra.mxu0 %v560
      %642 = vmatmul.f32.gmra.mxu0 %v624
      %v643 = vpop.f32.mrf.mxu0
      %v644 = vadd.f32 0.0, %v643
      %645 = vdwg.mxu0
      %v646 = vadd.f32 %v622, %v644
      %647 = vst.msk [vmem:[%s615] sm:$0xff] %vm470, %v646
      %648 = vst.msk [vmem:[%s590] sm:$0xff] %vm520, %v595
      %s649 = scalar_lea.vmem %s412, 16
      %v650 = vld [vmem:[%s649] sm:$0xff]
      %s651 = scalar_lea.vmem %s420, 16
      %v652 = vld [vmem:[%s651] sm:$0xff]
      %s653 = scalar_lea.vmem %s428, 16
      %v654 = vld [vmem:[%s653] sm:$0xff]
      %s655 = scalar_lea.vmem %s439, 8
      %v656 = vld [vmem:[%s655] sm:$0xf]
      %v657 = vunpack.c.l.bf16 %v656
      %v659 = vsel %vm470, %v650, 0
      %v662 = vsel %vm470, %v652, 0
      %664 = vmatpush.xpose.msra.mxu0 0.0
      %665 = vmatpush.xpose.msra.mxu0 0.0
      %666 = vmatpush.xpose.msra.mxu0 0.0
      %667 = vmatpush.xpose.msra.mxu0 0.0
      %668 = vmatpush.xpose.msra.mxu0 0.0
      %669 = vmatpush.xpose.msra.mxu0 0.0
      %670 = vmatpush.xpose.msra.mxu0 0.0
      %671 = vmatpush.xpose.msra.mxu0 0.0
      %672 = vmatpush.xpose.msra.mxu0 0.0
      %673 = vmatpush.xpose.msra.mxu0 0.0
      %674 = vmatpush.xpose.msra.mxu0 0.0
      %675 = vmatpush.xpose.msra.mxu0 0.0
      %676 = vmatpush.xpose.msra.mxu0 0.0
      %677 = vmatpush.xpose.msra.mxu0 0.0
      %678 = vmatpush.xpose.msra.mxu0 0.0
      %679 = vmatpush.xpose.msra.mxu0 %v662
      %680 = vmatmul.f32.gmra.mxu0 %v659
      %v681 = vpop.f32.mrf.mxu0
      %v682 = vadd.f32 %v657, %v681
      %683 = vdwg.mxu0
      %s684 = scalar_lea.vmem [#allocation2], 16
      %v685 = vld [vmem:[%s684] sm:$0xff]
      %v686 = vsel %vm498, %v682, -inf
      %687 = vmax.xlane.f32.xlu0 %v686
      %v688 = vpop.xlane.xlu0 %687
      %v689 = vmax.f32 %v685, %v688
      %v690 = vsub.f32 %v685, %v689
      %v691 = vmul.f32 %v690, 1.442695
      %v692 = vpow.pop %v691
      %694 = vset.pattern.permute.xlu0 0
      %695 = vperm.xlu0 %694, %v689
      %v696 = vpop.permute.xlu0 %695
      %v698 = vsub.f32 %v682, %v696
      %v699 = vmul.f32 %v698, 1.442695
      %v700 = vpow.pop %v699
      %s701 = scalar_lea.vmem [#allocation3], 16
      %v702 = vld [vmem:[%s701] sm:$0xff]
      %v703 = vmul.f32 %v692, %v702
      %v704 = vsel %vm498, %v700, 0.0
      %705 = vadd.xlane.f32.xlu0 %v704
      %v706 = vpop.xlane.xlu0 %705
      %v707 = vadd.f32 %v703, %v706
      %708 = vst.msk [vmem:[%s701] sm:$0xff] %vm520, %v707
      %s709 = scalar_lea.vmem [#allocation4], 16
      %v710 = vld [vmem:[%s709] sm:$0xff]
      %712 = vset.pattern.permute.xlu0 0
      %713 = vperm.xlu0 %712, %v692
      %v714 = vpop.permute.xlu0 %713
      %v716 = vmul.f32 %v714, %v710
      %v718 = vsel %vm498, %v700, 0
      %720 = vmatpush.msra.mxu0 0.0
      %721 = vmatpush.msra.mxu0 0.0
      %722 = vmatpush.msra.mxu0 0.0
      %723 = vmatpush.msra.mxu0 0.0
      %724 = vmatpush.msra.mxu0 0.0
      %725 = vmatpush.msra.mxu0 0.0
      %726 = vmatpush.msra.mxu0 0.0
      %727 = vmatpush.msra.mxu0 0.0
      %728 = vmatpush.msra.mxu0 0.0
      %729 = vmatpush.msra.mxu0 0.0
      %730 = vmatpush.msra.mxu0 0.0
      %731 = vmatpush.msra.mxu0 0.0
      %732 = vmatpush.msra.mxu0 0.0
      %733 = vmatpush.msra.mxu0 0.0
      %734 = vmatpush.msra.mxu0 0.0
      %735 = vmatpush.msra.mxu0 %v654
      %736 = vmatmul.f32.gmra.mxu0 %v718
      %v737 = vpop.f32.mrf.mxu0
      %v738 = vadd.f32 0.0, %v737
      %739 = vdwg.mxu0
      %v740 = vadd.f32 %v716, %v738
      %741 = vst.msk [vmem:[%s709] sm:$0xff] %vm470, %v740
      %742 = vst.msk [vmem:[%s684] sm:$0xff] %vm520, %v689
      %s743 = scalar_lea.vmem %s412, 24
      %v744 = vld [vmem:[%s743] sm:$0xff]
      %s745 = scalar_lea.vmem %s420, 24
      %v746 = vld [vmem:[%s745] sm:$0xff]
      %s747 = scalar_lea.vmem %s428, 24
      %v748 = vld [vmem:[%s747] sm:$0xff]
      %s749 = scalar_lea.vmem %s439, 12
      %v750 = vld [vmem:[%s749] sm:$0xf]
      %v751 = vunpack.c.l.bf16 %v750
      %v753 = vsel %vm470, %v744, 0
      %v756 = vsel %vm470, %v746, 0
      %758 = vmatpush.xpose.msra.mxu0 0.0
      %759 = vmatpush.xpose.msra.mxu0 0.0
      %760 = vmatpush.xpose.msra.mxu0 0.0
      %761 = vmatpush.xpose.msra.mxu0 0.0
      %762 = vmatpush.xpose.msra.mxu0 0.0
      %763 = vmatpush.xpose.msra.mxu0 0.0
      %764 = vmatpush.xpose.msra.mxu0 0.0
      %765 = vmatpush.xpose.msra.mxu0 0.0
      %766 = vmatpush.xpose.msra.mxu0 0.0
      %767 = vmatpush.xpose.msra.mxu0 0.0
      %768 = vmatpush.xpose.msra.mxu0 0.0
      %769 = vmatpush.xpose.msra.mxu0 0.0
      %770 = vmatpush.xpose.msra.mxu0 0.0
      %771 = vmatpush.xpose.msra.mxu0 0.0
      %772 = vmatpush.xpose.msra.mxu0 0.0
      %773 = vmatpush.xpose.msra.mxu0 %v756
      %774 = vmatmul.f32.gmra.mxu0 %v753
      %v775 = vpop.f32.mrf.mxu0
      %v776 = vadd.f32 %v751, %v775
      %777 = vdwg.mxu0
      %s778 = scalar_lea.vmem [#allocation2], 24
      %v779 = vld [vmem:[%s778] sm:$0xff]
      %v780 = vsel %vm498, %v776, -inf
      %781 = vmax.xlane.f32.xlu0 %v780
      %v782 = vpop.xlane.xlu0 %781
      %v783 = vmax.f32 %v779, %v782
      %v784 = vsub.f32 %v779, %v783
      %v785 = vmul.f32 %v784, 1.442695
      %v786 = vpow.pop %v785
      %788 = vset.pattern.permute.xlu0 0
      %789 = vperm.xlu0 %788, %v783
      %v790 = vpop.permute.xlu0 %789
      %v792 = vsub.f32 %v776, %v790
      %v793 = vmul.f32 %v792, 1.442695
      %v794 = vpow.pop %v793
      %s795 = scalar_lea.vmem [#allocation3], 24
      %v796 = vld [vmem:[%s795] sm:$0xff]
      %v797 = vmul.f32 %v786, %v796
      %v798 = vsel %vm498, %v794, 0.0
      %799 = vadd.xlane.f32.xlu0 %v798
      %v800 = vpop.xlane.xlu0 %799
      %v801 = vadd.f32 %v797, %v800
      %802 = vst.msk [vmem:[%s795] sm:$0xff] %vm520, %v801
      %s803 = scalar_lea.vmem [#allocation4], 24
      %v804 = vld [vmem:[%s803] sm:$0xff]
      %806 = vset.pattern.permute.xlu0 0
      %807 = vperm.xlu0 %806, %v786
      %v808 = vpop.permute.xlu0 %807
      %v810 = vmul.f32 %v808, %v804
      %v812 = vsel %vm498, %v794, 0
      %814 = vmatpush.msra.mxu0 0.0
      %815 = vmatpush.msra.mxu0 0.0
      %816 = vmatpush.msra.mxu0 0.0
      %817 = vmatpush.msra.mxu0 0.0
      %818 = vmatpush.msra.mxu0 0.0
      %819 = vmatpush.msra.mxu0 0.0
      %820 = vmatpush.msra.mxu0 0.0
      %821 = vmatpush.msra.mxu0 0.0
      %822 = vmatpush.msra.mxu0 0.0
      %823 = vmatpush.msra.mxu0 0.0
      %824 = vmatpush.msra.mxu0 0.0
      %825 = vmatpush.msra.mxu0 0.0
      %826 = vmatpush.msra.mxu0 0.0
      %827 = vmatpush.msra.mxu0 0.0
      %828 = vmatpush.msra.mxu0 0.0
      %829 = vmatpush.msra.mxu0 %v748
      %830 = vmatmul.f32.gmra.mxu0 %v812
      %v831 = vpop.f32.mrf.mxu0
      %v832 = vadd.f32 0.0, %v831
      %833 = vdwg.mxu0
      %v834 = vadd.f32 %v810, %v832
      %835 = vst.msk [vmem:[%s803] sm:$0xff] %vm470, %v834
      %836 = vst.msk [vmem:[%s778] sm:$0xff] %vm520, %v783
      // Predicated region
      $region53: #{bioformer_block.8} parent=47 // pred_check
        %p837 = pneg %p447
      $region54: #{bioformer_block.8} parent=47 // pred_check_branch
        %839 = sbr.rel (%p837) target = $region56
      $region55: #{bioformer_block.8} parent=47 // pred_region
        %v840 = vld [vmem:[%s404] sm:$0xff]
        %v841 = vld [vmem:[%s6] sm:$0x1]
        %v843 = vperm.slane %v841, 0
        %v845 = vadd.f32 %v840, %v843
        %v846 = vld [vmem:[#allocation4] sm:$0xff]
        %v847 = vld [vmem:[#allocation3] sm:$0xff]
        %v848 = vrcp.pop %v847
        %850 = vset.pattern.permute.xlu0 0
        %851 = vperm.xlu0 %850, %v848
        %v852 = vpop.permute.xlu0 %851
        %v854 = vmul.f32 %v846, %v852
        %v855 = vld [vmem:[%s5] sm:$0xf]
        %v857 = vsel %vm470, %v854, 0
        %vm859 = vcmask 1043456
        %v861 = vsel %vm859, %v855, 0
        %863 = vmatpush.msra.mxu0 0.0
        %864 = vmatpush.msra.mxu0 0.0
        %865 = vmatpush.msra.mxu0 0.0
        %866 = vmatpush.msra.mxu0 0.0
        %867 = vmatpush.msra.mxu0 0.0
        %868 = vmatpush.msra.mxu0 0.0
        %869 = vmatpush.msra.mxu0 0.0
        %870 = vmatpush.msra.mxu0 0.0
        %871 = vmatpush.msra.mxu0 0.0
        %872 = vmatpush.msra.mxu0 0.0
        %873 = vmatpush.msra.mxu0 0.0
        %874 = vmatpush.msra.mxu0 0.0
        %875 = vmatpush.msra.mxu0 0.0
        %876 = vmatpush.msra.mxu0 0.0
        %877 = vmatpush.msra.mxu0 0.0
        %878 = vmatpush.msra.mxu0 %v861
        %879 = vmatmul.f32.gmra.mxu0 %v857
        %v880 = vpop.f32.mrf.mxu0
        %v881 = vadd.f32 0.0, %v880
        %882 = vdwg.mxu0
        %v883 = vadd.f32 %v845, %v881
        %v884 = vld [vmem:[%s615] sm:$0xff]
        %v885 = vld [vmem:[%s607] sm:$0xff]
        %v886 = vrcp.pop %v885
        %888 = vset.pattern.permute.xlu0 0
        %889 = vperm.xlu0 %888, %v886
        %v890 = vpop.permute.xlu0 %889
        %v892 = vmul.f32 %v884, %v890
        %s893 = scalar_lea.vmem %s5, 4
        %v894 = vld [vmem:[%s893] sm:$0xf]
        %v896 = vsel %vm470, %v892, 0
        %v899 = vsel %vm859, %v894, 0
        %901 = vmatpush.msra.mxu0 0.0
        %902 = vmatpush.msra.mxu0 0.0
        %903 = vmatpush.msra.mxu0 0.0
        %904 = vmatpush.msra.mxu0 0.0
        %905 = vmatpush.msra.mxu0 0.0
        %906 = vmatpush.msra.mxu0 0.0
        %907 = vmatpush.msra.mxu0 0.0
        %908 = vmatpush.msra.mxu0 0.0
        %909 = vmatpush.msra.mxu0 0.0
        %910 = vmatpush.msra.mxu0 0.0
        %911 = vmatpush.msra.mxu0 0.0
        %912 = vmatpush.msra.mxu0 0.0
        %913 = vmatpush.msra.mxu0 0.0
        %914 = vmatpush.msra.mxu0 0.0
        %915 = vmatpush.msra.mxu0 0.0
        %916 = vmatpush.msra.mxu0 %v899
        %917 = vmatmul.f32.gmra.mxu0 %v896
        %v918 = vpop.f32.mrf.mxu0
        %v919 = vadd.f32 0.0, %v918
        %920 = vdwg.mxu0
        %v921 = vadd.f32 %v883, %v919
        %v922 = vld [vmem:[%s709] sm:$0xff]
        %v923 = vld [vmem:[%s701] sm:$0xff]
        %v924 = vrcp.pop %v923
        %926 = vset.pattern.permute.xlu0 0
        %927 = vperm.xlu0 %926, %v924
        %v928 = vpop.permute.xlu0 %927
        %v930 = vmul.f32 %v922, %v928
        %s931 = scalar_lea.vmem %s5, 8
        %v932 = vld [vmem:[%s931] sm:$0xf]
        %v934 = vsel %vm470, %v930, 0
        %v937 = vsel %vm859, %v932, 0
        %939 = vmatpush.msra.mxu0 0.0
        %940 = vmatpush.msra.mxu0 0.0
        %941 = vmatpush.msra.mxu0 0.0
        %942 = vmatpush.msra.mxu0 0.0
        %943 = vmatpush.msra.mxu0 0.0
        %944 = vmatpush.msra.mxu0 0.0
        %945 = vmatpush.msra.mxu0 0.0
        %946 = vmatpush.msra.mxu0 0.0
        %947 = vmatpush.msra.mxu0 0.0
        %948 = vmatpush.msra.mxu0 0.0
        %949 = vmatpush.msra.mxu0 0.0
        %950 = vmatpush.msra.mxu0 0.0
        %951 = vmatpush.msra.mxu0 0.0
        %952 = vmatpush.msra.mxu0 0.0
        %953 = vmatpush.msra.mxu0 0.0
        %954 = vmatpush.msra.mxu0 %v937
        %955 = vmatmul.f32.gmra.mxu0 %v934
        %v956 = vpop.f32.mrf.mxu0
        %v957 = vadd.f32 0.0, %v956
        %958 = vdwg.mxu0
        %v959 = vadd.f32 %v921, %v957
        %v960 = vld [vmem:[%s803] sm:$0xff]
        %v961 = vld [vmem:[%s795] sm:$0xff]
        %v962 = vrcp.pop %v961
        %964 = vset.pattern.permute.xlu0 0
        %965 = vperm.xlu0 %964, %v962
        %v966 = vpop.permute.xlu0 %965
        %v968 = vmul.f32 %v960, %v966
        %s969 = scalar_lea.vmem %s5, 12
        %v970 = vld [vmem:[%s969] sm:$0xf]
        %v972 = vsel %vm470, %v968, 0
        %v975 = vsel %vm859, %v970, 0
        %977 = vmatpush.msra.mxu0 0.0
        %978 = vmatpush.msra.mxu0 0.0
        %979 = vmatpush.msra.mxu0 0.0
        %980 = vmatpush.msra.mxu0 0.0
        %981 = vmatpush.msra.mxu0 0.0
        %982 = vmatpush.msra.mxu0 0.0
        %983 = vmatpush.msra.mxu0 0.0
        %984 = vmatpush.msra.mxu0 0.0
        %985 = vmatpush.msra.mxu0 0.0
        %986 = vmatpush.msra.mxu0 0.0
        %987 = vmatpush.msra.mxu0 0.0
        %988 = vmatpush.msra.mxu0 0.0
        %989 = vmatpush.msra.mxu0 0.0
        %990 = vmatpush.msra.mxu0 0.0
        %991 = vmatpush.msra.mxu0 0.0
        %992 = vmatpush.msra.mxu0 %v975
        %993 = vmatmul.f32.gmra.mxu0 %v972
        %v994 = vpop.f32.mrf.mxu0
        %v995 = vadd.f32 0.0, %v994
        %996 = vdwg.mxu0
        %v997 = vadd.f32 %v959, %v995
        %vm998 = vcmask 261120
        %999 = vst.msk [vmem:[%s446] sm:$0xff] %vm998, %v997
      $region56: #{bioformer_block.8} parent=47 // pred_fallthru
        _
      %p1000 = scmp.lt.s32.totalorder %s23, 1
      %s1001 = scalar_select %p1000, %s23, 1
      %p1002 = scmp.lt.s32.totalorder %s24, 0
      %s1003 = scalar_select %p1002, %s24, 0
      %s1004 = sadd.s32 %s1003, %s1001
      %s1005 = smul.addr %s1004, 8
      %s1006 = scalar_lea.vmem %s7, %s1005
      // Predicated region
      $region57: #{bioformer_block.8} parent=47 // pred_check
        %p1007 = pneg %p241
      $region58: #{bioformer_block.8} parent=47 // pred_check_branch
        %1009 = sbr.rel (%p1007) target = $region60
      $region59: #{bioformer_block.8} parent=47 // pred_region
        _
      $region60: #{bioformer_block.8} parent=47 // pred_fallthru
        _
    $region48: #{bioformer_block.8} parent=5 // pred_fallthru
      _
    %p1010 = scmp.le.s32.totalorder 2, %s13
    // Predicated region
    $region61: #{bioformer_block.8} parent=5 // pred_check
      %p1011 = pneg %p1010
    $region62: #{bioformer_block.8} parent=5 // pred_check_branch
      %1013 = sbr.rel (%p1011) target = $region64
    $region63: #{bioformer_block.8} parent=5 // pred_region
      %s1014 = ssub.s32 %s13, 2
      // Predicated region
      $region65: #{bioformer_block.8} parent=63 // pred_check
        %p1015 = pneg %p247
      $region66: #{bioformer_block.8} parent=63 // pred_check_branch
        %1017 = sbr.rel (%p1015) target = $region68
      $region67: #{bioformer_block.8} parent=63 // pred_region
        %p1018 = scmp.lt.s32.totalorder %s26, 1
        %s1019 = scalar_select %p1018, %s26, 1
        %p1020 = scmp.lt.s32.totalorder %s27, 0
        %s1021 = scalar_select %p1020, %s27, 0
        %s1022 = sadd.s32 %s1021, %s1019
        %s1023 = smul.addr %s1022, 8
        %s1024 = scalar_lea.vmem %s7, %s1023
      $region68: #{bioformer_block.8} parent=63 // pred_fallthru
        _
    $region64: #{bioformer_block.8} parent=5 // pred_fallthru
      _
  $region6: #{bioformer_block.8} parent=0 // loop_footer
    %s17 = sadd.s32 1, %s13
  $region7: #{bioformer_block.8} parent=0 // loop_footer_branch
    %12 = sbr.rel target = $region3
  $region8: #{bioformer_block.8} parent=0 // loop_exit
    _

// kernel: tile.8
$region0: #{tile.8}
  #allocation0 [shape = 's32[1]{0}', space=sflag, size = 0x4, scoped, tag = 'scoped memory for tile.8']
  %s0 = inlined_call_operand.vmem [shape: f32[16], index: 0, kind: input, shape index: {}]
  %s1 = inlined_call_operand.vmem [shape: f32[8,16], index: 1, kind: output, shape index: {}]
  // Predicated region
  $region2: #{tile.8} parent=0 // pred_check
    _
  $region3: #{tile.8} parent=0 // pred_check_branch
    %3 = sbr.rel (0) target = $region5
  $region4: #{tile.8} parent=0 // pred_region
    _
  $region5: #{tile.8} parent=0 // pred_fallthru
    _
  %v4 = vld [vmem:[%s0] ss:$0 sm:$0xff]
  %5 = vst [vmem:[%s1] sm:$0xff] %v4

// kernel: tile.9
$region0: #{tile.9}
  %s0 = inlined_call_operand.vmem [shape: f32[8,16], index: 0, kind: input, shape index: {}]
  %s1 = inlined_call_operand.vmem [shape: f32[1,128], index: 1, kind: output, shape index: {}]
  $region1: #{tile.9} parent=0
    #allocation0 [shape = 'u8[4096]{0}', space=vmem, size = 0x1000, scoped, tag = 'scoped mem for output reshape']
    %v2 = vld [vmem:[%s0] sm:$0x1]
    %vm3 = vcmask 130048
    %4 = vst.msk [vmem:[#allocation0] sm:$0x1] %vm3, %v2
    %s5 = scalar_lea.vmem %s0, 7
    %v6 = vld [vmem:[%s5] sm:$0x1]
    %7 = vrot.lane.b32.xlu0 %v6, 112
    %v8 = vpop.permute.xlu0 %7
    %vm9 = vcmask 1048448
    %10 = vst.msk [vmem:[#allocation0] sm:$0x1] %vm9, %v8
    %s11 = scalar_lea.vmem %s0, 6
    %v12 = vld [vmem:[%s11] sm:$0x1]
    %13 = vrot.lane.b32.xlu0 %v12, 96
    %v14 = vpop.permute.xlu0 %13
    %vm15 = vcmask 917248
    %16 = vst.msk [vmem:[#allocation0] sm:$0x1] %vm15, %v14
    %s17 = scalar_lea.vmem %s0, 5
    %v18 = vld [vmem:[%s17] sm:$0x1]
    %19 = vrot.lane.b32.xlu0 %v18, 80
    %v20 = vpop.permute.xlu0 %19
    %vm21 = vcmask 786048
    %22 = vst.msk [vmem:[#allocation0] sm:$0x1] %vm21, %v20
    %s23 = scalar_lea.vmem %s0, 4
    %v24 = vld [vmem:[%s23] sm:$0x1]
    %25 = vrot.lane.b32.xlu0 %v24, 64
    %v26 = vpop.permute.xlu0 %25
    %vm27 = vcmask 654848
    %28 = vst.msk [vmem:[#allocation0] sm:$0x1] %vm27, %v26
    %s29 = scalar_lea.vmem %s0, 3
    %v30 = vld [vmem:[%s29] sm:$0x1]
    %31 = vrot.lane.b32.xlu0 %v30, 48
    %v32 = vpop.permute.xlu0 %31
    %vm33 = vcmask 523648
    %34 = vst.msk [vmem:[#allocation0] sm:$0x1] %vm33, %v32
    %s35 = scalar_lea.vmem %s0, 2
    %v36 = vld [vmem:[%s35] sm:$0x1]
    %37 = vrot.lane.b32.xlu0 %v36, 32
    %v38 = vpop.permute.xlu0 %37
    %vm39 = vcmask 392448
    %40 = vst.msk [vmem:[#allocation0] sm:$0x1] %vm39, %v38
    %s41 = scalar_lea.vmem %s0, 1
    %v42 = vld [vmem:[%s41] sm:$0x1]
    %43 = vrot.lane.b32.xlu0 %v42, 16
    %v44 = vpop.permute.xlu0 %43
    %vm45 = vcmask 261248
    %46 = vst.msk [vmem:[#allocation0] sm:$0x1] %vm45, %v44
    %s48 = ssub.s32 2, 1
    %v49 = vld [vmem:[#allocation0] sm:%s48]
    %s51 = ssub.s32 2, 1
    %52 = vst [vmem:[%s1] sm:%s51] %v49

// kernel: bioformer_block.10
$region0: #{bioformer_block.10}
  #allocation0 [shape = 'u32[]', space=smem, size = 0x4, offset = 0x4, fixed_abs, tag = 'smem constant byte address 0x4 - core index']
  #allocation1 [shape = 'u32[72,128]{1,0:T(1,128)}', space=vmem, size = 0x9000, scoped, tag = 'internal scratch']
  %s0 = inlined_call_operand.vmem [shape: f32[2,8,32], index: 0, kind: input, shape index: {}]
  %s1 = inlined_call_operand.vmem [shape: f32[1,32], index: 1, kind: input, shape index: {}]
  %s2 = inlined_call_operand.vmem [shape: f32[1,32], index: 2, kind: input, shape index: {}]
  %s3 = inlined_call_operand.vmem [shape: f32[32,32], index: 3, kind: input, shape index: {}]
  %s4 = inlined_call_operand.vmem [shape: f32[1,32], index: 4, kind: input, shape index: {}]
  %s5 = inlined_call_operand.vmem [shape: f32[2,8,32], index: 5, kind: output, shape index: {}]
  %s6 = sld [smem:[#allocation0]]
  $region53: #{bioformer_block.10} parent=0
    _
  %s8 = ssub.s32 1, %s6
  %s9 = scalar_select 0, %s8, %s6
  loop: start=0, step=1, limit=4
  $region2: #{bioformer_block.10} parent=0 // loop_pre_header
    _
  $region3: #{bioformer_block.10} parent=0 // loop_header
    %s11 = sphi 0, %s15
    %p12 = scmp.ge.s32.totalorder %s11, 4
    %s18 = sphi 0, %s30
    %s19 = sphi 0, %s26
    %s20 = sphi 0, %s18
    %s21 = sphi 0, %s19
    %s22 = sphi 0, %s20
    %s23 = sphi 0, %s21
    %s35 = sphi 0, %s37
    %s38 = sphi 0, %s35
    %s39 = sphi 0, %s38
    %s55 = sphi 0, %s39
    %s59 = sphi 0, %s59
    %s61 = sphi 0, %s59
    %s62 = sphi 0, %s61
    %s76 = sphi 0, %s62
    %s80 = sphi 0, %s80
    %s82 = sphi 0, %s80
    %s83 = sphi 0, %s82
    %s97 = sphi 0, %s83
    %s101 = sphi 0, %s101
    %s103 = sphi 0, %s101
    %s104 = sphi 0, %s103
    %s118 = sphi 0, %s104
    %s122 = sphi 0, %s122
    %s124 = sphi 0, %s122
    %s125 = sphi 0, %s124
    %s139 = sphi 0, %s125
    %s147 = sphi 0, %s149
    %s150 = sphi 0, %s147
    %s151 = sphi 0, %s150
    %s167 = sphi 0, %s151
  $region4: #{bioformer_block.10} parent=0 // loop_header_branch
    %14 = sbr.rel (%p12) target = $region8
  $region5: #{bioformer_block.10} parent=0 // loop_body
    %s16 = ssub.s32 %s11, 1
    %s17 = ssub.s32 %s11, 2
    %s24 = sadd.s32 1, %s19
    %p25 = scmp.ge.s32.totalorder %s24, 1
    %s26 = scalar_select %p25, 0, %s24
    %s27 = sadd.s32 1, %s18
    %s28 = scalar_select %p25, %s27, %s18
    %p29 = scmp.ge.s32.totalorder %s28, 2
    %s30 = scalar_select %p29, 0, %s28
    %s31 = ssub.s32 %s18, %s30
    %s32 = ssub.s32 %s19, %s26
    %s33 = sor.u32 %s31, %s32
    %p34 = scmp.eq.s32.totalorder %s33, 0
    %s36 = sadd.s32 %s35, 1
    %s37 = scalar_select %p34, %s35, %s36
    %p40 = pneg %p34
    %p41 = scmp.eq.s32.totalorder %s11, 1
    %p42 = por %p40, %p41
    %p43 = scmp.ne.s32.totalorder %s35, %s38
    %p44 = scmp.eq.s32.totalorder %s11, 0
    %p45 = por %p43, %p44
    %p46 = scmp.ne.s32.totalorder %s35, %s38
    %p47 = scmp.eq.s32.totalorder %s16, 1
    %p48 = por %p46, %p47
    %p49 = scmp.ne.s32.totalorder %s38, %s39
    %p50 = scmp.eq.s32.totalorder %s16, 0
    %p51 = por %p49, %p50
    %p52 = scmp.ne.s32.totalorder %s38, %s39
    %p53 = scmp.eq.s32.totalorder %s17, 1
    %p54 = por %p52, %p53
    %p56 = scmp.ne.s32.totalorder %s39, %s55
    %p57 = scmp.eq.s32.totalorder %s17, 0
    %p58 = por %p56, %p57
    %s60 = sadd.s32 %s59, 1
    %p63 = scmp.eq.s32.totalorder %s11, 1
    %p64 = scmp.ne.s32.totalorder %s59, %s61
    %p65 = scmp.eq.s32.totalorder %s11, 0
    %p66 = por %p64, %p65
    %p67 = scmp.ne.s32.totalorder %s59, %s61
    %p68 = scmp.eq.s32.totalorder %s16, 1
    %p69 = por %p67, %p68
    %p70 = scmp.ne.s32.totalorder %s61, %s62
    %p71 = scmp.eq.s32.totalorder %s16, 0
    %p72 = por %p70, %p71
    %p73 = scmp.ne.s32.totalorder %s61, %s62
    %p74 = scmp.eq.s32.totalorder %s17, 1
    %p75 = por %p73, %p74
    %p77 = scmp.ne.s32.totalorder %s62, %s76
    %p78 = scmp.eq.s32.totalorder %s17, 0
    %p79 = por %p77, %p78
    %s81 = sadd.s32 %s80, 1
    %p84 = scmp.eq.s32.totalorder %s11, 1
    %p85 = scmp.ne.s32.totalorder %s80, %s82
    %p86 = scmp.eq.s32.totalorder %s11, 0
    %p87 = por %p85, %p86
    %p88 = scmp.ne.s32.totalorder %s80, %s82
    %p89 = scmp.eq.s32.totalorder %s16, 1
    %p90 = por %p88, %p89
    %p91 = scmp.ne.s32.totalorder %s82, %s83
    %p92 = scmp.eq.s32.totalorder %s16, 0
    %p93 = por %p91, %p92
    %p94 = scmp.ne.s32.totalorder %s82, %s83
    %p95 = scmp.eq.s32.totalorder %s17, 1
    %p96 = por %p94, %p95
    %p98 = scmp.ne.s32.totalorder %s83, %s97
    %p99 = scmp.eq.s32.totalorder %s17, 0
    %p100 = por %p98, %p99
    %s102 = sadd.s32 %s101, 1
    %p105 = scmp.eq.s32.totalorder %s11, 1
    %p106 = scmp.ne.s32.totalorder %s101, %s103
    %p107 = scmp.eq.s32.totalorder %s11, 0
    %p108 = por %p106, %p107
    %p109 = scmp.ne.s32.totalorder %s101, %s103
    %p110 = scmp.eq.s32.totalorder %s16, 1
    %p111 = por %p109, %p110
    %p112 = scmp.ne.s32.totalorder %s103, %s104
    %p113 = scmp.eq.s32.totalorder %s16, 0
    %p114 = por %p112, %p113
    %p115 = scmp.ne.s32.totalorder %s103, %s104
    %p116 = scmp.eq.s32.totalorder %s17, 1
    %p117 = por %p115, %p116
    %p119 = scmp.ne.s32.totalorder %s104, %s118
    %p120 = scmp.eq.s32.totalorder %s17, 0
    %p121 = por %p119, %p120
    %s123 = sadd.s32 %s122, 1
    %p126 = scmp.eq.s32.totalorder %s11, 1
    %p127 = scmp.ne.s32.totalorder %s122, %s124
    %p128 = scmp.eq.s32.totalorder %s11, 0
    %p129 = por %p127, %p128
    %p130 = scmp.ne.s32.totalorder %s122, %s124
    %p131 = scmp.eq.s32.totalorder %s16, 1
    %p132 = por %p130, %p131
    %p133 = scmp.ne.s32.totalorder %s124, %s125
    %p134 = scmp.eq.s32.totalorder %s16, 0
    %p135 = por %p133, %p134
    %p136 = scmp.ne.s32.totalorder %s124, %s125
    %p137 = scmp.eq.s32.totalorder %s17, 1
    %p138 = por %p136, %p137
    %p140 = scmp.ne.s32.totalorder %s125, %s139
    %p141 = scmp.eq.s32.totalorder %s17, 0
    %p142 = por %p140, %p141
    %s143 = ssub.s32 %s18, %s30
    %s144 = ssub.s32 %s19, %s26
    %s145 = sor.u32 %s143, %s144
    %p146 = scmp.eq.s32.totalorder %s145, 0
    %s148 = sadd.s32 %s147, 1
    %s149 = scalar_select %p146, %s147, %s148
    %p152 = pneg %p146
    %p153 = scmp.eq.s32.totalorder %s11, 1
    %p154 = por %p152, %p153
    %p155 = scmp.ne.s32.totalorder %s147, %s150
    %p156 = scmp.eq.s32.totalorder %s11, 0
    %p157 = por %p155, %p156
    %p158 = scmp.ne.s32.totalorder %s147, %s150
    %p159 = scmp.eq.s32.totalorder %s16, 1
    %p160 = por %p158, %p159
    %p161 = scmp.ne.s32.totalorder %s150, %s151
    %p162 = scmp.eq.s32.totalorder %s16, 0
    %p163 = por %p161, %p162
    %p164 = scmp.ne.s32.totalorder %s150, %s151
    %p165 = scmp.eq.s32.totalorder %s17, 1
    %p166 = por %p164, %p165
    %p168 = scmp.ne.s32.totalorder %s151, %s167
    %p169 = scmp.eq.s32.totalorder %s17, 0
    %p170 = por %p168, %p169
    %p171 = scmp.le.s32.totalorder 1, %s11
    %p172 = scmp.lt.s32.totalorder %s11, 3
    %p173 = pnand %p171, %p172
    %p174 = pneg %p173
    // Predicated region
    $region9: #{bioformer_block.10} parent=5 // pred_check
      _
    $region10: #{bioformer_block.10} parent=5 // pred_check_branch
      %176 = sbr.rel (%p173) target = $region12
    $region11: #{bioformer_block.10} parent=5 // pred_region
      %s177 = ssub.s32 %s11, 1
      // Predicated region
      $region13: #{bioformer_block.10} parent=11 // pred_check
        %p178 = pneg %p72
      $region14: #{bioformer_block.10} parent=11 // pred_check_branch
        %180 = sbr.rel (%p178) target = $region16
      $region15: #{bioformer_block.10} parent=11 // pred_region
        _
      $region16: #{bioformer_block.10} parent=11 // pred_fallthru
        _
      // Predicated region
      $region17: #{bioformer_block.10} parent=11 // pred_check
        %p181 = pneg %p93
      $region18: #{bioformer_block.10} parent=11 // pred_check_branch
        %183 = sbr.rel (%p181) target = $region20
      $region19: #{bioformer_block.10} parent=11 // pred_region
        _
      $region20: #{bioformer_block.10} parent=11 // pred_fallthru
        _
      // Predicated region
      $region21: #{bioformer_block.10} parent=11 // pred_check
        %p184 = pneg %p114
      $region22: #{bioformer_block.10} parent=11 // pred_check_branch
        %186 = sbr.rel (%p184) target = $region24
      $region23: #{bioformer_block.10} parent=11 // pred_region
        _
      $region24: #{bioformer_block.10} parent=11 // pred_fallthru
        _
      // Predicated region
      $region25: #{bioformer_block.10} parent=11 // pred_check
        %p187 = pneg %p135
      $region26: #{bioformer_block.10} parent=11 // pred_check_branch
        %189 = sbr.rel (%p187) target = $region28
      $region27: #{bioformer_block.10} parent=11 // pred_region
        _
      $region28: #{bioformer_block.10} parent=11 // pred_fallthru
        _
    $region12: #{bioformer_block.10} parent=5 // pred_fallthru
      _
    %p190 = scmp.lt.s32.totalorder %s11, 2
    // Predicated region
    $region29: #{bioformer_block.10} parent=5 // pred_check
      %p191 = pneg %p190
    $region30: #{bioformer_block.10} parent=5 // pred_check_branch
      %193 = sbr.rel (%p191) target = $region32
    $region31: #{bioformer_block.10} parent=5 // pred_region
      // Predicated region
      $region33: #{bioformer_block.10} parent=31 // pred_check
        %p194 = pneg %p45
      $region34: #{bioformer_block.10} parent=31 // pred_check_branch
        %196 = sbr.rel (%p194) target = $region36
      $region35: #{bioformer_block.10} parent=31 // pred_region
        %p197 = scmp.lt.s32.totalorder %s18, 1
        %s198 = scalar_select %p197, %s18, 1
        %p199 = scmp.lt.s32.totalorder %s19, 0
        %s200 = scalar_select %p199, %s19, 0
        %s201 = sadd.s32 %s200, %s198
        %s202 = smul.addr %s201, 8
        %s203 = scalar_lea.vmem %s0, %s202
      $region36: #{bioformer_block.10} parent=31 // pred_fallthru
        _
    $region32: #{bioformer_block.10} parent=5 // pred_fallthru
      _
    %p204 = scmp.le.s32.totalorder 1, %s11
    %p205 = scmp.lt.s32.totalorder %s11, 3
    %p206 = pnand %p204, %p205
    %p207 = pneg %p206
    // Predicated region
    $region37: #{bioformer_block.10} parent=5 // pred_check
      _
    $region38: #{bioformer_block.10} parent=5 // pred_check_branch
      %209 = sbr.rel (%p206) target = $region40
    $region39: #{bioformer_block.10} parent=5 // pred_region
      %s210 = ssub.s32 %s11, 1
      %p211 = scmp.lt.s32.totalorder %s20, 1
      %s212 = scalar_select %p211, %s20, 1
      %p213 = scmp.lt.s32.totalorder %s21, 0
      %s214 = scalar_select %p213, %s21, 0
      %s215 = sadd.s32 %s214, %s212
      %s216 = smul.addr %s215, 8
      %s217 = scalar_lea.vmem %s0, %s216
      %p218 = pneg %p51
      %p219 = pneg %p48
      %p220 = pneg %p72
      %p221 = pneg %p69
      %p222 = pneg %p93
      %p223 = pneg %p90
      %p224 = pneg %p114
      %p225 = pneg %p111
      %p226 = pneg %p135
      %p227 = pneg %p132
      %p228 = pneg %p163
      %p229 = pneg %p160
      %p230 = scmp.lt.s32.totalorder %s20, 1
      %s231 = scalar_select %p230, %s20, 1
      %p232 = scmp.lt.s32.totalorder %s21, 0
      %s233 = scalar_select %p232, %s21, 0
      %s234 = sadd.s32 %s233, %s231
      %s235 = smul.addr %s234, 8
      %s236 = scalar_lea.vmem %s5, %s235
      %p237 = scmp.lt.s32.totalorder %s20, 1
      %s238 = scalar_select %p237, %s20, 1
      %p239 = scmp.lt.s32.totalorder %s21, 0
      %s240 = scalar_select %p239, %s21, 0
      %s241 = sadd.s32 %s240, %s238
      %s242 = smul.addr %s241, 8
      %s243 = scalar_lea.vmem %s0, %s242
      %p244 = scmp.lt.s32.totalorder %s20, 1
      %s245 = scalar_select %p244, %s20, 1
      %p246 = scmp.lt.s32.totalorder %s21, 0
      %s247 = scalar_select %p246, %s21, 0
      %s248 = sadd.s32 %s247, %s245
      %s249 = smul.addr %s248, 8
      %s250 = scalar_lea.vmem %s5, %s249
      %v251 = vld [vmem:[%s243] sm:$0xff]
      %v252 = vld [vmem:[%s1] sm:$0x1]
      %v253 = vld [vmem:[%s2] sm:$0x1]
      %vm254 = vcmask 261120
      %v255 = vsel %vm254, %v251, 0.0
      %256 = vadd.xlane.f32.xlu0 %v255
      %v257 = vpop.xlane.xlu0 %256
      %v258 = vrcp.pop 32.0
      %v259 = vmul.f32 32.0, %v258
      %v260 = vsub.f32 1.0, %v259
      %v261 = vmul.f32 %v258, %v260
      %v262 = vadd.f32 %v258, %v261
      %vm263 = vweird.f32 %v258
      %v264 = vsel %vm263, %v258, %v262
      %v265 = vmul.f32 %v257, %v264
      %v266 = vsub.f32 %v251, %v265
      %v267 = vmul.f32 %v266, %v266
      %v268 = vsel %vm254, %v267, 0.0
      %269 = vadd.xlane.f32.xlu0 %v268
      %v270 = vpop.xlane.xlu0 %269
      %v271 = vmul.f32 %v270, %v264
      %v272 = vadd.f32 %v271, 1e-05
      %v273 = vrsqrt.pop %v272
      %v274 = vmul.f32 %v273, %v272
      %v275 = vmul.f32 %v274, %v273
      %v276 = vmul.f32 0.5, %v275
      %v277 = vsub.f32 1.5, %v276
      %v278 = vmul.f32 %v273, %v277
      %vm279 = vweird.f32 %v272
      %vm280 = vweird.f32 %v273
      %vm281 = vmor %vm279, %vm280
      %v282 = vsel %vm281, %v273, %v278
      %v283 = vmul.f32 %v266, %v282
      %v285 = vperm.slane %v252, 0
      %v287 = vmul.f32 %v283, %v285
      %v289 = vperm.slane %v253, 0
      %v291 = vadd.f32 %v287, %v289
      %v292 = vld [vmem:[%s3] sm:$0xff]
      %v293 = vld [vmem:[%s3 + $0x8] sm:$0xff]
      %v294 = vld [vmem:[%s3 + $0x10] sm:$0xff]
      %v295 = vld [vmem:[%s3 + $0x18] sm:$0xff]
      %v296 = vld [vmem:[%s4] sm:$0x1]
      %v298 = vperm.slane %v296, 0
      %v301 = vsel %vm254, %v291, 0
      %303 = vmatpush.msra.mxu0 0.0
      %304 = vmatpush.msra.mxu0 0.0
      %305 = vmatpush.msra.mxu0 0.0
      %306 = vmatpush.msra.mxu0 0.0
      %307 = vmatpush.msra.mxu0 0.0
      %308 = vmatpush.msra.mxu0 0.0
      %309 = vmatpush.msra.mxu0 0.0
      %310 = vmatpush.msra.mxu0 0.0
      %311 = vmatpush.msra.mxu0 0.0
      %312 = vmatpush.msra.mxu0 0.0
      %313 = vmatpush.msra.mxu0 0.0
      %314 = vmatpush.msra.mxu0 0.0
      %315 = vmatpush.msra.mxu0 %v295
      %316 = vmatpush.msra.mxu0 %v294
      %317 = vmatpush.msra.mxu0 %v293
      %318 = vmatpush.msra.mxu0 %v292
      %319 = vmatmul.f32.gmra.mxu0 %v301
      %v320 = vpop.f32.mrf.mxu0
      %v321 = vadd.f32 %v298, %v320
      %322 = vdwg.mxu0
      %323 = vst.msk [vmem:[%s250] sm:$0xff] %vm254, %v321
      %p324 = scmp.lt.s32.totalorder %s20, 1
      %s325 = scalar_select %p324, %s20, 1
      %p326 = scmp.lt.s32.totalorder %s21, 0
      %s327 = scalar_select %p326, %s21, 0
      %s328 = sadd.s32 %s327, %s325
      %s329 = smul.addr %s328, 8
      %s330 = scalar_lea.vmem %s5, %s329
      // Predicated region
      $region41: #{bioformer_block.10} parent=39 // pred_check
        %p331 = pneg %p160
      $region42: #{bioformer_block.10} parent=39 // pred_check_branch
        %333 = sbr.rel (%p331) target = $region44
      $region43: #{bioformer_block.10} parent=39 // pred_region
        _
      $region44: #{bioformer_block.10} parent=39 // pred_fallthru
        _
    $region40: #{bioformer_block.10} parent=5 // pred_fallthru
      _
    %p334 = scmp.le.s32.totalorder 2, %s11
    // Predicated region
    $region45: #{bioformer_block.10} parent=5 // pred_check
      %p335 = pneg %p334
    $region46: #{bioformer_block.10} parent=5 // pred_check_branch
      %337 = sbr.rel (%p335) target = $region48
    $region47: #{bioformer_block.10} parent=5 // pred_region
      %s338 = ssub.s32 %s11, 2
      // Predicated region
      $region49: #{bioformer_block.10} parent=47 // pred_check
        %p339 = pneg %p166
      $region50: #{bioformer_block.10} parent=47 // pred_check_branch
        %341 = sbr.rel (%p339) target = $region52
      $region51: #{bioformer_block.10} parent=47 // pred_region
        %p342 = scmp.lt.s32.totalorder %s22, 1
        %s343 = scalar_select %p342, %s22, 1
        %p344 = scmp.lt.s32.totalorder %s23, 0
        %s345 = scalar_select %p344, %s23, 0
        %s346 = sadd.s32 %s345, %s343
        %s347 = smul.addr %s346, 8
        %s348 = scalar_lea.vmem %s5, %s347
      $region52: #{bioformer_block.10} parent=47 // pred_fallthru
        _
    $region48: #{bioformer_block.10} parent=5 // pred_fallthru
      _
  $region6: #{bioformer_block.10} parent=0 // loop_footer
    %s15 = sadd.s32 1, %s11
  $region7: #{bioformer_block.10} parent=0 // loop_footer_branch
    %10 = sbr.rel target = $region3
  $region8: #{bioformer_block.10} parent=0 // loop_exit
    _

// kernel: bioformer_block.11
$region0: #{bioformer_block.11}
  #allocation0 [shape = 'u32[]', space=smem, size = 0x4, offset = 0x4, fixed_abs, tag = 'smem constant byte address 0x4 - core index']
  #allocation1 [shape = 'u32[72,128]{1,0:T(1,128)}', space=vmem, size = 0x9000, scoped, tag = 'internal scratch']
  %s0 = inlined_call_operand.vmem [shape: f32[2,8,128], index: 0, kind: input, shape index: {}, may-alias: {0,4}]
  %s1 = inlined_call_operand.vmem [shape: f32[2,8,16], index: 1, kind: input, shape index: {}]
  %s2 = inlined_call_operand.vmem [shape: f32[2,16,128], index: 2, kind: input, shape index: {}]
  %s3 = inlined_call_operand.vmem [shape: f32[1,128], index: 3, kind: input, shape index: {}]
  %s4 = inlined_call_operand.vmem [shape: f32[2,8,128], index: 4, kind: output, shape index: {}, may-alias: {0,4}]
  %s5 = sld [smem:[#allocation0]]
  $region49: #{bioformer_block.11} parent=0
    _
  %s7 = ssub.s32 1, %s5
  %s8 = scalar_select 0, %s7, %s5
  loop: start=0, step=1, limit=4
  $region2: #{bioformer_block.11} parent=0 // loop_pre_header
    _
  $region3: #{bioformer_block.11} parent=0 // loop_header
    %s10 = sphi 0, %s14
    %p11 = scmp.ge.s32.totalorder %s10, 4
    %s17 = sphi 0, %s36
    %s18 = sphi 0, %s32
    %s19 = sphi 0, %s28
    %s20 = sphi 0, %s17
    %s21 = sphi 0, %s18
    %s22 = sphi 0, %s19
    %s23 = sphi 0, %s20
    %s24 = sphi 0, %s21
    %s25 = sphi 0, %s22
    %s43 = sphi 0, %s45
    %s46 = sphi 0, %s43
    %s47 = sphi 0, %s46
    %s63 = sphi 0, %s47
    %s71 = sphi 0, %s73
    %s74 = sphi 0, %s71
    %s75 = sphi 0, %s74
    %s91 = sphi 0, %s75
    %s99 = sphi 0, %s101
    %s102 = sphi 0, %s99
    %s103 = sphi 0, %s102
    %s119 = sphi 0, %s103
    %s123 = sphi 0, %s123
    %s125 = sphi 0, %s123
    %s126 = sphi 0, %s125
    %s140 = sphi 0, %s126
    %s150 = sphi 0, %s152
    %s153 = sphi 0, %s150
    %s154 = sphi 0, %s153
    %s170 = sphi 0, %s154
  $region4: #{bioformer_block.11} parent=0 // loop_header_branch
    %13 = sbr.rel (%p11) target = $region8
  $region5: #{bioformer_block.11} parent=0 // loop_body
    %s15 = ssub.s32 %s10, 1
    %s16 = ssub.s32 %s10, 2
    %s26 = sadd.s32 1, %s19
    %p27 = scmp.ge.s32.totalorder %s26, 1
    %s28 = scalar_select %p27, 0, %s26
    %s29 = sadd.s32 1, %s18
    %s30 = scalar_select %p27, %s29, %s18
    %p31 = scmp.ge.s32.totalorder %s30, 1
    %s32 = scalar_select %p31, 0, %s30
    %s33 = sadd.s32 1, %s17
    %s34 = scalar_select %p31, %s33, %s17
    %p35 = scmp.ge.s32.totalorder %s34, 2
    %s36 = scalar_select %p35, 0, %s34
    %s37 = ssub.s32 %s17, %s36
    %s38 = ssub.s32 %s18, %s32
    %s39 = sor.u32 %s37, %s38
    %s40 = ssub.s32 %s19, %s28
    %s41 = sor.u32 %s39, %s40
    %p42 = scmp.eq.s32.totalorder %s41, 0
    %s44 = sadd.s32 %s43, 1
    %s45 = scalar_select %p42, %s43, %s44
    %p48 = pneg %p42
    %p49 = scmp.eq.s32.totalorder %s10, 1
    %p50 = por %p48, %p49
    %p51 = scmp.ne.s32.totalorder %s43, %s46
    %p52 = scmp.eq.s32.totalorder %s10, 0
    %p53 = por %p51, %p52
    %p54 = scmp.ne.s32.totalorder %s43, %s46
    %p55 = scmp.eq.s32.totalorder %s15, 1
    %p56 = por %p54, %p55
    %p57 = scmp.ne.s32.totalorder %s46, %s47
    %p58 = scmp.eq.s32.totalorder %s15, 0
    %p59 = por %p57, %p58
    %p60 = scmp.ne.s32.totalorder %s46, %s47
    %p61 = scmp.eq.s32.totalorder %s16, 1
    %p62 = por %p60, %p61
    %p64 = scmp.ne.s32.totalorder %s47, %s63
    %p65 = scmp.eq.s32.totalorder %s16, 0
    %p66 = por %p64, %p65
    %s67 = ssub.s32 %s17, %s36
    %s68 = ssub.s32 %s18, %s32
    %s69 = sor.u32 %s67, %s68
    %p70 = scmp.eq.s32.totalorder %s69, 0
    %s72 = sadd.s32 %s71, 1
    %s73 = scalar_select %p70, %s71, %s72
    %p76 = pneg %p70
    %p77 = scmp.eq.s32.totalorder %s10, 1
    %p78 = por %p76, %p77
    %p79 = scmp.ne.s32.totalorder %s71, %s74
    %p80 = scmp.eq.s32.totalorder %s10, 0
    %p81 = por %p79, %p80
    %p82 = scmp.ne.s32.totalorder %s71, %s74
    %p83 = scmp.eq.s32.totalorder %s15, 1
    %p84 = por %p82, %p83
    %p85 = scmp.ne.s32.totalorder %s74, %s75
    %p86 = scmp.eq.s32.totalorder %s15, 0
    %p87 = por %p85, %p86
    %p88 = scmp.ne.s32.totalorder %s74, %s75
    %p89 = scmp.eq.s32.totalorder %s16, 1
    %p90 = por %p88, %p89
    %p92 = scmp.ne.s32.totalorder %s75, %s91
    %p93 = scmp.eq.s32.totalorder %s16, 0
    %p94 = por %p92, %p93
    %s95 = ssub.s32 %s17, %s36
    %s96 = ssub.s32 %s19, %s28
    %s97 = sor.u32 %s95, %s96
    %p98 = scmp.eq.s32.totalorder %s97, 0
    %s100 = sadd.s32 %s99, 1
    %s101 = scalar_select %p98, %s99, %s100
    %p104 = pneg %p98
    %p105 = scmp.eq.s32.totalorder %s10, 1
    %p106 = por %p104, %p105
    %p107 = scmp.ne.s32.totalorder %s99, %s102
    %p108 = scmp.eq.s32.totalorder %s10, 0
    %p109 = por %p107, %p108
    %p110 = scmp.ne.s32.totalorder %s99, %s102
    %p111 = scmp.eq.s32.totalorder %s15, 1
    %p112 = por %p110, %p111
    %p113 = scmp.ne.s32.totalorder %s102, %s103
    %p114 = scmp.eq.s32.totalorder %s15, 0
    %p115 = por %p113, %p114
    %p116 = scmp.ne.s32.totalorder %s102, %s103
    %p117 = scmp.eq.s32.totalorder %s16, 1
    %p118 = por %p116, %p117
    %p120 = scmp.ne.s32.totalorder %s103, %s119
    %p121 = scmp.eq.s32.totalorder %s16, 0
    %p122 = por %p120, %p121
    %s124 = sadd.s32 %s123, 1
    %p127 = scmp.eq.s32.totalorder %s10, 1
    %p128 = scmp.ne.s32.totalorder %s123, %s125
    %p129 = scmp.eq.s32.totalorder %s10, 0
    %p130 = por %p128, %p129
    %p131 = scmp.ne.s32.totalorder %s123, %s125
    %p132 = scmp.eq.s32.totalorder %s15, 1
    %p133 = por %p131, %p132
    %p134 = scmp.ne.s32.totalorder %s125, %s126
    %p135 = scmp.eq.s32.totalorder %s15, 0
    %p136 = por %p134, %p135
    %p137 = scmp.ne.s32.totalorder %s125, %s126
    %p138 = scmp.eq.s32.totalorder %s16, 1
    %p139 = por %p137, %p138
    %p141 = scmp.ne.s32.totalorder %s126, %s140
    %p142 = scmp.eq.s32.totalorder %s16, 0
    %p143 = por %p141, %p142
    %s144 = ssub.s32 %s17, %s36
    %s145 = ssub.s32 %s18, %s32
    %s146 = sor.u32 %s144, %s145
    %s147 = ssub.s32 %s19, %s28
    %s148 = sor.u32 %s146, %s147
    %p149 = scmp.eq.s32.totalorder %s148, 0
    %s151 = sadd.s32 %s150, 1
    %s152 = scalar_select %p149, %s150, %s151
    %p155 = pneg %p149
    %p156 = scmp.eq.s32.totalorder %s10, 1
    %p157 = por %p155, %p156
    %p158 = scmp.ne.s32.totalorder %s150, %s153
    %p159 = scmp.eq.s32.totalorder %s10, 0
    %p160 = por %p158, %p159
    %p161 = scmp.ne.s32.totalorder %s150, %s153
    %p162 = scmp.eq.s32.totalorder %s15, 1
    %p163 = por %p161, %p162
    %p164 = scmp.ne.s32.totalorder %s153, %s154
    %p165 = scmp.eq.s32.totalorder %s15, 0
    %p166 = por %p164, %p165
    %p167 = scmp.ne.s32.totalorder %s153, %s154
    %p168 = scmp.eq.s32.totalorder %s16, 1
    %p169 = por %p167, %p168
    %p171 = scmp.ne.s32.totalorder %s154, %s170
    %p172 = scmp.eq.s32.totalorder %s16, 0
    %p173 = por %p171, %p172
    %p174 = scmp.le.s32.totalorder 1, %s10
    %p175 = scmp.lt.s32.totalorder %s10, 3
    %p176 = pnand %p174, %p175
    %p177 = pneg %p176
    // Predicated region
    $region9: #{bioformer_block.11} parent=5 // pred_check
      _
    $region10: #{bioformer_block.11} parent=5 // pred_check_branch
      %179 = sbr.rel (%p176) target = $region12
    $region11: #{bioformer_block.11} parent=5 // pred_region
      %s180 = ssub.s32 %s10, 1
      // Predicated region
      $region13: #{bioformer_block.11} parent=11 // pred_check
        %p181 = pneg %p136
      $region14: #{bioformer_block.11} parent=11 // pred_check_branch
        %183 = sbr.rel (%p181) target = $region16
      $region15: #{bioformer_block.11} parent=11 // pred_region
        _
      $region16: #{bioformer_block.11} parent=11 // pred_fallthru
        _
    $region12: #{bioformer_block.11} parent=5 // pred_fallthru
      _
    %p184 = scmp.lt.s32.totalorder %s10, 2
    // Predicated region
    $region17: #{bioformer_block.11} parent=5 // pred_check
      %p185 = pneg %p184
    $region18: #{bioformer_block.11} parent=5 // pred_check_branch
      %187 = sbr.rel (%p185) target = $region20
    $region19: #{bioformer_block.11} parent=5 // pred_region
      // Predicated region
      $region21: #{bioformer_block.11} parent=19 // pred_check
        %p188 = pneg %p53
      $region22: #{bioformer_block.11} parent=19 // pred_check_branch
        %190 = sbr.rel (%p188) target = $region24
      $region23: #{bioformer_block.11} parent=19 // pred_region
        %p191 = scmp.lt.s32.totalorder %s17, 1
        %s192 = scalar_select %p191, %s17, 1
        %p193 = scmp.lt.s32.totalorder %s18, 0
        %s194 = scalar_select %p193, %s18, 0
        %p195 = scmp.lt.s32.totalorder %s19, 0
        %s196 = scalar_select %p195, %s19, 0
        %s197 = sadd.s32 %s196, %s194
        %s198 = sadd.s32 %s197, %s192
        %s199 = smul.addr %s198, 8
        %s200 = scalar_lea.vmem %s0, %s199
      $region24: #{bioformer_block.11} parent=19 // pred_fallthru
        _
      // Predicated region
      $region25: #{bioformer_block.11} parent=19 // pred_check
        %p201 = pneg %p81
      $region26: #{bioformer_block.11} parent=19 // pred_check_branch
        %203 = sbr.rel (%p201) target = $region28
      $region27: #{bioformer_block.11} parent=19 // pred_region
        %p204 = scmp.lt.s32.totalorder %s17, 1
        %s205 = scalar_select %p204, %s17, 1
        %p206 = scmp.lt.s32.totalorder %s18, 0
        %s207 = scalar_select %p206, %s18, 0
        %s208 = sadd.s32 %s207, %s205
        %s209 = smul.addr %s208, 8
        %s210 = scalar_lea.vmem %s1, %s209
      $region28: #{bioformer_block.11} parent=19 // pred_fallthru
        _
      // Predicated region
      $region29: #{bioformer_block.11} parent=19 // pred_check
        %p211 = pneg %p109
      $region30: #{bioformer_block.11} parent=19 // pred_check_branch
        %213 = sbr.rel (%p211) target = $region32
      $region31: #{bioformer_block.11} parent=19 // pred_region
        %p214 = scmp.lt.s32.totalorder %s17, 1
        %s215 = scalar_select %p214, %s17, 1
        %p216 = scmp.lt.s32.totalorder %s19, 0
        %s217 = scalar_select %p216, %s19, 0
        %s218 = smul.addr %s215, 2
        %s219 = sadd.s32 %s217, %s218
        %s220 = smul.addr %s219, 8
        %s221 = scalar_lea.vmem %s2, %s220
      $region32: #{bioformer_block.11} parent=19 // pred_fallthru
        _
    $region20: #{bioformer_block.11} parent=5 // pred_fallthru
      _
    %p222 = scmp.le.s32.totalorder 1, %s10
    %p223 = scmp.lt.s32.totalorder %s10, 3
    %p224 = pnand %p222, %p223
    %p225 = pneg %p224
    // Predicated region
    $region33: #{bioformer_block.11} parent=5 // pred_check
      _
    $region34: #{bioformer_block.11} parent=5 // pred_check_branch
      %227 = sbr.rel (%p224) target = $region36
    $region35: #{bioformer_block.11} parent=5 // pred_region
      %s228 = ssub.s32 %s10, 1
      %p229 = scmp.lt.s32.totalorder %s20, 1
      %s230 = scalar_select %p229, %s20, 1
      %p231 = scmp.lt.s32.totalorder %s21, 0
      %s232 = scalar_select %p231, %s21, 0
      %p233 = scmp.lt.s32.totalorder %s22, 0
      %s234 = scalar_select %p233, %s22, 0
      %s235 = sadd.s32 %s234, %s232
      %s236 = sadd.s32 %s235, %s230
      %s237 = smul.addr %s236, 8
      %s238 = scalar_lea.vmem %s0, %s237
      %p239 = pneg %p59
      %p240 = pneg %p56
      %p241 = scmp.lt.s32.totalorder %s20, 1
      %s242 = scalar_select %p241, %s20, 1
      %p243 = scmp.lt.s32.totalorder %s21, 0
      %s244 = scalar_select %p243, %s21, 0
      %s245 = sadd.s32 %s244, %s242
      %s246 = smul.addr %s245, 8
      %s247 = scalar_lea.vmem %s1, %s246
      %p248 = pneg %p87
      %p249 = pneg %p84
      %p250 = scmp.lt.s32.totalorder %s20, 1
      %s251 = scalar_select %p250, %s20, 1
      %p252 = scmp.lt.s32.totalorder %s22, 0
      %s253 = scalar_select %p252, %s22, 0
      %s254 = smul.addr %s251, 2
      %s255 = sadd.s32 %s253, %s254
      %s256 = smul.addr %s255, 8
      %s257 = scalar_lea.vmem %s2, %s256
      %p258 = pneg %p115
      %p259 = pneg %p112
      %p260 = pneg %p136
      %p261 = pneg %p133
      %p262 = pneg %p166
      %p263 = pneg %p163
      %p264 = scmp.lt.s32.totalorder %s20, 1
      %s265 = scalar_select %p264, %s20, 1
      %p266 = scmp.lt.s32.totalorder %s21, 0
      %s267 = scalar_select %p266, %s21, 0
      %p268 = scmp.lt.s32.totalorder %s22, 0
      %s269 = scalar_select %p268, %s22, 0
      %s270 = sadd.s32 %s269, %s267
      %s271 = sadd.s32 %s270, %s265
      %s272 = smul.addr %s271, 8
      %s273 = scalar_lea.vmem %s4, %s272
      %p274 = scmp.lt.s32.totalorder %s20, 1
      %s275 = scalar_select %p274, %s20, 1
      %p276 = scmp.lt.s32.totalorder %s21, 0
      %s277 = scalar_select %p276, %s21, 0
      %p278 = scmp.lt.s32.totalorder %s22, 0
      %s279 = scalar_select %p278, %s22, 0
      %s280 = sadd.s32 %s279, %s277
      %s281 = sadd.s32 %s280, %s275
      %s282 = smul.addr %s281, 8
      %s283 = scalar_lea.vmem %s0, %s282
      %p284 = scmp.lt.s32.totalorder %s20, 1
      %s285 = scalar_select %p284, %s20, 1
      %p286 = scmp.lt.s32.totalorder %s21, 0
      %s287 = scalar_select %p286, %s21, 0
      %s288 = sadd.s32 %s287, %s285
      %s289 = smul.addr %s288, 8
      %s290 = scalar_lea.vmem %s1, %s289
      %p291 = scmp.lt.s32.totalorder %s20, 1
      %s292 = scalar_select %p291, %s20, 1
      %p293 = scmp.lt.s32.totalorder %s22, 0
      %s294 = scalar_select %p293, %s22, 0
      %s295 = smul.addr %s292, 2
      %s296 = sadd.s32 %s294, %s295
      %s297 = smul.addr %s296, 8
      %s298 = scalar_lea.vmem %s2, %s297
      %p299 = scmp.lt.s32.totalorder %s20, 1
      %s300 = scalar_select %p299, %s20, 1
      %p301 = scmp.lt.s32.totalorder %s21, 0
      %s302 = scalar_select %p301, %s21, 0
      %p303 = scmp.lt.s32.totalorder %s22, 0
      %s304 = scalar_select %p303, %s22, 0
      %s305 = sadd.s32 %s304, %s302
      %s306 = sadd.s32 %s305, %s300
      %s307 = smul.addr %s306, 8
      %s308 = scalar_lea.vmem %s4, %s307
      %v309 = vld [vmem:[%s283] sm:$0xff]
      %v310 = vld [vmem:[%s290] sm:$0xff]
      %v311 = vld [vmem:[%s298] sm:$0xff]
      %v312 = vld [vmem:[%s298 + $0x8] sm:$0xff]
      %vm313 = vcmask 130048
      %v315 = vsel %vm313, %v310, 0
      %317 = vmatpush.msra.mxu0 0.0
      %318 = vmatpush.msra.mxu0 0.0
      %319 = vmatpush.msra.mxu0 0.0
      %320 = vmatpush.msra.mxu0 0.0
      %321 = vmatpush.msra.mxu0 0.0
      %322 = vmatpush.msra.mxu0 0.0
      %323 = vmatpush.msra.mxu0 0.0
      %324 = vmatpush.msra.mxu0 0.0
      %325 = vmatpush.msra.mxu0 0.0
      %326 = vmatpush.msra.mxu0 0.0
      %327 = vmatpush.msra.mxu0 0.0
      %328 = vmatpush.msra.mxu0 0.0
      %329 = vmatpush.msra.mxu0 0.0
      %330 = vmatpush.msra.mxu0 0.0
      %331 = vmatpush.msra.mxu0 %v312
      %332 = vmatpush.msra.mxu0 %v311
      %333 = vmatmul.f32.gmra.mxu0 %v315
      %v334 = vpop.f32.mrf.mxu0
      %v335 = vadd.f32 0.0, %v334
      %336 = vdwg.mxu0
      %v337 = vadd.f32 %v309, %v335
      %v338 = vld [vmem:[%s3] sm:$0x1]
      %v340 = vperm.slane %v338, 0
      %v342 = vadd.f32 %v337, %v340
      %343 = vst [vmem:[%s308] sm:$0xff] %v342
      %p344 = scmp.lt.s32.totalorder %s20, 1
      %s345 = scalar_select %p344, %s20, 1
      %p346 = scmp.lt.s32.totalorder %s21, 0
      %s347 = scalar_select %p346, %s21, 0
      %p348 = scmp.lt.s32.totalorder %s22, 0
      %s349 = scalar_select %p348, %s22, 0
      %s350 = sadd.s32 %s349, %s347
      %s351 = sadd.s32 %s350, %s345
      %s352 = smul.addr %s351, 8
      %s353 = scalar_lea.vmem %s4, %s352
      // Predicated region
      $region37: #{bioformer_block.11} parent=35 // pred_check
        %p354 = pneg %p163
      $region38: #{bioformer_block.11} parent=35 // pred_check_branch
        %356 = sbr.rel (%p354) target = $region40
      $region39: #{bioformer_block.11} parent=35 // pred_region
        _
      $region40: #{bioformer_block.11} parent=35 // pred_fallthru
        _
    $region36: #{bioformer_block.11} parent=5 // pred_fallthru
      _
    %p357 = scmp.le.s32.totalorder 2, %s10
    // Predicated region
    $region41: #{bioformer_block.11} parent=5 // pred_check
      %p358 = pneg %p357
    $region42: #{bioformer_block.11} parent=5 // pred_check_branch
      %360 = sbr.rel (%p358) target = $region44
    $region43: #{bioformer_block.11} parent=5 // pred_region
      %s361 = ssub.s32 %s10, 2
      // Predicated region
      $region45: #{bioformer_block.11} parent=43 // pred_check
        %p362 = pneg %p169
      $region46: #{bioformer_block.11} parent=43 // pred_check_branch
        %364 = sbr.rel (%p362) target = $region48
      $region47: #{bioformer_block.11} parent=43 // pred_region
        %p365 = scmp.lt.s32.totalorder %s23, 1
        %s366 = scalar_select %p365, %s23, 1
        %p367 = scmp.lt.s32.totalorder %s24, 0
        %s368 = scalar_select %p367, %s24, 0
        %p369 = scmp.lt.s32.totalorder %s25, 0
        %s370 = scalar_select %p369, %s25, 0
        %s371 = sadd.s32 %s370, %s368
        %s372 = sadd.s32 %s371, %s366
        %s373 = smul.addr %s372, 8
        %s374 = scalar_lea.vmem %s4, %s373
      $region48: #{bioformer_block.11} parent=43 // pred_fallthru
        _
    $region44: #{bioformer_block.11} parent=5 // pred_fallthru
      _
  $region6: #{bioformer_block.11} parent=0 // loop_footer
    %s14 = sadd.s32 1, %s10
  $region7: #{bioformer_block.11} parent=0 // loop_footer_branch
    %9 = sbr.rel target = $region3
  $region8: #{bioformer_block.11} parent=0 // loop_exit
    _

</llo_original>
